<compile_context>
chip_gen: v7x
topology: tpu7x:2x2x1
jax: 0.10.0
libtpu: 0.0.40
codegen_flags: <defaults>
</compile_context>

<pallas_src>
import functools

import jax
import jax.numpy as jnp
from jax import lax
from jax.experimental import pallas as pl
from jax.experimental.pallas import tpu as pltpu


def convlstm_cell_kernel(x_ref, h_ref, c_ref, w_ref, b_ref,
                         c_next_ref, h_next_ref,
                         xpad_ref, hpad_ref, patch_ref,
                         *, H, W, KH, KW, Cx, Ch, rows_per_step):
    """Grid = (batch, H // rows_per_step).

    x_ref    : (1, H, W, Cx)              f32  full image (fetched once per batch)
    h_ref    : (1, H, W, Ch)              f32  full image (fetched once per batch)
    c_ref    : (1, rows, W, Ch)           f32  row-chunk of the cell state
    w_ref    : (KH*KW*(Cx+Ch), 4*Ch)      bf16 im2col-packed conv weight
    b_ref    : (1, 4*Ch)                  f32  conv bias
    outputs  : (1, rows, W, Ch)           f32  row-chunks of c_next / h_next
    xpad_ref : (H+KH-1, W+KW-1, Cx)       f32  zero-halo staged x       (scratch)
    hpad_ref : (H+KH-1, W+KW-1, Ch)       f32  zero-halo staged h_cur   (scratch)
    patch_ref: (rows, W, KH*KW*(Cx+Ch))   bf16 im2col patch             (scratch)
    """
    m = pl.program_id(1)
    cin = Cx + Ch
    pix = rows_per_step * W

    # ---- once per batch element: stage x / h with a zero halo (the conv pad) ----
    @pl.when(m == 0)
    def _stage_padded_inputs():
        xpad_ref[...] = jnp.zeros_like(xpad_ref)
        hpad_ref[...] = jnp.zeros_like(hpad_ref)
        ph, pw = KH // 2, KW // 2
        xpad_ref[ph:ph + H, pw:pw + W, :] = x_ref[0]
        hpad_ref[ph:ph + H, pw:pw + W, :] = h_ref[0]

    # ---- build the im2col patch for this row chunk (fuses all KH*KW taps) ----
    row0 = pl.multiple_of(m * rows_per_step, rows_per_step)
    for kh in range(KH):
        row_sl = pl.ds(row0 + kh, rows_per_step)
        for kw in range(KW):
            base = (kh * KW + kw) * cin
            patch_ref[:, :, base:base + Cx] = (
                xpad_ref[row_sl, kw:kw + W, :].astype(jnp.bfloat16))
            patch_ref[:, :, base + Cx:base + cin] = (
                hpad_ref[row_sl, kw:kw + W, :].astype(jnp.bfloat16))

    # ---- one fused MXU matmul: (pix, K) @ (K, 4*Ch), f32 accumulation ----
    a = patch_ref[...].reshape(pix, KH * KW * cin)          # bf16, free merge
    acc = jnp.dot(a, w_ref[...], preferred_element_type=jnp.float32)
    acc = acc + b_ref[0]

    # ---- gates & state update (f32).  Gate order matches torch.split: i,f,o,g ----
    g = jnp.tanh(acc[:, 3 * Ch:4 * Ch])     # only g needs tanh
    s = jax.nn.sigmoid(acc)                 # one full-128-lane EUP pass covers i,f,o
    i = s[:, 0 * Ch:1 * Ch]
    f = s[:, 1 * Ch:2 * Ch]
    o = s[:, 2 * Ch:3 * Ch]

    c_cur = c_ref[0].reshape(pix, Ch)
    c_nxt = f * c_cur + i * g
    h_nxt = o * jnp.tanh(c_nxt)

    c_next_ref[0] = c_nxt.reshape(rows_per_step, W, Ch)
    h_next_ref[0] = h_nxt.reshape(rows_per_step, W, Ch)


def pack_conv_params(w_oihw, bias, input_dim, hidden_dim, kernel_size):
    """One-time weight packing: OIHW conv weight -> (KH*KW*cin, 4*hidden) bf16."""
    KH, KW = kernel_size
    cout, cin = w_oihw.shape[0], w_oihw.shape[1]
    assert cin == input_dim + hidden_dim and cout == 4 * hidden_dim
    # (O, I, KH, KW) -> (KH, KW, I, O) -> (KH*KW*I, O).
    # I-order is [x-channels, h-channels], matching torch.cat([x, h], dim=1).
    w_packed = jnp.transpose(w_oihw, (2, 3, 1, 0)).reshape(KH * KW * cin, cout)
    return w_packed.astype(jnp.bfloat16), bias.reshape(1, cout).astype(jnp.float32)


def convlstm_cell_forward(x, h_cur, c_cur, w_packed, b_row, kernel_size,
                          rows_per_step=8):
    """ConvLSTMCell.forward in NHWC.  Returns (c_next, h_next), like the module."""
    B, H, W, Cx = x.shape
    Ch = h_cur.shape[-1]
    KH, KW = kernel_size
    cin = Cx + Ch
    K = KH * KW * cin
    cout = 4 * Ch

    if H % rows_per_step != 0:
        rows_per_step = H
    m_steps = H // rows_per_step

    kernel = functools.partial(
        convlstm_cell_kernel, H=H, W=W, KH=KH, KW=KW, Cx=Cx, Ch=Ch,
        rows_per_step=rows_per_step)

    out_shape = (jax.ShapeDtypeStruct((B, H, W, Ch), jnp.float32),
                 jax.ShapeDtypeStruct((B, H, W, Ch), jnp.float32))

    grid_spec = pltpu.PrefetchScalarGridSpec(
        num_scalar_prefetch=0,
        grid=(B, m_steps),
        in_specs=[
            pl.BlockSpec((1, H, W, Cx), lambda n, m: (n, 0, 0, 0)),
            pl.BlockSpec((1, H, W, Ch), lambda n, m: (n, 0, 0, 0)),
            pl.BlockSpec((1, rows_per_step, W, Ch), lambda n, m: (n, m, 0, 0)),
            pl.BlockSpec((K, cout), lambda n, m: (0, 0)),
            pl.BlockSpec((1, cout), lambda n, m: (0, 0)),
        ],
        out_specs=[
            pl.BlockSpec((1, rows_per_step, W, Ch), lambda n, m: (n, m, 0, 0)),
            pl.BlockSpec((1, rows_per_step, W, Ch), lambda n, m: (n, m, 0, 0)),
        ],
        scratch_shapes=[
            pltpu.VMEM((H + KH - 1, W + KW - 1, Cx), jnp.float32),
            pltpu.VMEM((H + KH - 1, W + KW - 1, Ch), jnp.float32),
            pltpu.VMEM((rows_per_step, W, K), jnp.bfloat16),
        ],
    )

    c_next, h_next = pl.pallas_call(
        kernel,
        out_shape=out_shape,
        grid_spec=grid_spec,
        compiler_params=pltpu.CompilerParams(
            dimension_semantics=("parallel", "arbitrary")),
    )(x, h_cur, c_cur, w_packed, b_row)

    # Matches the PyTorch module's return order: (c_next, h_next).
    return c_next, h_next


def reference_forward(x_nchw, h_nchw, c_nchw, w_oihw, bias):
    """Pure-JAX NCHW replica of the PyTorch ConvLSTMCell.forward (f32)."""
    combined = jnp.concatenate([x_nchw, h_nchw], axis=1)
    conv = lax.conv_general_dilated(
        combined, w_oihw, window_strides=(1, 1), padding="SAME",
        dimension_numbers=("NCHW", "OIHW", "NCHW"))
    conv = conv + bias[None, :, None, None]
    cc_i, cc_f, cc_o, cc_g = jnp.split(conv, 4, axis=1)
    i = jax.nn.sigmoid(cc_i)
    f = jax.nn.sigmoid(cc_f)
    o = jax.nn.sigmoid(cc_o)
    g = jnp.tanh(cc_g)
    c_next = f * c_nchw + i * g
    h_next = o * jnp.tanh(c_next)
    return c_next, h_next


if __name__ == "__main__":
    B, input_dim, hidden_dim = 2, 4, 32
    H, W = 16, 16
    kernel_size = (3, 3)
    cin = input_dim + hidden_dim
    cout = 4 * hidden_dim

    key = jax.random.PRNGKey(0)
    k1, k2, k3, k4, k5 = jax.random.split(key, 5)

    # Module-native layouts (NCHW activations, OIHW conv weight + bias).
    x_nchw = jax.random.normal(k1, (B, input_dim, H, W), jnp.float32)
    h_nchw = jax.random.normal(k2, (B, hidden_dim, H, W), jnp.float32)
    c_nchw = jax.random.normal(k3, (B, hidden_dim, H, W), jnp.float32)
    fan_in = cin * kernel_size[0] * kernel_size[1]
    w_oihw = jax.random.normal(
        k4, (cout, cin, kernel_size[0], kernel_size[1]), jnp.float32) / jnp.sqrt(fan_in)
    bias = jax.random.normal(k5, (cout,), jnp.float32) * 0.01

    # One-time glue: the Pallas path runs NHWC with pre-packed bf16 weights.
    x = jnp.transpose(x_nchw, (0, 2, 3, 1))
    h_cur = jnp.transpose(h_nchw, (0, 2, 3, 1))
    c_cur = jnp.transpose(c_nchw, (0, 2, 3, 1))
    w_packed, b_row = pack_conv_params(w_oihw, bias, input_dim, hidden_dim,
                                       kernel_size)

    fwd = jax.jit(functools.partial(convlstm_cell_forward,
                                    kernel_size=kernel_size))
    c_next, h_next = fwd(x, h_cur, c_cur, w_packed, b_row)
    jax.block_until_ready((c_next, h_next))

    # Verify against the f32 NCHW reference (tolerance loosened for bf16 MXU ops).
    c_ref, h_ref = reference_forward(x_nchw, h_nchw, c_nchw, w_oihw, bias)
    c_ref = jnp.transpose(c_ref, (0, 2, 3, 1))
    h_ref = jnp.transpose(h_ref, (0, 2, 3, 1))

    assert c_next.shape == (B, H, W, hidden_dim) and h_next.shape == c_next.shape
    assert jnp.allclose(c_next, c_ref, atol=5e-2, rtol=5e-2), (
        float(jnp.max(jnp.abs(c_next - c_ref))))
    assert jnp.allclose(h_next, h_ref, atol=5e-2, rtol=5e-2), (
        float(jnp.max(jnp.abs(h_next - h_ref))))

    print("KERNEL_OK")
</pallas_src>

<mosaic_0001>
module attributes {stable_mosaic.version = 11 : i64} {
  func.func @convlstm_cell_kernel(%arg0: i32, %arg1: i32, %arg2: memref<1x16x16x4xf32, #tpu.memory_space<vmem>>, %arg3: memref<1x16x16x32xf32, #tpu.memory_space<vmem>>, %arg4: memref<1x8x16x32xf32, #tpu.memory_space<vmem>>, %arg5: memref<324x128xbf16, #tpu.memory_space<vmem>>, %arg6: memref<1x128xf32, #tpu.memory_space<vmem>>, %arg7: memref<1x8x16x32xf32, #tpu.memory_space<vmem>>, %arg8: memref<1x8x16x32xf32, #tpu.memory_space<vmem>>, %arg9: memref<18x18x4xf32, #tpu.memory_space<vmem>>, %arg10: memref<18x18x32xf32, #tpu.memory_space<vmem>>, %arg11: memref<8x16x324xbf16, #tpu.memory_space<vmem>>) attributes {dimension_semantics = [#tpu.dimension_semantics<parallel>, #tpu.dimension_semantics<arbitrary>], iteration_bounds = array<i64: 2, 2>, scalar_prefetch = 0 : i64, scratch_operands = 3 : i64, tpu.core_type = #tpu.core_type<tc>, window_params = [{transform_indices = @transform_0, window_bounds = array<i64: 1, 16, 16, 4>}, {transform_indices = @transform_1, window_bounds = array<i64: 1, 16, 16, 32>}, {transform_indices = @transform_2, window_bounds = array<i64: 1, 8, 16, 32>}, {pipeline_mode = #tpu.pipeline_mode<synchronous>, transform_indices = @transform_3, window_bounds = array<i64: 324, 128>}, {pipeline_mode = #tpu.pipeline_mode<synchronous>, transform_indices = @transform_4, window_bounds = array<i64: 1, 128>}, {transform_indices = @transform_5, window_bounds = array<i64: 1, 8, 16, 32>}, {transform_indices = @transform_6, window_bounds = array<i64: 1, 8, 16, 32>}]} {
    %c0_i32 = arith.constant 0 : i32
    %0 = arith.cmpi eq, %arg1, %c0_i32 : i32
    %1 = arith.extui %0 : i1 to i32
    %c0_i32_0 = arith.constant 0 : i32
    %2 = arith.cmpi ne, %1, %c0_i32_0 : i32
    scf.if %2 {
      %cst_92 = arith.constant 0.000000e+00 : f32
      %115 = vector.broadcast %cst_92 : f32 to vector<18x18x4xf32>
      %c0_93 = arith.constant 0 : index
      %c0_94 = arith.constant 0 : index
      %c0_95 = arith.constant 0 : index
      %116 = vector.load %arg9[%c0_93, %c0_94, %c0_95] : memref<18x18x4xf32, #tpu.memory_space<vmem>>, vector<18x18x4xf32>
      tpu.vector_store %arg9[%c0_93, %c0_94, %c0_95], %115 {strides = array<i32>} : memref<18x18x4xf32, #tpu.memory_space<vmem>>, vector<18x18x4xf32>,
      %cst_96 = arith.constant 0.000000e+00 : f32
      %117 = vector.broadcast %cst_96 : f32 to vector<18x18x32xf32>
      %c0_97 = arith.constant 0 : index
      %c0_98 = arith.constant 0 : index
      %c0_99 = arith.constant 0 : index
      %118 = vector.load %arg10[%c0_97, %c0_98, %c0_99] : memref<18x18x32xf32, #tpu.memory_space<vmem>>, vector<18x18x32xf32>
      tpu.vector_store %arg10[%c0_97, %c0_98, %c0_99], %117 {strides = array<i32>} : memref<18x18x32xf32, #tpu.memory_space<vmem>>, vector<18x18x32xf32>,
      %c0_100 = arith.constant 0 : index
      %c0_101 = arith.constant 0 : index
      %c0_102 = arith.constant 0 : index
      %c0_103 = arith.constant 0 : index
      %119 = vector.load %arg2[%c0_100, %c0_101, %c0_102, %c0_103] : memref<1x16x16x4xf32, #tpu.memory_space<vmem>>, vector<1x16x16x4xf32>
      %120 = vector.shape_cast %119 : vector<1x16x16x4xf32> to vector<16x16x4xf32>
      %c1_104 = arith.constant 1 : index
      %c1_105 = arith.constant 1 : index
      %c0_106 = arith.constant 0 : index
      %121 = vector.load %arg9[%c1_104, %c1_105, %c0_106] : memref<18x18x4xf32, #tpu.memory_space<vmem>>, vector<16x16x4xf32>
      tpu.vector_store %arg9[%c1_104, %c1_105, %c0_106], %120 {strides = array<i32>} : memref<18x18x4xf32, #tpu.memory_space<vmem>>, vector<16x16x4xf32>,
      %c0_107 = arith.constant 0 : index
      %c0_108 = arith.constant 0 : index
      %c0_109 = arith.constant 0 : index
      %c0_110 = arith.constant 0 : index
      %122 = vector.load %arg3[%c0_107, %c0_108, %c0_109, %c0_110] : memref<1x16x16x32xf32, #tpu.memory_space<vmem>>, vector<1x16x16x32xf32>
      %123 = vector.shape_cast %122 : vector<1x16x16x32xf32> to vector<16x16x32xf32>
      %c1_111 = arith.constant 1 : index
      %c1_112 = arith.constant 1 : index
      %c0_113 = arith.constant 0 : index
      %124 = vector.load %arg10[%c1_111, %c1_112, %c0_113] : memref<18x18x32xf32, #tpu.memory_space<vmem>>, vector<16x16x32xf32>
      tpu.vector_store %arg10[%c1_111, %c1_112, %c0_113], %123 {strides = array<i32>} : memref<18x18x32xf32, #tpu.memory_space<vmem>>, vector<16x16x32xf32>,
    } else {
    }
    %c8_i32 = arith.constant 8 : i32
    %3 = arith.muli %arg1, %c8_i32 : i32
    %4 = tpu.assume_multiple %3, 8 : i32
    %c0_i32_1 = arith.constant 0 : i32
    %5 = arith.addi %4, %c0_i32_1 : i32
    %6 = arith.index_cast %5 : i32 to index
    %c0 = arith.constant 0 : index
    %c0_2 = arith.constant 0 : index
    %7 = vector.load %arg9[%6, %c0, %c0_2] : memref<18x18x4xf32, #tpu.memory_space<vmem>>, vector<8x16x4xf32>
    %8 = arith.truncf %7 : vector<8x16x4xf32> to vector<8x16x4xbf16>
    %c0_3 = arith.constant 0 : index
    %c0_4 = arith.constant 0 : index
    %c0_5 = arith.constant 0 : index
    %9 = vector.load %arg11[%c0_3, %c0_4, %c0_5] : memref<8x16x324xbf16, #tpu.memory_space<vmem>>, vector<8x16x4xbf16>
    tpu.vector_store %arg11[%c0_3, %c0_4, %c0_5], %8 {strides = array<i32>} : memref<8x16x324xbf16, #tpu.memory_space<vmem>>, vector<8x16x4xbf16>,
    %10 = arith.index_cast %5 : i32 to index
    %c0_6 = arith.constant 0 : index
    %c0_7 = arith.constant 0 : index
    %11 = vector.load %arg10[%10, %c0_6, %c0_7] : memref<18x18x32xf32, #tpu.memory_space<vmem>>, vector<8x16x32xf32>
    %12 = arith.truncf %11 : vector<8x16x32xf32> to vector<8x16x32xbf16>
    %c0_8 = arith.constant 0 : index
    %c0_9 = arith.constant 0 : index
    %c4 = arith.constant 4 : index
    %13 = vector.load %arg11[%c0_8, %c0_9, %c4] : memref<8x16x324xbf16, #tpu.memory_space<vmem>>, vector<8x16x32xbf16>
    tpu.vector_store %arg11[%c0_8, %c0_9, %c4], %12 {strides = array<i32>} : memref<8x16x324xbf16, #tpu.memory_space<vmem>>, vector<8x16x32xbf16>,
    %14 = arith.index_cast %5 : i32 to index
    %c1 = arith.constant 1 : index
    %c0_10 = arith.constant 0 : index
    %15 = vector.load %arg9[%14, %c1, %c0_10] : memref<18x18x4xf32, #tpu.memory_space<vmem>>, vector<8x16x4xf32>
    %16 = arith.truncf %15 : vector<8x16x4xf32> to vector<8x16x4xbf16>
    %c0_11 = arith.constant 0 : index
    %c0_12 = arith.constant 0 : index
    %c36 = arith.constant 36 : index
    %17 = vector.load %arg11[%c0_11, %c0_12, %c36] : memref<8x16x324xbf16, #tpu.memory_space<vmem>>, vector<8x16x4xbf16>
    tpu.vector_store %arg11[%c0_11, %c0_12, %c36], %16 {strides = array<i32>} : memref<8x16x324xbf16, #tpu.memory_space<vmem>>, vector<8x16x4xbf16>,
    %18 = arith.index_cast %5 : i32 to index
    %c1_13 = arith.constant 1 : index
    %c0_14 = arith.constant 0 : index
    %19 = vector.load %arg10[%18, %c1_13, %c0_14] : memref<18x18x32xf32, #tpu.memory_space<vmem>>, vector<8x16x32xf32>
    %20 = arith.truncf %19 : vector<8x16x32xf32> to vector<8x16x32xbf16>
    %c0_15 = arith.constant 0 : index
    %c0_16 = arith.constant 0 : index
    %c40 = arith.constant 40 : index
    %21 = vector.load %arg11[%c0_15, %c0_16, %c40] : memref<8x16x324xbf16, #tpu.memory_space<vmem>>, vector<8x16x32xbf16>
    tpu.vector_store %arg11[%c0_15, %c0_16, %c40], %20 {strides = array<i32>} : memref<8x16x324xbf16, #tpu.memory_space<vmem>>, vector<8x16x32xbf16>,
    %22 = arith.index_cast %5 : i32 to index
    %c2 = arith.constant 2 : index
    %c0_17 = arith.constant 0 : index
    %23 = vector.load %arg9[%22, %c2, %c0_17] : memref<18x18x4xf32, #tpu.memory_space<vmem>>, vector<8x16x4xf32>
    %24 = arith.truncf %23 : vector<8x16x4xf32> to vector<8x16x4xbf16>
    %c0_18 = arith.constant 0 : index
    %c0_19 = arith.constant 0 : index
    %c72 = arith.constant 72 : index
    %25 = vector.load %arg11[%c0_18, %c0_19, %c72] : memref<8x16x324xbf16, #tpu.memory_space<vmem>>, vector<8x16x4xbf16>
    tpu.vector_store %arg11[%c0_18, %c0_19, %c72], %24 {strides = array<i32>} : memref<8x16x324xbf16, #tpu.memory_space<vmem>>, vector<8x16x4xbf16>,
    %26 = arith.index_cast %5 : i32 to index
    %c2_20 = arith.constant 2 : index
    %c0_21 = arith.constant 0 : index
    %27 = vector.load %arg10[%26, %c2_20, %c0_21] : memref<18x18x32xf32, #tpu.memory_space<vmem>>, vector<8x16x32xf32>
    %28 = arith.truncf %27 : vector<8x16x32xf32> to vector<8x16x32xbf16>
    %c0_22 = arith.constant 0 : index
    %c0_23 = arith.constant 0 : index
    %c76 = arith.constant 76 : index
    %29 = vector.load %arg11[%c0_22, %c0_23, %c76] : memref<8x16x324xbf16, #tpu.memory_space<vmem>>, vector<8x16x32xbf16>
    tpu.vector_store %arg11[%c0_22, %c0_23, %c76], %28 {strides = array<i32>} : memref<8x16x324xbf16, #tpu.memory_space<vmem>>, vector<8x16x32xbf16>,
    %c1_i32 = arith.constant 1 : i32
    %30 = arith.addi %4, %c1_i32 : i32
    %31 = arith.index_cast %30 : i32 to index
    %c0_24 = arith.constant 0 : index
    %c0_25 = arith.constant 0 : index
    %32 = vector.load %arg9[%31, %c0_24, %c0_25] : memref<18x18x4xf32, #tpu.memory_space<vmem>>, vector<8x16x4xf32>
    %33 = arith.truncf %32 : vector<8x16x4xf32> to vector<8x16x4xbf16>
    %c0_26 = arith.constant 0 : index
    %c0_27 = arith.constant 0 : index
    %c108 = arith.constant 108 : index
    %34 = vector.load %arg11[%c0_26, %c0_27, %c108] : memref<8x16x324xbf16, #tpu.memory_space<vmem>>, vector<8x16x4xbf16>
    tpu.vector_store %arg11[%c0_26, %c0_27, %c108], %33 {strides = array<i32>} : memref<8x16x324xbf16, #tpu.memory_space<vmem>>, vector<8x16x4xbf16>,
    %35 = arith.index_cast %30 : i32 to index
    %c0_28 = arith.constant 0 : index
    %c0_29 = arith.constant 0 : index
    %36 = vector.load %arg10[%35, %c0_28, %c0_29] : memref<18x18x32xf32, #tpu.memory_space<vmem>>, vector<8x16x32xf32>
    %37 = arith.truncf %36 : vector<8x16x32xf32> to vector<8x16x32xbf16>
    %c0_30 = arith.constant 0 : index
    %c0_31 = arith.constant 0 : index
    %c112 = arith.constant 112 : index
    %38 = vector.load %arg11[%c0_30, %c0_31, %c112] : memref<8x16x324xbf16, #tpu.memory_space<vmem>>, vector<8x16x32xbf16>
    tpu.vector_store %arg11[%c0_30, %c0_31, %c112], %37 {strides = array<i32>} : memref<8x16x324xbf16, #tpu.memory_space<vmem>>, vector<8x16x32xbf16>,
    %39 = arith.index_cast %30 : i32 to index
    %c1_32 = arith.constant 1 : index
    %c0_33 = arith.constant 0 : index
    %40 = vector.load %arg9[%39, %c1_32, %c0_33] : memref<18x18x4xf32, #tpu.memory_space<vmem>>, vector<8x16x4xf32>
    %41 = arith.truncf %40 : vector<8x16x4xf32> to vector<8x16x4xbf16>
    %c0_34 = arith.constant 0 : index
    %c0_35 = arith.constant 0 : index
    %c144 = arith.constant 144 : index
    %42 = vector.load %arg11[%c0_34, %c0_35, %c144] : memref<8x16x324xbf16, #tpu.memory_space<vmem>>, vector<8x16x4xbf16>
    tpu.vector_store %arg11[%c0_34, %c0_35, %c144], %41 {strides = array<i32>} : memref<8x16x324xbf16, #tpu.memory_space<vmem>>, vector<8x16x4xbf16>,
    %43 = arith.index_cast %30 : i32 to index
    %c1_36 = arith.constant 1 : index
    %c0_37 = arith.constant 0 : index
    %44 = vector.load %arg10[%43, %c1_36, %c0_37] : memref<18x18x32xf32, #tpu.memory_space<vmem>>, vector<8x16x32xf32>
    %45 = arith.truncf %44 : vector<8x16x32xf32> to vector<8x16x32xbf16>
    %c0_38 = arith.constant 0 : index
    %c0_39 = arith.constant 0 : index
    %c148 = arith.constant 148 : index
    %46 = vector.load %arg11[%c0_38, %c0_39, %c148] : memref<8x16x324xbf16, #tpu.memory_space<vmem>>, vector<8x16x32xbf16>
    tpu.vector_store %arg11[%c0_38, %c0_39, %c148], %45 {strides = array<i32>} : memref<8x16x324xbf16, #tpu.memory_space<vmem>>, vector<8x16x32xbf16>,
    %47 = arith.index_cast %30 : i32 to index
    %c2_40 = arith.constant 2 : index
    %c0_41 = arith.constant 0 : index
    %48 = vector.load %arg9[%47, %c2_40, %c0_41] : memref<18x18x4xf32, #tpu.memory_space<vmem>>, vector<8x16x4xf32>
    %49 = arith.truncf %48 : vector<8x16x4xf32> to vector<8x16x4xbf16>
    %c0_42 = arith.constant 0 : index
    %c0_43 = arith.constant 0 : index
    %c180 = arith.constant 180 : index
    %50 = vector.load %arg11[%c0_42, %c0_43, %c180] : memref<8x16x324xbf16, #tpu.memory_space<vmem>>, vector<8x16x4xbf16>
    tpu.vector_store %arg11[%c0_42, %c0_43, %c180], %49 {strides = array<i32>} : memref<8x16x324xbf16, #tpu.memory_space<vmem>>, vector<8x16x4xbf16>,
    %51 = arith.index_cast %30 : i32 to index
    %c2_44 = arith.constant 2 : index
    %c0_45 = arith.constant 0 : index
    %52 = vector.load %arg10[%51, %c2_44, %c0_45] : memref<18x18x32xf32, #tpu.memory_space<vmem>>, vector<8x16x32xf32>
    %53 = arith.truncf %52 : vector<8x16x32xf32> to vector<8x16x32xbf16>
    %c0_46 = arith.constant 0 : index
    %c0_47 = arith.constant 0 : index
    %c184 = arith.constant 184 : index
    %54 = vector.load %arg11[%c0_46, %c0_47, %c184] : memref<8x16x324xbf16, #tpu.memory_space<vmem>>, vector<8x16x32xbf16>
    tpu.vector_store %arg11[%c0_46, %c0_47, %c184], %53 {strides = array<i32>} : memref<8x16x324xbf16, #tpu.memory_space<vmem>>, vector<8x16x32xbf16>,
    %c2_i32 = arith.constant 2 : i32
    %55 = arith.addi %4, %c2_i32 : i32
    %56 = arith.index_cast %55 : i32 to index
    %c0_48 = arith.constant 0 : index
    %c0_49 = arith.constant 0 : index
    %57 = vector.load %arg9[%56, %c0_48, %c0_49] : memref<18x18x4xf32, #tpu.memory_space<vmem>>, vector<8x16x4xf32>
    %58 = arith.truncf %57 : vector<8x16x4xf32> to vector<8x16x4xbf16>
    %c0_50 = arith.constant 0 : index
    %c0_51 = arith.constant 0 : index
    %c216 = arith.constant 216 : index
    %59 = vector.load %arg11[%c0_50, %c0_51, %c216] : memref<8x16x324xbf16, #tpu.memory_space<vmem>>, vector<8x16x4xbf16>
    tpu.vector_store %arg11[%c0_50, %c0_51, %c216], %58 {strides = array<i32>} : memref<8x16x324xbf16, #tpu.memory_space<vmem>>, vector<8x16x4xbf16>,
    %60 = arith.index_cast %55 : i32 to index
    %c0_52 = arith.constant 0 : index
    %c0_53 = arith.constant 0 : index
    %61 = vector.load %arg10[%60, %c0_52, %c0_53] : memref<18x18x32xf32, #tpu.memory_space<vmem>>, vector<8x16x32xf32>
    %62 = arith.truncf %61 : vector<8x16x32xf32> to vector<8x16x32xbf16>
    %c0_54 = arith.constant 0 : index
    %c0_55 = arith.constant 0 : index
    %c220 = arith.constant 220 : index
    %63 = vector.load %arg11[%c0_54, %c0_55, %c220] : memref<8x16x324xbf16, #tpu.memory_space<vmem>>, vector<8x16x32xbf16>
    tpu.vector_store %arg11[%c0_54, %c0_55, %c220], %62 {strides = array<i32>} : memref<8x16x324xbf16, #tpu.memory_space<vmem>>, vector<8x16x32xbf16>,
    %64 = arith.index_cast %55 : i32 to index
    %c1_56 = arith.constant 1 : index
    %c0_57 = arith.constant 0 : index
    %65 = vector.load %arg9[%64, %c1_56, %c0_57] : memref<18x18x4xf32, #tpu.memory_space<vmem>>, vector<8x16x4xf32>
    %66 = arith.truncf %65 : vector<8x16x4xf32> to vector<8x16x4xbf16>
    %c0_58 = arith.constant 0 : index
    %c0_59 = arith.constant 0 : index
    %c252 = arith.constant 252 : index
    %67 = vector.load %arg11[%c0_58, %c0_59, %c252] : memref<8x16x324xbf16, #tpu.memory_space<vmem>>, vector<8x16x4xbf16>
    tpu.vector_store %arg11[%c0_58, %c0_59, %c252], %66 {strides = array<i32>} : memref<8x16x324xbf16, #tpu.memory_space<vmem>>, vector<8x16x4xbf16>,
    %68 = arith.index_cast %55 : i32 to index
    %c1_60 = arith.constant 1 : index
    %c0_61 = arith.constant 0 : index
    %69 = vector.load %arg10[%68, %c1_60, %c0_61] : memref<18x18x32xf32, #tpu.memory_space<vmem>>, vector<8x16x32xf32>
    %70 = arith.truncf %69 : vector<8x16x32xf32> to vector<8x16x32xbf16>
    %c0_62 = arith.constant 0 : index
    %c0_63 = arith.constant 0 : index
    %c256 = arith.constant 256 : index
    %71 = vector.load %arg11[%c0_62, %c0_63, %c256] : memref<8x16x324xbf16, #tpu.memory_space<vmem>>, vector<8x16x32xbf16>
    tpu.vector_store %arg11[%c0_62, %c0_63, %c256], %70 {strides = array<i32>} : memref<8x16x324xbf16, #tpu.memory_space<vmem>>, vector<8x16x32xbf16>,
    %72 = arith.index_cast %55 : i32 to index
    %c2_64 = arith.constant 2 : index
    %c0_65 = arith.constant 0 : index
    %73 = vector.load %arg9[%72, %c2_64, %c0_65] : memref<18x18x4xf32, #tpu.memory_space<vmem>>, vector<8x16x4xf32>
    %74 = arith.truncf %73 : vector<8x16x4xf32> to vector<8x16x4xbf16>
    %c0_66 = arith.constant 0 : index
    %c0_67 = arith.constant 0 : index
    %c288 = arith.constant 288 : index
    %75 = vector.load %arg11[%c0_66, %c0_67, %c288] : memref<8x16x324xbf16, #tpu.memory_space<vmem>>, vector<8x16x4xbf16>
    tpu.vector_store %arg11[%c0_66, %c0_67, %c288], %74 {strides = array<i32>} : memref<8x16x324xbf16, #tpu.memory_space<vmem>>, vector<8x16x4xbf16>,
    %76 = arith.index_cast %55 : i32 to index
    %c2_68 = arith.constant 2 : index
    %c0_69 = arith.constant 0 : index
    %77 = vector.load %arg10[%76, %c2_68, %c0_69] : memref<18x18x32xf32, #tpu.memory_space<vmem>>, vector<8x16x32xf32>
    %78 = arith.truncf %77 : vector<8x16x32xf32> to vector<8x16x32xbf16>
    %c0_70 = arith.constant 0 : index
    %c0_71 = arith.constant 0 : index
    %c292 = arith.constant 292 : index
    %79 = vector.load %arg11[%c0_70, %c0_71, %c292] : memref<8x16x324xbf16, #tpu.memory_space<vmem>>, vector<8x16x32xbf16>
    tpu.vector_store %arg11[%c0_70, %c0_71, %c292], %78 {strides = array<i32>} : memref<8x16x324xbf16, #tpu.memory_space<vmem>>, vector<8x16x32xbf16>,
    %c0_72 = arith.constant 0 : index
    %c0_73 = arith.constant 0 : index
    %c0_74 = arith.constant 0 : index
    %80 = vector.load %arg11[%c0_72, %c0_73, %c0_74] : memref<8x16x324xbf16, #tpu.memory_space<vmem>>, vector<8x16x324xbf16>
    %81 = vector.shape_cast %80 : vector<8x16x324xbf16> to vector<128x324xbf16>
    %c0_75 = arith.constant 0 : index
    %c0_76 = arith.constant 0 : index
    %82 = vector.load %arg5[%c0_75, %c0_76] : memref<324x128xbf16, #tpu.memory_space<vmem>>, vector<324x128xbf16>
    %cst = arith.constant dense<0.000000e+00> : vector<128x128xf32>
    %83 = tpu.matmul %81, %82, %cst {dimension_numbers = #tpu.dot_dimension_numbers<[1], [0], [0], [1], [0, 0, 1, 1], [], []>} : vector<128x324xbf16>, vector<324x128xbf16>, vector<128x128xf32> -> vector<128x128xf32>
    %c0_77 = arith.constant 0 : index
    %c0_78 = arith.constant 0 : index
    %84 = vector.load %arg6[%c0_77, %c0_78] : memref<1x128xf32, #tpu.memory_space<vmem>>, vector<1x128xf32>
    %85 = vector.shape_cast %84 : vector<1x128xf32> to vector<128xf32>
    %86 = vector.shape_cast %85 : vector<128xf32> to vector<1x128xf32>
    %87 = vector.broadcast %86 : vector<1x128xf32> to vector<128x128xf32>
    %88 = arith.addf %83, %87 : vector<128x128xf32>
    %89 = vector.extract_strided_slice %88 {offsets = [0, 96], sizes = [128, 32], strides = [1, 1]} : vector<128x128xf32> to vector<128x32xf32>
    %90 = math.tanh %89 : vector<128x32xf32>
    %91 = arith.negf %88 : vector<128x128xf32>
    %92 = math.exp %91 : vector<128x128xf32>
    %cst_79 = arith.constant 1.000000e+00 : f32
    %93 = vector.broadcast %cst_79 : f32 to vector<128x128xf32>
    %94 = arith.addf %93, %92 : vector<128x128xf32>
    %95 = arith.divf %93, %94 : vector<128x128xf32>
    %96 = vector.extract_strided_slice %95 {offsets = [0, 0], sizes = [128, 32], strides = [1, 1]} : vector<128x128xf32> to vector<128x32xf32>
    %97 = vector.extract_strided_slice %95 {offsets = [0, 32], sizes = [128, 32], strides = [1, 1]} : vector<128x128xf32> to vector<128x32xf32>
    %98 = vector.extract_strided_slice %95 {offsets = [0, 64], sizes = [128, 32], strides = [1, 1]} : vector<128x128xf32> to vector<128x32xf32>
    %c0_80 = arith.constant 0 : index
    %c0_81 = arith.constant 0 : index
    %c0_82 = arith.constant 0 : index
    %c0_83 = arith.constant 0 : index
    %99 = vector.load %arg4[%c0_80, %c0_81, %c0_82, %c0_83] : memref<1x8x16x32xf32, #tpu.memory_space<vmem>>, vector<1x8x16x32xf32>
    %100 = vector.shape_cast %99 : vector<1x8x16x32xf32> to vector<8x16x32xf32>
    %101 = vector.shape_cast %100 : vector<8x16x32xf32> to vector<128x32xf32>
    %102 = arith.mulf %97, %101 : vector<128x32xf32>
    %103 = arith.mulf %96, %90 : vector<128x32xf32>
    %104 = arith.addf %102, %103 : vector<128x32xf32>
    %105 = math.tanh %104 : vector<128x32xf32>
    %106 = arith.mulf %98, %105 : vector<128x32xf32>
    %107 = vector.shape_cast %104 : vector<128x32xf32> to vector<8x16x32xf32>
    %c0_84 = arith.constant 0 : index
    %c0_85 = arith.constant 0 : index
    %c0_86 = arith.constant 0 : index
    %c0_87 = arith.constant 0 : index
    %108 = vector.load %arg7[%c0_84, %c0_85, %c0_86, %c0_87] : memref<1x8x16x32xf32, #tpu.memory_space<vmem>>, vector<1x8x16x32xf32>
    %109 = vector.shape_cast %108 : vector<1x8x16x32xf32> to vector<8x16x32xf32>
    %110 = vector.shape_cast %107 : vector<8x16x32xf32> to vector<1x8x16x32xf32>
    tpu.vector_store %arg7[%c0_84, %c0_85, %c0_86, %c0_87], %110 {strides = array<i32>} : memref<1x8x16x32xf32, #tpu.memory_space<vmem>>, vector<1x8x16x32xf32>,
    %111 = vector.shape_cast %106 : vector<128x32xf32> to vector<8x16x32xf32>
    %c0_88 = arith.constant 0 : index
    %c0_89 = arith.constant 0 : index
    %c0_90 = arith.constant 0 : index
    %c0_91 = arith.constant 0 : index
    %112 = vector.load %arg8[%c0_88, %c0_89, %c0_90, %c0_91] : memref<1x8x16x32xf32, #tpu.memory_space<vmem>>, vector<1x8x16x32xf32>
    %113 = vector.shape_cast %112 : vector<1x8x16x32xf32> to vector<8x16x32xf32>
    %114 = vector.shape_cast %111 : vector<8x16x32xf32> to vector<1x8x16x32xf32>
    tpu.vector_store %arg8[%c0_88, %c0_89, %c0_90, %c0_91], %114 {strides = array<i32>} : memref<1x8x16x32xf32, #tpu.memory_space<vmem>>, vector<1x8x16x32xf32>,
    return
  }
  func.func @transform_0(%arg0: i32, %arg1: i32) -> (i32, i32, i32, i32) {
    %c0_i32 = arith.constant 0 : i32
    %c0_i32_0 = arith.constant 0 : i32
    %c0_i32_1 = arith.constant 0 : i32
    %c0_i32_2 = arith.constant 0 : i32
    return %arg0, %c0_i32, %c0_i32_0, %c0_i32_1 : i32, i32, i32, i32
  }
  func.func @transform_1(%arg0: i32, %arg1: i32) -> (i32, i32, i32, i32) {
    %c0_i32 = arith.constant 0 : i32
    %c0_i32_0 = arith.constant 0 : i32
    %c0_i32_1 = arith.constant 0 : i32
    %c0_i32_2 = arith.constant 0 : i32
    return %arg0, %c0_i32, %c0_i32_0, %c0_i32_1 : i32, i32, i32, i32
  }
  func.func @transform_2(%arg0: i32, %arg1: i32) -> (i32, i32, i32, i32) {
    %c0_i32 = arith.constant 0 : i32
    %c0_i32_0 = arith.constant 0 : i32
    %c0_i32_1 = arith.constant 0 : i32
    return %arg0, %arg1, %c0_i32, %c0_i32_0 : i32, i32, i32, i32
  }
  func.func @transform_3(%arg0: i32, %arg1: i32) -> (i32, i32) {
    %c0_i32 = arith.constant 0 : i32
    %c0_i32_0 = arith.constant 0 : i32
    %c0_i32_1 = arith.constant 0 : i32
    return %c0_i32, %c0_i32_0 : i32, i32
  }
  func.func @transform_4(%arg0: i32, %arg1: i32) -> (i32, i32) {
    %c0_i32 = arith.constant 0 : i32
    %c0_i32_0 = arith.constant 0 : i32
    %c0_i32_1 = arith.constant 0 : i32
    return %c0_i32, %c0_i32_0 : i32, i32
  }
  func.func @transform_5(%arg0: i32, %arg1: i32) -> (i32, i32, i32, i32) {
    %c0_i32 = arith.constant 0 : i32
    %c0_i32_0 = arith.constant 0 : i32
    %c0_i32_1 = arith.constant 0 : i32
    return %arg0, %arg1, %c0_i32, %c0_i32_0 : i32, i32, i32, i32
  }
  func.func @transform_6(%arg0: i32, %arg1: i32) -> (i32, i32, i32, i32) {
    %c0_i32 = arith.constant 0 : i32
    %c0_i32_0 = arith.constant 0 : i32
    %c0_i32_1 = arith.constant 0 : i32
    return %arg0, %arg1, %c0_i32, %c0_i32_0 : i32, i32, i32, i32
  }
}

</mosaic_0001>

<llo_original>
// kernel: convlstm_cell_forward.1
$region0: #{convlstm_cell_forward.1}
  #allocation0 [shape = 'u32[]', space=smem, size = 0x4, offset = 0x4, fixed_abs, tag = 'smem constant byte address 0x4 - core index']
  #allocation1 [shape = 'u32[144,128]{1,0:T(1,128)}', space=vmem, size = 0x12000, scoped, tag = 'internal scratch']
  #allocation2 [shape = 'f32[18,18,4]{2,1,0:T(8,128)}', space=vmem, size = 0x36000, scoped, tag = 'scratch operand']
  #allocation3 [shape = 'f32[18,18,32]{2,1,0:T(8,128)}', space=vmem, size = 0x36000, scoped, tag = 'scratch operand']
  #allocation4 [shape = 'bf16[8,16,324]{2,1,0:T(16,128)(2,1)}', space=vmem, size = 0x18000, scoped, tag = 'scratch operand']
  %s0 = inlined_call_operand.vmem [shape: f32[2,16,16,4], index: 0, kind: input, shape index: {}]
  %s1 = inlined_call_operand.vmem [shape: f32[2,16,16,32], index: 1, kind: input, shape index: {}]
  %s2 = inlined_call_operand.hbm [shape: f32[2,16,16,32], index: 2, kind: input, shape index: {}]
  %s3 = inlined_call_operand.hbm [shape: bf16[324,128], index: 3, kind: input, shape index: {}]
  %s4 = inlined_call_operand.vmem [shape: f32[1,128], index: 4, kind: input, shape index: {}]
  %s5 = inlined_call_operand.hbm [shape: f32[2,16,16,32], index: 5, kind: output, shape index: {0}]
  %s6 = inlined_call_operand.hbm [shape: f32[2,16,16,32], index: 6, kind: output, shape index: {1}]
  %7 = xla_tuple %s5, %s6
  %s8 = sld [smem:[#allocation0]]
  $region73: #{convlstm_cell_forward.1} parent=0
    _
  %s10 = ssub.s32 1, %s8
  %s11 = scalar_select 0, %s10, %s8
  $region1: #{convlstm_cell_forward.1} parent=0
    #allocation5 [shape = 'u8[131072]{0}', space=vmem, size = 0x20000, scoped, tag = 'input window, operand 2']
    #allocation6 [shape = 's32[2]{0}', space=sflag, size = 0x8, scoped, tag = 'scoped memory for convlstm_cell_forward.1']
    #allocation7 [shape = 's32[2]{0}', space=sflag, size = 0x8, scoped, tag = 'scoped memory for convlstm_cell_forward.1']
    #allocation8 [shape = 'u8[83968]{0}', space=vmem, size = 0x14800, scoped, tag = 'input window, operand 3, single buffered']
    #allocation9 [shape = 's32[1]{0}', space=sflag, size = 0x4, scoped, tag = 'scoped memory for convlstm_cell_forward.1']
    #allocation10 [shape = 'u8[131072]{0}', space=vmem, size = 0x20000, scoped, tag = 'output window, operand 0']
    #allocation11 [shape = 'u8[131072]{0}', space=vmem, size = 0x20000, scoped, tag = 'output window, operand 1']
    #allocation12 [shape = 's32[2]{0}', space=sflag, size = 0x8, scoped, tag = 'scoped memory for convlstm_cell_forward.1']
    %12 = vsyncpa [#allocation6], 0
    %s13 = scalar_lea.sflag [#allocation6], 1
    %14 = vsyncpa %s13, 0
    %15 = vsyncpa [#allocation9], 0
    %16 = vsyncpa [#allocation7], 0
    %s17 = scalar_lea.sflag [#allocation7], 1
    %18 = vsyncpa %s17, 0
    %19 = vsyncpa [#allocation12], 0
    %s20 = scalar_lea.sflag [#allocation12], 1
    %21 = vsyncpa %s20, 0
    loop: start=0, step=1, limit=6
    $region2: #{convlstm_cell_forward.1} parent=1 // loop_pre_header
      _
    $region3: #{convlstm_cell_forward.1} parent=1 // loop_header
      %s23 = sphi 0, %s27
      %p24 = scmp.ge.s32.totalorder %s23, 6
      %s30 = sphi 0, %s42
      %s31 = sphi 0, %s38
      %s32 = sphi 0, %s30
      %s33 = sphi 0, %s31
      %s34 = sphi 0, %s32
      %s35 = sphi 0, %s33
      %s45 = sphi 0, %s47
      %s48 = sphi 0, %s45
      %s49 = sphi 0, %s48
      %s65 = sphi 0, %s49
      %s71 = sphi 0, %s73
      %s74 = sphi 0, %s71
      %s75 = sphi 0, %s74
      %s91 = sphi 0, %s75
      %s99 = sphi 0, %s101
      %s102 = sphi 0, %s99
      %s103 = sphi 0, %s102
      %s119 = sphi 0, %s103
      %s123 = sphi 0, %s123
      %s125 = sphi 0, %s123
      %s126 = sphi 0, %s125
      %s140 = sphi 0, %s126
      %s144 = sphi 0, %s144
      %s146 = sphi 0, %s144
      %s147 = sphi 0, %s146
      %s161 = sphi 0, %s147
      %s169 = sphi 0, %s171
      %s172 = sphi 0, %s169
      %s173 = sphi 0, %s172
      %s189 = sphi 0, %s173
      %s197 = sphi 0, %s199
      %s200 = sphi 0, %s197
      %s201 = sphi 0, %s200
      %s217 = sphi 0, %s201
    $region4: #{convlstm_cell_forward.1} parent=1 // loop_header_branch
      %26 = sbr.rel (%p24) target = $region8
    $region5: #{convlstm_cell_forward.1} parent=1 // loop_body
      %s28 = ssub.s32 %s23, 1
      %s29 = ssub.s32 %s23, 2
      %s36 = sadd.s32 1, %s31
      %p37 = scmp.ge.s32.totalorder %s36, 2
      %s38 = scalar_select %p37, 0, %s36
      %s39 = sadd.s32 1, %s30
      %s40 = scalar_select %p37, %s39, %s30
      %p41 = scmp.ge.s32.totalorder %s40, 2
      %s42 = scalar_select %p41, 0, %s40
      %s43 = ssub.s32 %s30, %s42
      %p44 = scmp.eq.s32.totalorder %s43, 0
      %s46 = sadd.s32 %s45, 1
      %s47 = scalar_select %p44, %s45, %s46
      %p50 = pneg %p44
      %p51 = scmp.eq.s32.totalorder %s23, 3
      %p52 = por %p50, %p51
      %p53 = scmp.ne.s32.totalorder %s45, %s48
      %p54 = scmp.eq.s32.totalorder %s23, 0
      %p55 = por %p53, %p54
      %p56 = scmp.ne.s32.totalorder %s45, %s48
      %p57 = scmp.eq.s32.totalorder %s28, 3
      %p58 = por %p56, %p57
      %p59 = scmp.ne.s32.totalorder %s48, %s49
      %p60 = scmp.eq.s32.totalorder %s28, 0
      %p61 = por %p59, %p60
      %p62 = scmp.ne.s32.totalorder %s48, %s49
      %p63 = scmp.eq.s32.totalorder %s29, 3
      %p64 = por %p62, %p63
      %p66 = scmp.ne.s32.totalorder %s49, %s65
      %p67 = scmp.eq.s32.totalorder %s29, 0
      %p68 = por %p66, %p67
      %s69 = ssub.s32 %s30, %s42
      %p70 = scmp.eq.s32.totalorder %s69, 0
      %s72 = sadd.s32 %s71, 1
      %s73 = scalar_select %p70, %s71, %s72
      %p76 = pneg %p70
      %p77 = scmp.eq.s32.totalorder %s23, 3
      %p78 = por %p76, %p77
      %p79 = scmp.ne.s32.totalorder %s71, %s74
      %p80 = scmp.eq.s32.totalorder %s23, 0
      %p81 = por %p79, %p80
      %p82 = scmp.ne.s32.totalorder %s71, %s74
      %p83 = scmp.eq.s32.totalorder %s28, 3
      %p84 = por %p82, %p83
      %p85 = scmp.ne.s32.totalorder %s74, %s75
      %p86 = scmp.eq.s32.totalorder %s28, 0
      %p87 = por %p85, %p86
      %p88 = scmp.ne.s32.totalorder %s74, %s75
      %p89 = scmp.eq.s32.totalorder %s29, 3
      %p90 = por %p88, %p89
      %p92 = scmp.ne.s32.totalorder %s75, %s91
      %p93 = scmp.eq.s32.totalorder %s29, 0
      %p94 = por %p92, %p93
      %s95 = ssub.s32 %s30, %s42
      %s96 = ssub.s32 %s31, %s38
      %s97 = sor.u32 %s95, %s96
      %p98 = scmp.eq.s32.totalorder %s97, 0
      %s100 = sadd.s32 %s99, 1
      %s101 = scalar_select %p98, %s99, %s100
      %p104 = pneg %p98
      %p105 = scmp.eq.s32.totalorder %s23, 3
      %p106 = por %p104, %p105
      %p107 = scmp.ne.s32.totalorder %s99, %s102
      %p108 = scmp.eq.s32.totalorder %s23, 0
      %p109 = por %p107, %p108
      %p110 = scmp.ne.s32.totalorder %s99, %s102
      %p111 = scmp.eq.s32.totalorder %s28, 3
      %p112 = por %p110, %p111
      %p113 = scmp.ne.s32.totalorder %s102, %s103
      %p114 = scmp.eq.s32.totalorder %s28, 0
      %p115 = por %p113, %p114
      %p116 = scmp.ne.s32.totalorder %s102, %s103
      %p117 = scmp.eq.s32.totalorder %s29, 3
      %p118 = por %p116, %p117
      %p120 = scmp.ne.s32.totalorder %s103, %s119
      %p121 = scmp.eq.s32.totalorder %s29, 0
      %p122 = por %p120, %p121
      %s124 = sadd.s32 %s123, 1
      %p127 = scmp.eq.s32.totalorder %s23, 3
      %p128 = scmp.ne.s32.totalorder %s123, %s125
      %p129 = scmp.eq.s32.totalorder %s23, 0
      %p130 = por %p128, %p129
      %p131 = scmp.ne.s32.totalorder %s123, %s125
      %p132 = scmp.eq.s32.totalorder %s28, 3
      %p133 = por %p131, %p132
      %p134 = scmp.ne.s32.totalorder %s125, %s126
      %p135 = scmp.eq.s32.totalorder %s28, 0
      %p136 = por %p134, %p135
      %p137 = scmp.ne.s32.totalorder %s125, %s126
      %p138 = scmp.eq.s32.totalorder %s29, 3
      %p139 = por %p137, %p138
      %p141 = scmp.ne.s32.totalorder %s126, %s140
      %p142 = scmp.eq.s32.totalorder %s29, 0
      %p143 = por %p141, %p142
      %s145 = sadd.s32 %s144, 1
      %p148 = scmp.eq.s32.totalorder %s23, 3
      %p149 = scmp.ne.s32.totalorder %s144, %s146
      %p150 = scmp.eq.s32.totalorder %s23, 0
      %p151 = por %p149, %p150
      %p152 = scmp.ne.s32.totalorder %s144, %s146
      %p153 = scmp.eq.s32.totalorder %s28, 3
      %p154 = por %p152, %p153
      %p155 = scmp.ne.s32.totalorder %s146, %s147
      %p156 = scmp.eq.s32.totalorder %s28, 0
      %p157 = por %p155, %p156
      %p158 = scmp.ne.s32.totalorder %s146, %s147
      %p159 = scmp.eq.s32.totalorder %s29, 3
      %p160 = por %p158, %p159
      %p162 = scmp.ne.s32.totalorder %s147, %s161
      %p163 = scmp.eq.s32.totalorder %s29, 0
      %p164 = por %p162, %p163
      %s165 = ssub.s32 %s30, %s42
      %s166 = ssub.s32 %s31, %s38
      %s167 = sor.u32 %s165, %s166
      %p168 = scmp.eq.s32.totalorder %s167, 0
      %s170 = sadd.s32 %s169, 1
      %s171 = scalar_select %p168, %s169, %s170
      %p174 = pneg %p168
      %p175 = scmp.eq.s32.totalorder %s23, 3
      %p176 = por %p174, %p175
      %p177 = scmp.ne.s32.totalorder %s169, %s172
      %p178 = scmp.eq.s32.totalorder %s23, 0
      %p179 = por %p177, %p178
      %p180 = scmp.ne.s32.totalorder %s169, %s172
      %p181 = scmp.eq.s32.totalorder %s28, 3
      %p182 = por %p180, %p181
      %p183 = scmp.ne.s32.totalorder %s172, %s173
      %p184 = scmp.eq.s32.totalorder %s28, 0
      %p185 = por %p183, %p184
      %p186 = scmp.ne.s32.totalorder %s172, %s173
      %p187 = scmp.eq.s32.totalorder %s29, 3
      %p188 = por %p186, %p187
      %p190 = scmp.ne.s32.totalorder %s173, %s189
      %p191 = scmp.eq.s32.totalorder %s29, 0
      %p192 = por %p190, %p191
      %s193 = ssub.s32 %s30, %s42
      %s194 = ssub.s32 %s31, %s38
      %s195 = sor.u32 %s193, %s194
      %p196 = scmp.eq.s32.totalorder %s195, 0
      %s198 = sadd.s32 %s197, 1
      %s199 = scalar_select %p196, %s197, %s198
      %p202 = pneg %p196
      %p203 = scmp.eq.s32.totalorder %s23, 3
      %p204 = por %p202, %p203
      %p205 = scmp.ne.s32.totalorder %s197, %s200
      %p206 = scmp.eq.s32.totalorder %s23, 0
      %p207 = por %p205, %p206
      %p208 = scmp.ne.s32.totalorder %s197, %s200
      %p209 = scmp.eq.s32.totalorder %s28, 3
      %p210 = por %p208, %p209
      %p211 = scmp.ne.s32.totalorder %s200, %s201
      %p212 = scmp.eq.s32.totalorder %s28, 0
      %p213 = por %p211, %p212
      %p214 = scmp.ne.s32.totalorder %s200, %s201
      %p215 = scmp.eq.s32.totalorder %s29, 3
      %p216 = por %p214, %p215
      %p218 = scmp.ne.s32.totalorder %s201, %s217
      %p219 = scmp.eq.s32.totalorder %s29, 0
      %p220 = por %p218, %p219
      %p221 = scmp.le.s32.totalorder 1, %s23
      %p222 = scmp.lt.s32.totalorder %s23, 5
      %p223 = pnand %p221, %p222
      %p224 = pneg %p223
      // Predicated region
      $region9: #{convlstm_cell_forward.1} parent=5 // pred_check
        _
      $region10: #{convlstm_cell_forward.1} parent=5 // pred_check_branch
        %226 = sbr.rel (%p223) target = $region12
      $region11: #{convlstm_cell_forward.1} parent=5 // pred_region
        %s227 = ssub.s32 %s23, 1
        // Predicated region
        $region13: #{convlstm_cell_forward.1} parent=11 // pred_check
          %p228 = pneg %p136
        $region14: #{convlstm_cell_forward.1} parent=11 // pred_check_branch
          %230 = sbr.rel (%p228) target = $region16
        $region15: #{convlstm_cell_forward.1} parent=11 // pred_region
          %s232 = ssub.s32 2624, 2624
          %233 = vsyncadd [#allocation9], %s232
          %s234 = sshll.u32 [#allocation8], 4
          %s235 = int_to_ptr.vmem [resolvable:$true] %s234
          %240 = dma.hbm_to_vmem [thread:$0]  %s3, 2624, %s235, [#allocation9], 64, 64, 4
        $region16: #{convlstm_cell_forward.1} parent=11 // pred_fallthru
          _
        // Predicated region
        $region17: #{convlstm_cell_forward.1} parent=11 // pred_check
          %p241 = pneg %p157
        $region18: #{convlstm_cell_forward.1} parent=11 // pred_check_branch
          %243 = sbr.rel (%p241) target = $region20
        $region19: #{convlstm_cell_forward.1} parent=11 // pred_region
          _
        $region20: #{convlstm_cell_forward.1} parent=11 // pred_fallthru
          _
      $region12: #{convlstm_cell_forward.1} parent=5 // pred_fallthru
        _
      %p244 = scmp.lt.s32.totalorder %s23, 4
      // Predicated region
      $region21: #{convlstm_cell_forward.1} parent=5 // pred_check
        %p245 = pneg %p244
      $region22: #{convlstm_cell_forward.1} parent=5 // pred_check_branch
        %247 = sbr.rel (%p245) target = $region24
      $region23: #{convlstm_cell_forward.1} parent=5 // pred_region
        // Predicated region
        $region25: #{convlstm_cell_forward.1} parent=23 // pred_check
          %p248 = pneg %p55
        $region26: #{convlstm_cell_forward.1} parent=23 // pred_check_branch
          %250 = sbr.rel (%p248) target = $region28
        $region27: #{convlstm_cell_forward.1} parent=23 // pred_region
          %p251 = scmp.lt.s32.totalorder %s30, 1
          %s252 = scalar_select %p251, %s30, 1
          %s253 = smul.addr %s252, 32
          %s254 = smul.addr %s253, 8
          %s255 = scalar_lea.vmem %s0, %s254
        $region28: #{convlstm_cell_forward.1} parent=23 // pred_fallthru
          _
        // Predicated region
        $region29: #{convlstm_cell_forward.1} parent=23 // pred_check
          %p256 = pneg %p81
        $region30: #{convlstm_cell_forward.1} parent=23 // pred_check_branch
          %258 = sbr.rel (%p256) target = $region32
        $region31: #{convlstm_cell_forward.1} parent=23 // pred_region
          %p259 = scmp.lt.s32.totalorder %s30, 1
          %s260 = scalar_select %p259, %s30, 1
          %s261 = smul.addr %s260, 32
          %s262 = smul.addr %s261, 8
          %s263 = scalar_lea.vmem %s1, %s262
        $region32: #{convlstm_cell_forward.1} parent=23 // pred_fallthru
          _
        // Predicated region
        $region33: #{convlstm_cell_forward.1} parent=23 // pred_check
          %p264 = pneg %p109
        $region34: #{convlstm_cell_forward.1} parent=23 // pred_check_branch
          %266 = sbr.rel (%p264) target = $region36
        $region35: #{convlstm_cell_forward.1} parent=23 // pred_region
          %s267 = sand.u32 %s99, 1
          %s268 = scalar_lea.sflag [#allocation6], %s267
          %s269 = sand.u32 %s99, 1
          %s270 = smul.addr %s269, 128
          %s271 = scalar_lea.vmem [#allocation5], %s270
          %s272 = smul.u32 8, %s31
          %s274 = ssub.s32 2048, 2048
          %275 = vsyncadd %s268, %s274
          %s276 = smul.addr %s272, 2
          %s277 = smul.addr %s30, 32
          %s278 = sadd.s32 %s276, %s277
          %s279 = smul.addr %s278, 128
          %s280 = scalar_lea.hbm %s2, %s279
          %s281 = sshll.u32 %s271, 4
          %s282 = int_to_ptr.vmem [resolvable:$true] %s281
          %287 = dma.hbm_to_vmem [thread:$0]  %s280, 2048, %s282, %s268, 128, 128, 8
        $region36: #{convlstm_cell_forward.1} parent=23 // pred_fallthru
          _
      $region24: #{convlstm_cell_forward.1} parent=5 // pred_fallthru
        _
      %p288 = scmp.le.s32.totalorder 1, %s23
      %p289 = scmp.lt.s32.totalorder %s23, 5
      %p290 = pnand %p288, %p289
      %p291 = pneg %p290
      // Predicated region
      $region37: #{convlstm_cell_forward.1} parent=5 // pred_check
        _
      $region38: #{convlstm_cell_forward.1} parent=5 // pred_check_branch
        %293 = sbr.rel (%p290) target = $region40
      $region39: #{convlstm_cell_forward.1} parent=5 // pred_region
        %s294 = ssub.s32 %s23, 1
        %s295 = sand.u32 %s102, 1
        %s296 = scalar_lea.sflag [#allocation6], %s295
        %s297 = sand.u32 %s102, 1
        %s298 = smul.addr %s297, 128
        %s299 = scalar_lea.vmem [#allocation5], %s298
        // Predicated region
        $region41: #{convlstm_cell_forward.1} parent=39 // pred_check
          %p300 = pneg %p115
        $region42: #{convlstm_cell_forward.1} parent=39 // pred_check_branch
          %302 = sbr.rel (%p300) target = $region44
        $region43: #{convlstm_cell_forward.1} parent=39 // pred_region
          %303 = dma.done %s296, 2048
        $region44: #{convlstm_cell_forward.1} parent=39 // pred_fallthru
          _
        // Predicated region
        $region45: #{convlstm_cell_forward.1} parent=39 // pred_check
          %p304 = pneg %p136
        $region46: #{convlstm_cell_forward.1} parent=39 // pred_check_branch
          %306 = sbr.rel (%p304) target = $region48
        $region47: #{convlstm_cell_forward.1} parent=39 // pred_region
          %307 = dma.done [#allocation9], 2624
        $region48: #{convlstm_cell_forward.1} parent=39 // pred_fallthru
          _
        %p308 = scmp.lt.s32.totalorder %s32, 1
        %s309 = scalar_select %p308, %s32, 1
        %s310 = smul.addr %s309, 32
        %s311 = smul.addr %s310, 8
        %s312 = scalar_lea.vmem %s0, %s311
        %p313 = pneg %p61
        %p314 = pneg %p58
        %p315 = scmp.lt.s32.totalorder %s32, 1
        %s316 = scalar_select %p315, %s32, 1
        %s317 = smul.addr %s316, 32
        %s318 = smul.addr %s317, 8
        %s319 = scalar_lea.vmem %s1, %s318
        %p320 = pneg %p87
        %p321 = pneg %p84
        %s322 = sand.u32 %s102, 1
        %s323 = scalar_lea.sflag [#allocation6], %s322
        %s324 = sand.u32 %s102, 1
        %s325 = smul.addr %s324, 128
        %s326 = scalar_lea.vmem [#allocation5], %s325
        %p327 = pneg %p115
        %p328 = pneg %p112
        %p329 = pneg %p136
        %p330 = pneg %p133
        %p331 = pneg %p157
        %p332 = pneg %p154
        %p333 = pneg %p185
        %p334 = pneg %p182
        %s335 = sand.u32 %s172, 1
        %s336 = scalar_lea.sflag [#allocation7], %s335
        %s337 = sand.u32 %s172, 1
        %s338 = smul.addr %s337, 128
        %s339 = scalar_lea.vmem [#allocation10], %s338
        %p340 = pneg %p213
        %p341 = pneg %p210
        %s342 = sand.u32 %s200, 1
        %s343 = scalar_lea.sflag [#allocation12], %s342
        %s344 = sand.u32 %s200, 1
        %s345 = smul.addr %s344, 128
        %s346 = scalar_lea.vmem [#allocation11], %s345
        %p347 = scmp.lt.s32.totalorder %s32, 1
        %s348 = scalar_select %p347, %s32, 1
        %s349 = smul.addr %s348, 32
        %s350 = smul.addr %s349, 8
        %s351 = scalar_lea.vmem %s0, %s350
        %p352 = scmp.lt.s32.totalorder %s32, 1
        %s353 = scalar_select %p352, %s32, 1
        %s354 = smul.addr %s353, 32
        %s355 = smul.addr %s354, 8
        %s356 = scalar_lea.vmem %s1, %s355
        %s357 = smul.u32 8, %s33
        %s358 = smul.u32 8, %s33
        %s359 = smul.u32 8, %s33
        %p361 = scmp.eq.s32.totalorder %s33, 0
        // Predicated region
        $region49: #{convlstm_cell_forward.1} parent=39 // pred_check
          %p362 = pneg %p361
        $region50: #{convlstm_cell_forward.1} parent=39 // pred_check_branch
          %364 = sbr.rel (%p362) target = $region52
        $region51: #{convlstm_cell_forward.1} parent=39 // pred_region
          %vm365 = vcmask 31744
          %366 = vst.msk [vmem:[#allocation2] sm:$0xff] %vm365, 0.0
          %367 = vst.msk [vmem:[#allocation2 + $0x8] sm:$0xff] %vm365, 0.0
          %vm368 = vcmask 25600
          %369 = vst.msk [vmem:[#allocation2 + $0x10] sm:$0x3] %vm368, 0.0
          %370 = vst.msk [vmem:[#allocation2 + $0x18] sm:$0xff] %vm365, 0.0
          %371 = vst.msk [vmem:[#allocation2 + $0x20] sm:$0xff] %vm365, 0.0
          %372 = vst.msk [vmem:[#allocation2 + $0x28] sm:$0x3] %vm368, 0.0
          %373 = vst.msk [vmem:[#allocation2 + $0x30] sm:$0xff] %vm365, 0.0
          %374 = vst.msk [vmem:[#allocation2 + $0x38] sm:$0xff] %vm365, 0.0
          %375 = vst.msk [vmem:[#allocation2 + $0x40] sm:$0x3] %vm368, 0.0
          %376 = vst.msk [vmem:[#allocation2 + $0x48] sm:$0xff] %vm365, 0.0
          %377 = vst.msk [vmem:[#allocation2 + $0x50] sm:$0xff] %vm365, 0.0
          %378 = vst.msk [vmem:[#allocation2 + $0x58] sm:$0x3] %vm368, 0.0
          %379 = vst.msk [vmem:[#allocation2 + $0x60] sm:$0xff] %vm365, 0.0
          %380 = vst.msk [vmem:[#allocation2 + $0x68] sm:$0xff] %vm365, 0.0
          %381 = vst.msk [vmem:[#allocation2 + $0x70] sm:$0x3] %vm368, 0.0
          %382 = vst.msk [vmem:[#allocation2 + $0x78] sm:$0xff] %vm365, 0.0
          %383 = vst.msk [vmem:[#allocation2 + $0x80] sm:$0xff] %vm365, 0.0
          %384 = vst.msk [vmem:[#allocation2 + $0x88] sm:$0x3] %vm368, 0.0
          %385 = vst.msk [vmem:[#allocation2 + $0x90] sm:$0xff] %vm365, 0.0
          %386 = vst.msk [vmem:[#allocation2 + $0x98] sm:$0xff] %vm365, 0.0
          %387 = vst.msk [vmem:[#allocation2 + $0xa0] sm:$0x3] %vm368, 0.0
          %388 = vst.msk [vmem:[#allocation2 + $0xa8] sm:$0xff] %vm365, 0.0
          %389 = vst.msk [vmem:[#allocation2 + $0xb0] sm:$0xff] %vm365, 0.0
          %390 = vst.msk [vmem:[#allocation2 + $0xb8] sm:$0x3] %vm368, 0.0
          %391 = vst.msk [vmem:[#allocation2 + $0xc0] sm:$0xff] %vm365, 0.0
          %392 = vst.msk [vmem:[#allocation2 + $0xc8] sm:$0xff] %vm365, 0.0
          %393 = vst.msk [vmem:[#allocation2 + $0xd0] sm:$0x3] %vm368, 0.0
          %394 = vst.msk [vmem:[#allocation2 + $0xd8] sm:$0xff] %vm365, 0.0
          %395 = vst.msk [vmem:[#allocation2 + $0xe0] sm:$0xff] %vm365, 0.0
          %396 = vst.msk [vmem:[#allocation2 + $0xe8] sm:$0x3] %vm368, 0.0
          %397 = vst.msk [vmem:[#allocation2 + $0xf0] sm:$0xff] %vm365, 0.0
          %398 = vst.msk [vmem:[#allocation2 + $0xf8] sm:$0xff] %vm365, 0.0
          %399 = vst.msk [vmem:[#allocation2 + $0x100] sm:$0x3] %vm368, 0.0
          %400 = vst.msk [vmem:[#allocation2 + $0x108] sm:$0xff] %vm365, 0.0
          %401 = vst.msk [vmem:[#allocation2 + $0x110] sm:$0xff] %vm365, 0.0
          %402 = vst.msk [vmem:[#allocation2 + $0x118] sm:$0x3] %vm368, 0.0
          %403 = vst.msk [vmem:[#allocation2 + $0x120] sm:$0xff] %vm365, 0.0
          %404 = vst.msk [vmem:[#allocation2 + $0x128] sm:$0xff] %vm365, 0.0
          %405 = vst.msk [vmem:[#allocation2 + $0x130] sm:$0x3] %vm368, 0.0
          %406 = vst.msk [vmem:[#allocation2 + $0x138] sm:$0xff] %vm365, 0.0
          %407 = vst.msk [vmem:[#allocation2 + $0x140] sm:$0xff] %vm365, 0.0
          %408 = vst.msk [vmem:[#allocation2 + $0x148] sm:$0x3] %vm368, 0.0
          %409 = vst.msk [vmem:[#allocation2 + $0x150] sm:$0xff] %vm365, 0.0
          %410 = vst.msk [vmem:[#allocation2 + $0x158] sm:$0xff] %vm365, 0.0
          %411 = vst.msk [vmem:[#allocation2 + $0x160] sm:$0x3] %vm368, 0.0
          %412 = vst.msk [vmem:[#allocation2 + $0x168] sm:$0xff] %vm365, 0.0
          %413 = vst.msk [vmem:[#allocation2 + $0x170] sm:$0xff] %vm365, 0.0
          %414 = vst.msk [vmem:[#allocation2 + $0x178] sm:$0x3] %vm368, 0.0
          %415 = vst.msk [vmem:[#allocation2 + $0x180] sm:$0xff] %vm365, 0.0
          %416 = vst.msk [vmem:[#allocation2 + $0x188] sm:$0xff] %vm365, 0.0
          %417 = vst.msk [vmem:[#allocation2 + $0x190] sm:$0x3] %vm368, 0.0
          %418 = vst.msk [vmem:[#allocation2 + $0x198] sm:$0xff] %vm365, 0.0
          %419 = vst.msk [vmem:[#allocation2 + $0x1a0] sm:$0xff] %vm365, 0.0
          %420 = vst.msk [vmem:[#allocation2 + $0x1a8] sm:$0x3] %vm368, 0.0
          %vm421 = vcmask 261120
          %422 = vst.msk [vmem:[#allocation3] sm:$0xff] %vm421, 0.0
          %423 = vst.msk [vmem:[#allocation3 + $0x8] sm:$0xff] %vm421, 0.0
          %vm424 = vcmask 254976
          %425 = vst.msk [vmem:[#allocation3 + $0x10] sm:$0x3] %vm424, 0.0
          %426 = vst.msk [vmem:[#allocation3 + $0x18] sm:$0xff] %vm421, 0.0
          %427 = vst.msk [vmem:[#allocation3 + $0x20] sm:$0xff] %vm421, 0.0
          %428 = vst.msk [vmem:[#allocation3 + $0x28] sm:$0x3] %vm424, 0.0
          %429 = vst.msk [vmem:[#allocation3 + $0x30] sm:$0xff] %vm421, 0.0
          %430 = vst.msk [vmem:[#allocation3 + $0x38] sm:$0xff] %vm421, 0.0
          %431 = vst.msk [vmem:[#allocation3 + $0x40] sm:$0x3] %vm424, 0.0
          %432 = vst.msk [vmem:[#allocation3 + $0x48] sm:$0xff] %vm421, 0.0
          %433 = vst.msk [vmem:[#allocation3 + $0x50] sm:$0xff] %vm421, 0.0
          %434 = vst.msk [vmem:[#allocation3 + $0x58] sm:$0x3] %vm424, 0.0
          %435 = vst.msk [vmem:[#allocation3 + $0x60] sm:$0xff] %vm421, 0.0
          %436 = vst.msk [vmem:[#allocation3 + $0x68] sm:$0xff] %vm421, 0.0
          %437 = vst.msk [vmem:[#allocation3 + $0x70] sm:$0x3] %vm424, 0.0
          %438 = vst.msk [vmem:[#allocation3 + $0x78] sm:$0xff] %vm421, 0.0
          %439 = vst.msk [vmem:[#allocation3 + $0x80] sm:$0xff] %vm421, 0.0
          %440 = vst.msk [vmem:[#allocation3 + $0x88] sm:$0x3] %vm424, 0.0
          %441 = vst.msk [vmem:[#allocation3 + $0x90] sm:$0xff] %vm421, 0.0
          %442 = vst.msk [vmem:[#allocation3 + $0x98] sm:$0xff] %vm421, 0.0
          %443 = vst.msk [vmem:[#allocation3 + $0xa0] sm:$0x3] %vm424, 0.0
          %444 = vst.msk [vmem:[#allocation3 + $0xa8] sm:$0xff] %vm421, 0.0
          %445 = vst.msk [vmem:[#allocation3 + $0xb0] sm:$0xff] %vm421, 0.0
          %446 = vst.msk [vmem:[#allocation3 + $0xb8] sm:$0x3] %vm424, 0.0
          %447 = vst.msk [vmem:[#allocation3 + $0xc0] sm:$0xff] %vm421, 0.0
          %448 = vst.msk [vmem:[#allocation3 + $0xc8] sm:$0xff] %vm421, 0.0
          %449 = vst.msk [vmem:[#allocation3 + $0xd0] sm:$0x3] %vm424, 0.0
          %450 = vst.msk [vmem:[#allocation3 + $0xd8] sm:$0xff] %vm421, 0.0
          %451 = vst.msk [vmem:[#allocation3 + $0xe0] sm:$0xff] %vm421, 0.0
          %452 = vst.msk [vmem:[#allocation3 + $0xe8] sm:$0x3] %vm424, 0.0
          %453 = vst.msk [vmem:[#allocation3 + $0xf0] sm:$0xff] %vm421, 0.0
          %454 = vst.msk [vmem:[#allocation3 + $0xf8] sm:$0xff] %vm421, 0.0
          %455 = vst.msk [vmem:[#allocation3 + $0x100] sm:$0x3] %vm424, 0.0
          %456 = vst.msk [vmem:[#allocation3 + $0x108] sm:$0xff] %vm421, 0.0
          %457 = vst.msk [vmem:[#allocation3 + $0x110] sm:$0xff] %vm421, 0.0
          %458 = vst.msk [vmem:[#allocation3 + $0x118] sm:$0x3] %vm424, 0.0
          %459 = vst.msk [vmem:[#allocation3 + $0x120] sm:$0xff] %vm421, 0.0
          %460 = vst.msk [vmem:[#allocation3 + $0x128] sm:$0xff] %vm421, 0.0
          %461 = vst.msk [vmem:[#allocation3 + $0x130] sm:$0x3] %vm424, 0.0
          %462 = vst.msk [vmem:[#allocation3 + $0x138] sm:$0xff] %vm421, 0.0
          %463 = vst.msk [vmem:[#allocation3 + $0x140] sm:$0xff] %vm421, 0.0
          %464 = vst.msk [vmem:[#allocation3 + $0x148] sm:$0x3] %vm424, 0.0
          %465 = vst.msk [vmem:[#allocation3 + $0x150] sm:$0xff] %vm421, 0.0
          %466 = vst.msk [vmem:[#allocation3 + $0x158] sm:$0xff] %vm421, 0.0
          %467 = vst.msk [vmem:[#allocation3 + $0x160] sm:$0x3] %vm424, 0.0
          %468 = vst.msk [vmem:[#allocation3 + $0x168] sm:$0xff] %vm421, 0.0
          %469 = vst.msk [vmem:[#allocation3 + $0x170] sm:$0xff] %vm421, 0.0
          %470 = vst.msk [vmem:[#allocation3 + $0x178] sm:$0x3] %vm424, 0.0
          %471 = vst.msk [vmem:[#allocation3 + $0x180] sm:$0xff] %vm421, 0.0
          %472 = vst.msk [vmem:[#allocation3 + $0x188] sm:$0xff] %vm421, 0.0
          %473 = vst.msk [vmem:[#allocation3 + $0x190] sm:$0x3] %vm424, 0.0
          %474 = vst.msk [vmem:[#allocation3 + $0x198] sm:$0xff] %vm421, 0.0
          %475 = vst.msk [vmem:[#allocation3 + $0x1a0] sm:$0xff] %vm421, 0.0
          %476 = vst.msk [vmem:[#allocation3 + $0x1a8] sm:$0x3] %vm424, 0.0
          %v477 = vld [vmem:[%s351] sm:$0xff]
          %v478 = vld [vmem:[%s351 + $0x8] sm:$0xff]
          %v479 = vld [vmem:[%s351 + $0x10] sm:$0xff]
          %v480 = vld [vmem:[%s351 + $0x18] sm:$0xff]
          %v481 = vld [vmem:[%s351 + $0x20] sm:$0xff]
          %v482 = vld [vmem:[%s351 + $0x28] sm:$0xff]
          %v483 = vld [vmem:[%s351 + $0x30] sm:$0xff]
          %v484 = vld [vmem:[%s351 + $0x38] sm:$0xff]
          %v485 = vld [vmem:[%s351 + $0x40] sm:$0xff]
          %v486 = vld [vmem:[%s351 + $0x48] sm:$0xff]
          %v487 = vld [vmem:[%s351 + $0x50] sm:$0xff]
          %v488 = vld [vmem:[%s351 + $0x58] sm:$0xff]
          %v489 = vld [vmem:[%s351 + $0x60] sm:$0xff]
          %v490 = vld [vmem:[%s351 + $0x68] sm:$0xff]
          %v491 = vld [vmem:[%s351 + $0x70] sm:$0xff]
          %v492 = vld [vmem:[%s351 + $0x78] sm:$0xff]
          %v493 = vld [vmem:[%s351 + $0x80] sm:$0xff]
          %v494 = vld [vmem:[%s351 + $0x88] sm:$0xff]
          %v495 = vld [vmem:[%s351 + $0x90] sm:$0xff]
          %v496 = vld [vmem:[%s351 + $0x98] sm:$0xff]
          %v497 = vld [vmem:[%s351 + $0xa0] sm:$0xff]
          %v498 = vld [vmem:[%s351 + $0xa8] sm:$0xff]
          %v499 = vld [vmem:[%s351 + $0xb0] sm:$0xff]
          %v500 = vld [vmem:[%s351 + $0xb8] sm:$0xff]
          %v501 = vld [vmem:[%s351 + $0xc0] sm:$0xff]
          %v502 = vld [vmem:[%s351 + $0xc8] sm:$0xff]
          %v503 = vld [vmem:[%s351 + $0xd0] sm:$0xff]
          %v504 = vld [vmem:[%s351 + $0xd8] sm:$0xff]
          %v505 = vld [vmem:[%s351 + $0xe0] sm:$0xff]
          %v506 = vld [vmem:[%s351 + $0xe8] sm:$0xff]
          %v507 = vld [vmem:[%s351 + $0xf0] sm:$0xff]
          %v508 = vld [vmem:[%s351 + $0xf8] sm:$0xff]
          %s509 = scalar_lea.vmem [#allocation2], 24
          %510 = vst.msk [vmem:[%s509 + $0x1] sm:$0xff] %vm365, %v477
          %511 = vst.msk [vmem:[%s509 + $0x9] sm:$0xff] %vm365, %v478
          %512 = vst.msk [vmem:[%s509 + $0x19] sm:$0xff] %vm365, %v479
          %513 = vst.msk [vmem:[%s509 + $0x21] sm:$0xff] %vm365, %v480
          %514 = vst.msk [vmem:[%s509 + $0x31] sm:$0xff] %vm365, %v481
          %515 = vst.msk [vmem:[%s509 + $0x39] sm:$0xff] %vm365, %v482
          %516 = vst.msk [vmem:[%s509 + $0x49] sm:$0xff] %vm365, %v483
          %517 = vst.msk [vmem:[%s509 + $0x51] sm:$0xff] %vm365, %v484
          %518 = vst.msk [vmem:[%s509 + $0x61] sm:$0xff] %vm365, %v485
          %519 = vst.msk [vmem:[%s509 + $0x69] sm:$0xff] %vm365, %v486
          %520 = vst.msk [vmem:[%s509 + $0x79] sm:$0xff] %vm365, %v487
          %521 = vst.msk [vmem:[%s509 + $0x81] sm:$0xff] %vm365, %v488
          %522 = vst.msk [vmem:[%s509 + $0x91] sm:$0xff] %vm365, %v489
          %523 = vst.msk [vmem:[%s509 + $0x99] sm:$0xff] %vm365, %v490
          %524 = vst.msk [vmem:[%s509 + $0xa9] sm:$0xff] %vm365, %v491
          %525 = vst.msk [vmem:[%s509 + $0xb1] sm:$0xff] %vm365, %v492
          %526 = vst.msk [vmem:[%s509 + $0xc1] sm:$0xff] %vm365, %v493
          %527 = vst.msk [vmem:[%s509 + $0xc9] sm:$0xff] %vm365, %v494
          %528 = vst.msk [vmem:[%s509 + $0xd9] sm:$0xff] %vm365, %v495
          %529 = vst.msk [vmem:[%s509 + $0xe1] sm:$0xff] %vm365, %v496
          %530 = vst.msk [vmem:[%s509 + $0xf1] sm:$0xff] %vm365, %v497
          %531 = vst.msk [vmem:[%s509 + $0xf9] sm:$0xff] %vm365, %v498
          %532 = vst.msk [vmem:[%s509 + $0x109] sm:$0xff] %vm365, %v499
          %533 = vst.msk [vmem:[%s509 + $0x111] sm:$0xff] %vm365, %v500
          %534 = vst.msk [vmem:[%s509 + $0x121] sm:$0xff] %vm365, %v501
          %535 = vst.msk [vmem:[%s509 + $0x129] sm:$0xff] %vm365, %v502
          %536 = vst.msk [vmem:[%s509 + $0x139] sm:$0xff] %vm365, %v503
          %537 = vst.msk [vmem:[%s509 + $0x141] sm:$0xff] %vm365, %v504
          %538 = vst.msk [vmem:[%s509 + $0x151] sm:$0xff] %vm365, %v505
          %539 = vst.msk [vmem:[%s509 + $0x159] sm:$0xff] %vm365, %v506
          %540 = vst.msk [vmem:[%s509 + $0x169] sm:$0xff] %vm365, %v507
          %541 = vst.msk [vmem:[%s509 + $0x171] sm:$0xff] %vm365, %v508
          %v542 = vld [vmem:[%s356] sm:$0xff]
          %v543 = vld [vmem:[%s356 + $0x8] sm:$0xff]
          %v544 = vld [vmem:[%s356 + $0x10] sm:$0xff]
          %v545 = vld [vmem:[%s356 + $0x18] sm:$0xff]
          %v546 = vld [vmem:[%s356 + $0x20] sm:$0xff]
          %v547 = vld [vmem:[%s356 + $0x28] sm:$0xff]
          %v548 = vld [vmem:[%s356 + $0x30] sm:$0xff]
          %v549 = vld [vmem:[%s356 + $0x38] sm:$0xff]
          %v550 = vld [vmem:[%s356 + $0x40] sm:$0xff]
          %v551 = vld [vmem:[%s356 + $0x48] sm:$0xff]
          %v552 = vld [vmem:[%s356 + $0x50] sm:$0xff]
          %v553 = vld [vmem:[%s356 + $0x58] sm:$0xff]
          %v554 = vld [vmem:[%s356 + $0x60] sm:$0xff]
          %v555 = vld [vmem:[%s356 + $0x68] sm:$0xff]
          %v556 = vld [vmem:[%s356 + $0x70] sm:$0xff]
          %v557 = vld [vmem:[%s356 + $0x78] sm:$0xff]
          %v558 = vld [vmem:[%s356 + $0x80] sm:$0xff]
          %v559 = vld [vmem:[%s356 + $0x88] sm:$0xff]
          %v560 = vld [vmem:[%s356 + $0x90] sm:$0xff]
          %v561 = vld [vmem:[%s356 + $0x98] sm:$0xff]
          %v562 = vld [vmem:[%s356 + $0xa0] sm:$0xff]
          %v563 = vld [vmem:[%s356 + $0xa8] sm:$0xff]
          %v564 = vld [vmem:[%s356 + $0xb0] sm:$0xff]
          %v565 = vld [vmem:[%s356 + $0xb8] sm:$0xff]
          %v566 = vld [vmem:[%s356 + $0xc0] sm:$0xff]
          %v567 = vld [vmem:[%s356 + $0xc8] sm:$0xff]
          %v568 = vld [vmem:[%s356 + $0xd0] sm:$0xff]
          %v569 = vld [vmem:[%s356 + $0xd8] sm:$0xff]
          %v570 = vld [vmem:[%s356 + $0xe0] sm:$0xff]
          %v571 = vld [vmem:[%s356 + $0xe8] sm:$0xff]
          %v572 = vld [vmem:[%s356 + $0xf0] sm:$0xff]
          %v573 = vld [vmem:[%s356 + $0xf8] sm:$0xff]
          %s574 = scalar_lea.vmem [#allocation3], 24
          %575 = vst.msk [vmem:[%s574 + $0x1] sm:$0xff] %vm421, %v542
          %576 = vst.msk [vmem:[%s574 + $0x9] sm:$0xff] %vm421, %v543
          %577 = vst.msk [vmem:[%s574 + $0x19] sm:$0xff] %vm421, %v544
          %578 = vst.msk [vmem:[%s574 + $0x21] sm:$0xff] %vm421, %v545
          %579 = vst.msk [vmem:[%s574 + $0x31] sm:$0xff] %vm421, %v546
          %580 = vst.msk [vmem:[%s574 + $0x39] sm:$0xff] %vm421, %v547
          %581 = vst.msk [vmem:[%s574 + $0x49] sm:$0xff] %vm421, %v548
          %582 = vst.msk [vmem:[%s574 + $0x51] sm:$0xff] %vm421, %v549
          %583 = vst.msk [vmem:[%s574 + $0x61] sm:$0xff] %vm421, %v550
          %584 = vst.msk [vmem:[%s574 + $0x69] sm:$0xff] %vm421, %v551
          %585 = vst.msk [vmem:[%s574 + $0x79] sm:$0xff] %vm421, %v552
          %586 = vst.msk [vmem:[%s574 + $0x81] sm:$0xff] %vm421, %v553
          %587 = vst.msk [vmem:[%s574 + $0x91] sm:$0xff] %vm421, %v554
          %588 = vst.msk [vmem:[%s574 + $0x99] sm:$0xff] %vm421, %v555
          %589 = vst.msk [vmem:[%s574 + $0xa9] sm:$0xff] %vm421, %v556
          %590 = vst.msk [vmem:[%s574 + $0xb1] sm:$0xff] %vm421, %v557
          %591 = vst.msk [vmem:[%s574 + $0xc1] sm:$0xff] %vm421, %v558
          %592 = vst.msk [vmem:[%s574 + $0xc9] sm:$0xff] %vm421, %v559
          %593 = vst.msk [vmem:[%s574 + $0xd9] sm:$0xff] %vm421, %v560
          %594 = vst.msk [vmem:[%s574 + $0xe1] sm:$0xff] %vm421, %v561
          %595 = vst.msk [vmem:[%s574 + $0xf1] sm:$0xff] %vm421, %v562
          %596 = vst.msk [vmem:[%s574 + $0xf9] sm:$0xff] %vm421, %v563
          %597 = vst.msk [vmem:[%s574 + $0x109] sm:$0xff] %vm421, %v564
          %598 = vst.msk [vmem:[%s574 + $0x111] sm:$0xff] %vm421, %v565
          %599 = vst.msk [vmem:[%s574 + $0x121] sm:$0xff] %vm421, %v566
          %600 = vst.msk [vmem:[%s574 + $0x129] sm:$0xff] %vm421, %v567
          %601 = vst.msk [vmem:[%s574 + $0x139] sm:$0xff] %vm421, %v568
          %602 = vst.msk [vmem:[%s574 + $0x141] sm:$0xff] %vm421, %v569
          %603 = vst.msk [vmem:[%s574 + $0x151] sm:$0xff] %vm421, %v570
          %604 = vst.msk [vmem:[%s574 + $0x159] sm:$0xff] %vm421, %v571
          %605 = vst.msk [vmem:[%s574 + $0x169] sm:$0xff] %vm421, %v572
          %606 = vst.msk [vmem:[%s574 + $0x171] sm:$0xff] %vm421, %v573
        $region52: #{convlstm_cell_forward.1} parent=39 // pred_fallthru
          _
        %s607 = smul.u32 %s33, 8
        %s608 = smul.u32 %s607, 24
        %s609 = scalar_lea.vmem [#allocation2], %s608
        %v610 = vld [vmem:[%s609] sm:$0xff]
        %v611 = vld [vmem:[%s609 + $0x8] sm:$0xff]
        %v612 = vld [vmem:[%s609 + $0x18] sm:$0xff]
        %v613 = vld [vmem:[%s609 + $0x20] sm:$0xff]
        %v614 = vld [vmem:[%s609 + $0x30] sm:$0xff]
        %v615 = vld [vmem:[%s609 + $0x38] sm:$0xff]
        %v616 = vld [vmem:[%s609 + $0x48] sm:$0xff]
        %v617 = vld [vmem:[%s609 + $0x50] sm:$0xff]
        %v618 = vld [vmem:[%s609 + $0x60] sm:$0xff]
        %v619 = vld [vmem:[%s609 + $0x68] sm:$0xff]
        %v620 = vld [vmem:[%s609 + $0x78] sm:$0xff]
        %v621 = vld [vmem:[%s609 + $0x80] sm:$0xff]
        %v622 = vld [vmem:[%s609 + $0x90] sm:$0xff]
        %v623 = vld [vmem:[%s609 + $0x98] sm:$0xff]
        %v624 = vld [vmem:[%s609 + $0xa8] sm:$0xff]
        %v625 = vld [vmem:[%s609 + $0xb0] sm:$0xff]
        %v626 = vpack.c.bf16 %v611, %v610
        %v627 = vpack.c.bf16 %v613, %v612
        %v628 = vpack.c.bf16 %v615, %v614
        %v629 = vpack.c.bf16 %v617, %v616
        %v630 = vpack.c.bf16 %v619, %v618
        %v631 = vpack.c.bf16 %v621, %v620
        %v632 = vpack.c.bf16 %v623, %v622
        %v633 = vpack.c.bf16 %v625, %v624
        %vm634 = vcmask 31744
        %635 = vst.msk [vmem:[#allocation4] sm:$0xff] %vm634, %v626
        %636 = vst.msk [vmem:[#allocation4 + $0x18] sm:$0xff] %vm634, %v627
        %637 = vst.msk [vmem:[#allocation4 + $0x30] sm:$0xff] %vm634, %v628
        %638 = vst.msk [vmem:[#allocation4 + $0x48] sm:$0xff] %vm634, %v629
        %639 = vst.msk [vmem:[#allocation4 + $0x60] sm:$0xff] %vm634, %v630
        %640 = vst.msk [vmem:[#allocation4 + $0x78] sm:$0xff] %vm634, %v631
        %641 = vst.msk [vmem:[#allocation4 + $0x90] sm:$0xff] %vm634, %v632
        %642 = vst.msk [vmem:[#allocation4 + $0xa8] sm:$0xff] %vm634, %v633
        %s643 = scalar_lea.vmem [#allocation3], %s608
        %v644 = vld [vmem:[%s643] sm:$0xff]
        %v645 = vld [vmem:[%s643 + $0x8] sm:$0xff]
        %v646 = vld [vmem:[%s643 + $0x18] sm:$0xff]
        %v647 = vld [vmem:[%s643 + $0x20] sm:$0xff]
        %v648 = vld [vmem:[%s643 + $0x30] sm:$0xff]
        %v649 = vld [vmem:[%s643 + $0x38] sm:$0xff]
        %v650 = vld [vmem:[%s643 + $0x48] sm:$0xff]
        %v651 = vld [vmem:[%s643 + $0x50] sm:$0xff]
        %v652 = vld [vmem:[%s643 + $0x60] sm:$0xff]
        %v653 = vld [vmem:[%s643 + $0x68] sm:$0xff]
        %v654 = vld [vmem:[%s643 + $0x78] sm:$0xff]
        %v655 = vld [vmem:[%s643 + $0x80] sm:$0xff]
        %v656 = vld [vmem:[%s643 + $0x90] sm:$0xff]
        %v657 = vld [vmem:[%s643 + $0x98] sm:$0xff]
        %v658 = vld [vmem:[%s643 + $0xa8] sm:$0xff]
        %v659 = vld [vmem:[%s643 + $0xb0] sm:$0xff]
        %v660 = vpack.c.bf16 %v645, %v644
        %v661 = vpack.c.bf16 %v647, %v646
        %v662 = vpack.c.bf16 %v649, %v648
        %v663 = vpack.c.bf16 %v651, %v650
        %v664 = vpack.c.bf16 %v653, %v652
        %v665 = vpack.c.bf16 %v655, %v654
        %v666 = vpack.c.bf16 %v657, %v656
        %v667 = vpack.c.bf16 %v659, %v658
        %676 = vrot.lane.b32.xlu0 %v660, 4
        %v677 = vpop.permute.xlu0 %676
        %678 = vrot.lane.b32.xlu0 %v661, 4
        %v679 = vpop.permute.xlu0 %678
        %680 = vrot.lane.b32.xlu0 %v662, 4
        %v681 = vpop.permute.xlu0 %680
        %682 = vrot.lane.b32.xlu0 %v663, 4
        %v683 = vpop.permute.xlu0 %682
        %684 = vrot.lane.b32.xlu0 %v664, 4
        %v685 = vpop.permute.xlu0 %684
        %686 = vrot.lane.b32.xlu0 %v665, 4
        %v687 = vpop.permute.xlu0 %686
        %688 = vrot.lane.b32.xlu0 %v666, 4
        %v689 = vpop.permute.xlu0 %688
        %690 = vrot.lane.b32.xlu0 %v667, 4
        %v691 = vpop.permute.xlu0 %690
        %vm700 = vcmask 293920
        %701 = vst.msk [vmem:[#allocation4] sm:$0xff] %vm700, %v677
        %702 = vst.msk [vmem:[#allocation4 + $0x18] sm:$0xff] %vm700, %v679
        %703 = vst.msk [vmem:[#allocation4 + $0x30] sm:$0xff] %vm700, %v681
        %704 = vst.msk [vmem:[#allocation4 + $0x48] sm:$0xff] %vm700, %v683
        %705 = vst.msk [vmem:[#allocation4 + $0x60] sm:$0xff] %vm700, %v685
        %706 = vst.msk [vmem:[#allocation4 + $0x78] sm:$0xff] %vm700, %v687
        %707 = vst.msk [vmem:[#allocation4 + $0x90] sm:$0xff] %vm700, %v689
        %708 = vst.msk [vmem:[#allocation4 + $0xa8] sm:$0xff] %vm700, %v691
        %v709 = vld [vmem:[%s609 + $0x1] sm:$0xff]
        %v710 = vld [vmem:[%s609 + $0x9] sm:$0xff]
        %v711 = vld [vmem:[%s609 + $0x19] sm:$0xff]
        %v712 = vld [vmem:[%s609 + $0x21] sm:$0xff]
        %v713 = vld [vmem:[%s609 + $0x31] sm:$0xff]
        %v714 = vld [vmem:[%s609 + $0x39] sm:$0xff]
        %v715 = vld [vmem:[%s609 + $0x49] sm:$0xff]
        %v716 = vld [vmem:[%s609 + $0x51] sm:$0xff]
        %v717 = vld [vmem:[%s609 + $0x61] sm:$0xff]
        %v718 = vld [vmem:[%s609 + $0x69] sm:$0xff]
        %v719 = vld [vmem:[%s609 + $0x79] sm:$0xff]
        %v720 = vld [vmem:[%s609 + $0x81] sm:$0xff]
        %v721 = vld [vmem:[%s609 + $0x91] sm:$0xff]
        %v722 = vld [vmem:[%s609 + $0x99] sm:$0xff]
        %v723 = vld [vmem:[%s609 + $0xa9] sm:$0xff]
        %v724 = vld [vmem:[%s609 + $0xb1] sm:$0xff]
        %v725 = vpack.c.bf16 %v710, %v709
        %v726 = vpack.c.bf16 %v712, %v711
        %v727 = vpack.c.bf16 %v714, %v713
        %v728 = vpack.c.bf16 %v716, %v715
        %v729 = vpack.c.bf16 %v718, %v717
        %v730 = vpack.c.bf16 %v720, %v719
        %v731 = vpack.c.bf16 %v722, %v721
        %v732 = vpack.c.bf16 %v724, %v723
        %741 = vrot.lane.b32.xlu0 %v725, 36
        %v742 = vpop.permute.xlu0 %741
        %743 = vrot.lane.b32.xlu0 %v726, 36
        %v744 = vpop.permute.xlu0 %743
        %745 = vrot.lane.b32.xlu0 %v727, 36
        %v746 = vpop.permute.xlu0 %745
        %747 = vrot.lane.b32.xlu0 %v728, 36
        %v748 = vpop.permute.xlu0 %747
        %749 = vrot.lane.b32.xlu0 %v729, 36
        %v750 = vpop.permute.xlu0 %749
        %751 = vrot.lane.b32.xlu0 %v730, 36
        %v752 = vpop.permute.xlu0 %751
        %753 = vrot.lane.b32.xlu0 %v731, 36
        %v754 = vpop.permute.xlu0 %753
        %755 = vrot.lane.b32.xlu0 %v732, 36
        %v756 = vpop.permute.xlu0 %755
        %vm765 = vcmask 326944
        %766 = vst.msk [vmem:[#allocation4] sm:$0xff] %vm765, %v742
        %767 = vst.msk [vmem:[#allocation4 + $0x18] sm:$0xff] %vm765, %v744
        %768 = vst.msk [vmem:[#allocation4 + $0x30] sm:$0xff] %vm765, %v746
        %769 = vst.msk [vmem:[#allocation4 + $0x48] sm:$0xff] %vm765, %v748
        %770 = vst.msk [vmem:[#allocation4 + $0x60] sm:$0xff] %vm765, %v750
        %771 = vst.msk [vmem:[#allocation4 + $0x78] sm:$0xff] %vm765, %v752
        %772 = vst.msk [vmem:[#allocation4 + $0x90] sm:$0xff] %vm765, %v754
        %773 = vst.msk [vmem:[#allocation4 + $0xa8] sm:$0xff] %vm765, %v756
        %v774 = vld [vmem:[%s643 + $0x1] sm:$0xff]
        %v775 = vld [vmem:[%s643 + $0x9] sm:$0xff]
        %v776 = vld [vmem:[%s643 + $0x19] sm:$0xff]
        %v777 = vld [vmem:[%s643 + $0x21] sm:$0xff]
        %v778 = vld [vmem:[%s643 + $0x31] sm:$0xff]
        %v779 = vld [vmem:[%s643 + $0x39] sm:$0xff]
        %v780 = vld [vmem:[%s643 + $0x49] sm:$0xff]
        %v781 = vld [vmem:[%s643 + $0x51] sm:$0xff]
        %v782 = vld [vmem:[%s643 + $0x61] sm:$0xff]
        %v783 = vld [vmem:[%s643 + $0x69] sm:$0xff]
        %v784 = vld [vmem:[%s643 + $0x79] sm:$0xff]
        %v785 = vld [vmem:[%s643 + $0x81] sm:$0xff]
        %v786 = vld [vmem:[%s643 + $0x91] sm:$0xff]
        %v787 = vld [vmem:[%s643 + $0x99] sm:$0xff]
        %v788 = vld [vmem:[%s643 + $0xa9] sm:$0xff]
        %v789 = vld [vmem:[%s643 + $0xb1] sm:$0xff]
        %v790 = vpack.c.bf16 %v775, %v774
        %v791 = vpack.c.bf16 %v777, %v776
        %v792 = vpack.c.bf16 %v779, %v778
        %v793 = vpack.c.bf16 %v781, %v780
        %v794 = vpack.c.bf16 %v783, %v782
        %v795 = vpack.c.bf16 %v785, %v784
        %v796 = vpack.c.bf16 %v787, %v786
        %v797 = vpack.c.bf16 %v789, %v788
        %806 = vrot.lane.b32.xlu0 %v790, 40
        %v807 = vpop.permute.xlu0 %806
        %808 = vrot.lane.b32.xlu0 %v791, 40
        %v809 = vpop.permute.xlu0 %808
        %810 = vrot.lane.b32.xlu0 %v792, 40
        %v811 = vpop.permute.xlu0 %810
        %812 = vrot.lane.b32.xlu0 %v793, 40
        %v813 = vpop.permute.xlu0 %812
        %814 = vrot.lane.b32.xlu0 %v794, 40
        %v815 = vpop.permute.xlu0 %814
        %816 = vrot.lane.b32.xlu0 %v795, 40
        %v817 = vpop.permute.xlu0 %816
        %818 = vrot.lane.b32.xlu0 %v796, 40
        %v819 = vpop.permute.xlu0 %818
        %820 = vrot.lane.b32.xlu0 %v797, 40
        %v821 = vpop.permute.xlu0 %820
        %vm830 = vcmask 589120
        %831 = vst.msk [vmem:[#allocation4] sm:$0xff] %vm830, %v807
        %832 = vst.msk [vmem:[#allocation4 + $0x18] sm:$0xff] %vm830, %v809
        %833 = vst.msk [vmem:[#allocation4 + $0x30] sm:$0xff] %vm830, %v811
        %834 = vst.msk [vmem:[#allocation4 + $0x48] sm:$0xff] %vm830, %v813
        %835 = vst.msk [vmem:[#allocation4 + $0x60] sm:$0xff] %vm830, %v815
        %836 = vst.msk [vmem:[#allocation4 + $0x78] sm:$0xff] %vm830, %v817
        %837 = vst.msk [vmem:[#allocation4 + $0x90] sm:$0xff] %vm830, %v819
        %838 = vst.msk [vmem:[#allocation4 + $0xa8] sm:$0xff] %vm830, %v821
        %v839 = vld [vmem:[%s609 + $0x2] sm:$0xff]
        %v840 = vld [vmem:[%s609 + $0xa] sm:$0xff]
        %v841 = vld [vmem:[%s609 + $0x1a] sm:$0xff]
        %v842 = vld [vmem:[%s609 + $0x22] sm:$0xff]
        %v843 = vld [vmem:[%s609 + $0x32] sm:$0xff]
        %v844 = vld [vmem:[%s609 + $0x3a] sm:$0xff]
        %v845 = vld [vmem:[%s609 + $0x4a] sm:$0xff]
        %v846 = vld [vmem:[%s609 + $0x52] sm:$0xff]
        %v847 = vld [vmem:[%s609 + $0x62] sm:$0xff]
        %v848 = vld [vmem:[%s609 + $0x6a] sm:$0xff]
        %v849 = vld [vmem:[%s609 + $0x7a] sm:$0xff]
        %v850 = vld [vmem:[%s609 + $0x82] sm:$0xff]
        %v851 = vld [vmem:[%s609 + $0x92] sm:$0xff]
        %v852 = vld [vmem:[%s609 + $0x9a] sm:$0xff]
        %v853 = vld [vmem:[%s609 + $0xaa] sm:$0xff]
        %v854 = vld [vmem:[%s609 + $0xb2] sm:$0xff]
        %v855 = vpack.c.bf16 %v840, %v839
        %v856 = vpack.c.bf16 %v842, %v841
        %v857 = vpack.c.bf16 %v844, %v843
        %v858 = vpack.c.bf16 %v846, %v845
        %v859 = vpack.c.bf16 %v848, %v847
        %v860 = vpack.c.bf16 %v850, %v849
        %v861 = vpack.c.bf16 %v852, %v851
        %v862 = vpack.c.bf16 %v854, %v853
        %871 = vrot.lane.b32.xlu0 %v855, 72
        %v872 = vpop.permute.xlu0 %871
        %873 = vrot.lane.b32.xlu0 %v856, 72
        %v874 = vpop.permute.xlu0 %873
        %875 = vrot.lane.b32.xlu0 %v857, 72
        %v876 = vpop.permute.xlu0 %875
        %877 = vrot.lane.b32.xlu0 %v858, 72
        %v878 = vpop.permute.xlu0 %877
        %879 = vrot.lane.b32.xlu0 %v859, 72
        %v880 = vpop.permute.xlu0 %879
        %881 = vrot.lane.b32.xlu0 %v860, 72
        %v882 = vpop.permute.xlu0 %881
        %883 = vrot.lane.b32.xlu0 %v861, 72
        %v884 = vpop.permute.xlu0 %883
        %885 = vrot.lane.b32.xlu0 %v862, 72
        %v886 = vpop.permute.xlu0 %885
        %vm895 = vcmask 622144
        %896 = vst.msk [vmem:[#allocation4] sm:$0xff] %vm895, %v872
        %897 = vst.msk [vmem:[#allocation4 + $0x18] sm:$0xff] %vm895, %v874
        %898 = vst.msk [vmem:[#allocation4 + $0x30] sm:$0xff] %vm895, %v876
        %899 = vst.msk [vmem:[#allocation4 + $0x48] sm:$0xff] %vm895, %v878
        %900 = vst.msk [vmem:[#allocation4 + $0x60] sm:$0xff] %vm895, %v880
        %901 = vst.msk [vmem:[#allocation4 + $0x78] sm:$0xff] %vm895, %v882
        %902 = vst.msk [vmem:[#allocation4 + $0x90] sm:$0xff] %vm895, %v884
        %903 = vst.msk [vmem:[#allocation4 + $0xa8] sm:$0xff] %vm895, %v886
        %v904 = vld [vmem:[%s643 + $0x2] sm:$0xff]
        %v905 = vld [vmem:[%s643 + $0xa] sm:$0xff]
        %v906 = vld [vmem:[%s643 + $0x1a] sm:$0xff]
        %v907 = vld [vmem:[%s643 + $0x22] sm:$0xff]
        %v908 = vld [vmem:[%s643 + $0x32] sm:$0xff]
        %v909 = vld [vmem:[%s643 + $0x3a] sm:$0xff]
        %v910 = vld [vmem:[%s643 + $0x4a] sm:$0xff]
        %v911 = vld [vmem:[%s643 + $0x52] sm:$0xff]
        %v912 = vld [vmem:[%s643 + $0x62] sm:$0xff]
        %v913 = vld [vmem:[%s643 + $0x6a] sm:$0xff]
        %v914 = vld [vmem:[%s643 + $0x7a] sm:$0xff]
        %v915 = vld [vmem:[%s643 + $0x82] sm:$0xff]
        %v916 = vld [vmem:[%s643 + $0x92] sm:$0xff]
        %v917 = vld [vmem:[%s643 + $0x9a] sm:$0xff]
        %v918 = vld [vmem:[%s643 + $0xaa] sm:$0xff]
        %v919 = vld [vmem:[%s643 + $0xb2] sm:$0xff]
        %v920 = vpack.c.bf16 %v905, %v904
        %v921 = vpack.c.bf16 %v907, %v906
        %v922 = vpack.c.bf16 %v909, %v908
        %v923 = vpack.c.bf16 %v911, %v910
        %v924 = vpack.c.bf16 %v913, %v912
        %v925 = vpack.c.bf16 %v915, %v914
        %v926 = vpack.c.bf16 %v917, %v916
        %v927 = vpack.c.bf16 %v919, %v918
        %936 = vrot.lane.b32.xlu0 %v920, 76
        %v937 = vpop.permute.xlu0 %936
        %938 = vrot.lane.b32.xlu0 %v921, 76
        %v939 = vpop.permute.xlu0 %938
        %940 = vrot.lane.b32.xlu0 %v922, 76
        %v941 = vpop.permute.xlu0 %940
        %942 = vrot.lane.b32.xlu0 %v923, 76
        %v943 = vpop.permute.xlu0 %942
        %944 = vrot.lane.b32.xlu0 %v924, 76
        %v945 = vpop.permute.xlu0 %944
        %946 = vrot.lane.b32.xlu0 %v925, 76
        %v947 = vpop.permute.xlu0 %946
        %948 = vrot.lane.b32.xlu0 %v926, 76
        %v949 = vpop.permute.xlu0 %948
        %950 = vrot.lane.b32.xlu0 %v927, 76
        %v951 = vpop.permute.xlu0 %950
        %vm960 = vcmask 884320
        %961 = vst.msk [vmem:[#allocation4] sm:$0xff] %vm960, %v937
        %962 = vst.msk [vmem:[#allocation4 + $0x18] sm:$0xff] %vm960, %v939
        %963 = vst.msk [vmem:[#allocation4 + $0x30] sm:$0xff] %vm960, %v941
        %964 = vst.msk [vmem:[#allocation4 + $0x48] sm:$0xff] %vm960, %v943
        %965 = vst.msk [vmem:[#allocation4 + $0x60] sm:$0xff] %vm960, %v945
        %966 = vst.msk [vmem:[#allocation4 + $0x78] sm:$0xff] %vm960, %v947
        %967 = vst.msk [vmem:[#allocation4 + $0x90] sm:$0xff] %vm960, %v949
        %968 = vst.msk [vmem:[#allocation4 + $0xa8] sm:$0xff] %vm960, %v951
        %s969 = sadd.s32 %s607, 1
        %s970 = smul.u32 %s969, 24
        %s971 = scalar_lea.vmem [#allocation2], %s970
        %v972 = vld [vmem:[%s971] sm:$0xff]
        %v973 = vld [vmem:[%s971 + $0x8] sm:$0xff]
        %v974 = vld [vmem:[%s971 + $0x18] sm:$0xff]
        %v975 = vld [vmem:[%s971 + $0x20] sm:$0xff]
        %v976 = vld [vmem:[%s971 + $0x30] sm:$0xff]
        %v977 = vld [vmem:[%s971 + $0x38] sm:$0xff]
        %v978 = vld [vmem:[%s971 + $0x48] sm:$0xff]
        %v979 = vld [vmem:[%s971 + $0x50] sm:$0xff]
        %v980 = vld [vmem:[%s971 + $0x60] sm:$0xff]
        %v981 = vld [vmem:[%s971 + $0x68] sm:$0xff]
        %v982 = vld [vmem:[%s971 + $0x78] sm:$0xff]
        %v983 = vld [vmem:[%s971 + $0x80] sm:$0xff]
        %v984 = vld [vmem:[%s971 + $0x90] sm:$0xff]
        %v985 = vld [vmem:[%s971 + $0x98] sm:$0xff]
        %v986 = vld [vmem:[%s971 + $0xa8] sm:$0xff]
        %v987 = vld [vmem:[%s971 + $0xb0] sm:$0xff]
        %v988 = vpack.c.bf16 %v973, %v972
        %v989 = vpack.c.bf16 %v975, %v974
        %v990 = vpack.c.bf16 %v977, %v976
        %v991 = vpack.c.bf16 %v979, %v978
        %v992 = vpack.c.bf16 %v981, %v980
        %v993 = vpack.c.bf16 %v983, %v982
        %v994 = vpack.c.bf16 %v985, %v984
        %v995 = vpack.c.bf16 %v987, %v986
        %1004 = vrot.lane.b32.xlu0 %v988, 108
        %v1005 = vpop.permute.xlu0 %1004
        %1006 = vrot.lane.b32.xlu0 %v989, 108
        %v1007 = vpop.permute.xlu0 %1006
        %1008 = vrot.lane.b32.xlu0 %v990, 108
        %v1009 = vpop.permute.xlu0 %1008
        %1010 = vrot.lane.b32.xlu0 %v991, 108
        %v1011 = vpop.permute.xlu0 %1010
        %1012 = vrot.lane.b32.xlu0 %v992, 108
        %v1013 = vpop.permute.xlu0 %1012
        %1014 = vrot.lane.b32.xlu0 %v993, 108
        %v1015 = vpop.permute.xlu0 %1014
        %1016 = vrot.lane.b32.xlu0 %v994, 108
        %v1017 = vpop.permute.xlu0 %1016
        %1018 = vrot.lane.b32.xlu0 %v995, 108
        %v1019 = vpop.permute.xlu0 %1018
        %vm1028 = vcmask 917344
        %1029 = vst.msk [vmem:[#allocation4] sm:$0xff] %vm1028, %v1005
        %1030 = vst.msk [vmem:[#allocation4 + $0x18] sm:$0xff] %vm1028, %v1007
        %1031 = vst.msk [vmem:[#allocation4 + $0x30] sm:$0xff] %vm1028, %v1009
        %1032 = vst.msk [vmem:[#allocation4 + $0x48] sm:$0xff] %vm1028, %v1011
        %1033 = vst.msk [vmem:[#allocation4 + $0x60] sm:$0xff] %vm1028, %v1013
        %1034 = vst.msk [vmem:[#allocation4 + $0x78] sm:$0xff] %vm1028, %v1015
        %1035 = vst.msk [vmem:[#allocation4 + $0x90] sm:$0xff] %vm1028, %v1017
        %1036 = vst.msk [vmem:[#allocation4 + $0xa8] sm:$0xff] %vm1028, %v1019
        %s1037 = scalar_lea.vmem [#allocation3], %s970
        %v1038 = vld [vmem:[%s1037] sm:$0xff]
        %v1039 = vld [vmem:[%s1037 + $0x8] sm:$0xff]
        %v1040 = vld [vmem:[%s1037 + $0x18] sm:$0xff]
        %v1041 = vld [vmem:[%s1037 + $0x20] sm:$0xff]
        %v1042 = vld [vmem:[%s1037 + $0x30] sm:$0xff]
        %v1043 = vld [vmem:[%s1037 + $0x38] sm:$0xff]
        %v1044 = vld [vmem:[%s1037 + $0x48] sm:$0xff]
        %v1045 = vld [vmem:[%s1037 + $0x50] sm:$0xff]
        %v1046 = vld [vmem:[%s1037 + $0x60] sm:$0xff]
        %v1047 = vld [vmem:[%s1037 + $0x68] sm:$0xff]
        %v1048 = vld [vmem:[%s1037 + $0x78] sm:$0xff]
        %v1049 = vld [vmem:[%s1037 + $0x80] sm:$0xff]
        %v1050 = vld [vmem:[%s1037 + $0x90] sm:$0xff]
        %v1051 = vld [vmem:[%s1037 + $0x98] sm:$0xff]
        %v1052 = vld [vmem:[%s1037 + $0xa8] sm:$0xff]
        %v1053 = vld [vmem:[%s1037 + $0xb0] sm:$0xff]
        %v1054 = vpack.c.bf16 %v1039, %v1038
        %v1055 = vpack.c.bf16 %v1041, %v1040
        %v1056 = vpack.c.bf16 %v1043, %v1042
        %v1057 = vpack.c.bf16 %v1045, %v1044
        %v1058 = vpack.c.bf16 %v1047, %v1046
        %v1059 = vpack.c.bf16 %v1049, %v1048
        %v1060 = vpack.c.bf16 %v1051, %v1050
        %v1061 = vpack.c.bf16 %v1053, %v1052
        %1070 = vrot.lane.b32.xlu0 %v1054, 112
        %v1071 = vpop.permute.xlu0 %1070
        %1072 = vrot.lane.b32.xlu0 %v1055, 112
        %v1073 = vpop.permute.xlu0 %1072
        %1074 = vrot.lane.b32.xlu0 %v1056, 112
        %v1075 = vpop.permute.xlu0 %1074
        %1076 = vrot.lane.b32.xlu0 %v1057, 112
        %v1077 = vpop.permute.xlu0 %1076
        %1078 = vrot.lane.b32.xlu0 %v1058, 112
        %v1079 = vpop.permute.xlu0 %1078
        %1080 = vrot.lane.b32.xlu0 %v1059, 112
        %v1081 = vpop.permute.xlu0 %1080
        %1082 = vrot.lane.b32.xlu0 %v1060, 112
        %v1083 = vpop.permute.xlu0 %1082
        %1084 = vrot.lane.b32.xlu0 %v1061, 112
        %v1085 = vpop.permute.xlu0 %1084
        %vm1094 = vcmask 1048448
        %1095 = vst.msk [vmem:[#allocation4] sm:$0xff] %vm1094, %v1071
        %vm1096 = vcmask 130048
        %1097 = vst.msk [vmem:[#allocation4 + $0x8] sm:$0xff] %vm1096, %v1071
        %1098 = vst.msk [vmem:[#allocation4 + $0x18] sm:$0xff] %vm1094, %v1073
        %1099 = vst.msk [vmem:[#allocation4 + $0x20] sm:$0xff] %vm1096, %v1073
        %1100 = vst.msk [vmem:[#allocation4 + $0x30] sm:$0xff] %vm1094, %v1075
        %1101 = vst.msk [vmem:[#allocation4 + $0x38] sm:$0xff] %vm1096, %v1075
        %1102 = vst.msk [vmem:[#allocation4 + $0x48] sm:$0xff] %vm1094, %v1077
        %1103 = vst.msk [vmem:[#allocation4 + $0x50] sm:$0xff] %vm1096, %v1077
        %1104 = vst.msk [vmem:[#allocation4 + $0x60] sm:$0xff] %vm1094, %v1079
        %1105 = vst.msk [vmem:[#allocation4 + $0x68] sm:$0xff] %vm1096, %v1079
        %1106 = vst.msk [vmem:[#allocation4 + $0x78] sm:$0xff] %vm1094, %v1081
        %1107 = vst.msk [vmem:[#allocation4 + $0x80] sm:$0xff] %vm1096, %v1081
        %1108 = vst.msk [vmem:[#allocation4 + $0x90] sm:$0xff] %vm1094, %v1083
        %1109 = vst.msk [vmem:[#allocation4 + $0x98] sm:$0xff] %vm1096, %v1083
        %1110 = vst.msk [vmem:[#allocation4 + $0xa8] sm:$0xff] %vm1094, %v1085
        %1111 = vst.msk [vmem:[#allocation4 + $0xb0] sm:$0xff] %vm1096, %v1085
        %v1112 = vld [vmem:[%s971 + $0x1] sm:$0xff]
        %v1113 = vld [vmem:[%s971 + $0x9] sm:$0xff]
        %v1114 = vld [vmem:[%s971 + $0x19] sm:$0xff]
        %v1115 = vld [vmem:[%s971 + $0x21] sm:$0xff]
        %v1116 = vld [vmem:[%s971 + $0x31] sm:$0xff]
        %v1117 = vld [vmem:[%s971 + $0x39] sm:$0xff]
        %v1118 = vld [vmem:[%s971 + $0x49] sm:$0xff]
        %v1119 = vld [vmem:[%s971 + $0x51] sm:$0xff]
        %v1120 = vld [vmem:[%s971 + $0x61] sm:$0xff]
        %v1121 = vld [vmem:[%s971 + $0x69] sm:$0xff]
        %v1122 = vld [vmem:[%s971 + $0x79] sm:$0xff]
        %v1123 = vld [vmem:[%s971 + $0x81] sm:$0xff]
        %v1124 = vld [vmem:[%s971 + $0x91] sm:$0xff]
        %v1125 = vld [vmem:[%s971 + $0x99] sm:$0xff]
        %v1126 = vld [vmem:[%s971 + $0xa9] sm:$0xff]
        %v1127 = vld [vmem:[%s971 + $0xb1] sm:$0xff]
        %v1128 = vpack.c.bf16 %v1113, %v1112
        %v1129 = vpack.c.bf16 %v1115, %v1114
        %v1130 = vpack.c.bf16 %v1117, %v1116
        %v1131 = vpack.c.bf16 %v1119, %v1118
        %v1132 = vpack.c.bf16 %v1121, %v1120
        %v1133 = vpack.c.bf16 %v1123, %v1122
        %v1134 = vpack.c.bf16 %v1125, %v1124
        %v1135 = vpack.c.bf16 %v1127, %v1126
        %1144 = vrot.lane.b32.xlu0 %v1128, 16
        %v1145 = vpop.permute.xlu0 %1144
        %1146 = vrot.lane.b32.xlu0 %v1129, 16
        %v1147 = vpop.permute.xlu0 %1146
        %1148 = vrot.lane.b32.xlu0 %v1130, 16
        %v1149 = vpop.permute.xlu0 %1148
        %1150 = vrot.lane.b32.xlu0 %v1131, 16
        %v1151 = vpop.permute.xlu0 %1150
        %1152 = vrot.lane.b32.xlu0 %v1132, 16
        %v1153 = vpop.permute.xlu0 %1152
        %1154 = vrot.lane.b32.xlu0 %v1133, 16
        %v1155 = vpop.permute.xlu0 %1154
        %1156 = vrot.lane.b32.xlu0 %v1134, 16
        %v1157 = vpop.permute.xlu0 %1156
        %1158 = vrot.lane.b32.xlu0 %v1135, 16
        %v1159 = vpop.permute.xlu0 %1158
        %vm1168 = vcmask 162944
        %1169 = vst.msk [vmem:[#allocation4 + $0x8] sm:$0xff] %vm1168, %v1145
        %1170 = vst.msk [vmem:[#allocation4 + $0x20] sm:$0xff] %vm1168, %v1147
        %1171 = vst.msk [vmem:[#allocation4 + $0x38] sm:$0xff] %vm1168, %v1149
        %1172 = vst.msk [vmem:[#allocation4 + $0x50] sm:$0xff] %vm1168, %v1151
        %1173 = vst.msk [vmem:[#allocation4 + $0x68] sm:$0xff] %vm1168, %v1153
        %1174 = vst.msk [vmem:[#allocation4 + $0x80] sm:$0xff] %vm1168, %v1155
        %1175 = vst.msk [vmem:[#allocation4 + $0x98] sm:$0xff] %vm1168, %v1157
        %1176 = vst.msk [vmem:[#allocation4 + $0xb0] sm:$0xff] %vm1168, %v1159
        %v1177 = vld [vmem:[%s1037 + $0x1] sm:$0xff]
        %v1178 = vld [vmem:[%s1037 + $0x9] sm:$0xff]
        %v1179 = vld [vmem:[%s1037 + $0x19] sm:$0xff]
        %v1180 = vld [vmem:[%s1037 + $0x21] sm:$0xff]
        %v1181 = vld [vmem:[%s1037 + $0x31] sm:$0xff]
        %v1182 = vld [vmem:[%s1037 + $0x39] sm:$0xff]
        %v1183 = vld [vmem:[%s1037 + $0x49] sm:$0xff]
        %v1184 = vld [vmem:[%s1037 + $0x51] sm:$0xff]
        %v1185 = vld [vmem:[%s1037 + $0x61] sm:$0xff]
        %v1186 = vld [vmem:[%s1037 + $0x69] sm:$0xff]
        %v1187 = vld [vmem:[%s1037 + $0x79] sm:$0xff]
        %v1188 = vld [vmem:[%s1037 + $0x81] sm:$0xff]
        %v1189 = vld [vmem:[%s1037 + $0x91] sm:$0xff]
        %v1190 = vld [vmem:[%s1037 + $0x99] sm:$0xff]
        %v1191 = vld [vmem:[%s1037 + $0xa9] sm:$0xff]
        %v1192 = vld [vmem:[%s1037 + $0xb1] sm:$0xff]
        %v1193 = vpack.c.bf16 %v1178, %v1177
        %v1194 = vpack.c.bf16 %v1180, %v1179
        %v1195 = vpack.c.bf16 %v1182, %v1181
        %v1196 = vpack.c.bf16 %v1184, %v1183
        %v1197 = vpack.c.bf16 %v1186, %v1185
        %v1198 = vpack.c.bf16 %v1188, %v1187
        %v1199 = vpack.c.bf16 %v1190, %v1189
        %v1200 = vpack.c.bf16 %v1192, %v1191
        %1209 = vrot.lane.b32.xlu0 %v1193, 20
        %v1210 = vpop.permute.xlu0 %1209
        %1211 = vrot.lane.b32.xlu0 %v1194, 20
        %v1212 = vpop.permute.xlu0 %1211
        %1213 = vrot.lane.b32.xlu0 %v1195, 20
        %v1214 = vpop.permute.xlu0 %1213
        %1215 = vrot.lane.b32.xlu0 %v1196, 20
        %v1216 = vpop.permute.xlu0 %1215
        %1217 = vrot.lane.b32.xlu0 %v1197, 20
        %v1218 = vpop.permute.xlu0 %1217
        %1219 = vrot.lane.b32.xlu0 %v1198, 20
        %v1220 = vpop.permute.xlu0 %1219
        %1221 = vrot.lane.b32.xlu0 %v1199, 20
        %v1222 = vpop.permute.xlu0 %1221
        %1223 = vrot.lane.b32.xlu0 %v1200, 20
        %v1224 = vpop.permute.xlu0 %1223
        %vm1233 = vcmask 425120
        %1234 = vst.msk [vmem:[#allocation4 + $0x8] sm:$0xff] %vm1233, %v1210
        %1235 = vst.msk [vmem:[#allocation4 + $0x20] sm:$0xff] %vm1233, %v1212
        %1236 = vst.msk [vmem:[#allocation4 + $0x38] sm:$0xff] %vm1233, %v1214
        %1237 = vst.msk [vmem:[#allocation4 + $0x50] sm:$0xff] %vm1233, %v1216
        %1238 = vst.msk [vmem:[#allocation4 + $0x68] sm:$0xff] %vm1233, %v1218
        %1239 = vst.msk [vmem:[#allocation4 + $0x80] sm:$0xff] %vm1233, %v1220
        %1240 = vst.msk [vmem:[#allocation4 + $0x98] sm:$0xff] %vm1233, %v1222
        %1241 = vst.msk [vmem:[#allocation4 + $0xb0] sm:$0xff] %vm1233, %v1224
        %v1242 = vld [vmem:[%s971 + $0x2] sm:$0xff]
        %v1243 = vld [vmem:[%s971 + $0xa] sm:$0xff]
        %v1244 = vld [vmem:[%s971 + $0x1a] sm:$0xff]
        %v1245 = vld [vmem:[%s971 + $0x22] sm:$0xff]
        %v1246 = vld [vmem:[%s971 + $0x32] sm:$0xff]
        %v1247 = vld [vmem:[%s971 + $0x3a] sm:$0xff]
        %v1248 = vld [vmem:[%s971 + $0x4a] sm:$0xff]
        %v1249 = vld [vmem:[%s971 + $0x52] sm:$0xff]
        %v1250 = vld [vmem:[%s971 + $0x62] sm:$0xff]
        %v1251 = vld [vmem:[%s971 + $0x6a] sm:$0xff]
        %v1252 = vld [vmem:[%s971 + $0x7a] sm:$0xff]
        %v1253 = vld [vmem:[%s971 + $0x82] sm:$0xff]
        %v1254 = vld [vmem:[%s971 + $0x92] sm:$0xff]
        %v1255 = vld [vmem:[%s971 + $0x9a] sm:$0xff]
        %v1256 = vld [vmem:[%s971 + $0xaa] sm:$0xff]
        %v1257 = vld [vmem:[%s971 + $0xb2] sm:$0xff]
        %v1258 = vpack.c.bf16 %v1243, %v1242
        %v1259 = vpack.c.bf16 %v1245, %v1244
        %v1260 = vpack.c.bf16 %v1247, %v1246
        %v1261 = vpack.c.bf16 %v1249, %v1248
        %v1262 = vpack.c.bf16 %v1251, %v1250
        %v1263 = vpack.c.bf16 %v1253, %v1252
        %v1264 = vpack.c.bf16 %v1255, %v1254
        %v1265 = vpack.c.bf16 %v1257, %v1256
        %1274 = vrot.lane.b32.xlu0 %v1258, 52
        %v1275 = vpop.permute.xlu0 %1274
        %1276 = vrot.lane.b32.xlu0 %v1259, 52
        %v1277 = vpop.permute.xlu0 %1276
        %1278 = vrot.lane.b32.xlu0 %v1260, 52
        %v1279 = vpop.permute.xlu0 %1278
        %1280 = vrot.lane.b32.xlu0 %v1261, 52
        %v1281 = vpop.permute.xlu0 %1280
        %1282 = vrot.lane.b32.xlu0 %v1262, 52
        %v1283 = vpop.permute.xlu0 %1282
        %1284 = vrot.lane.b32.xlu0 %v1263, 52
        %v1285 = vpop.permute.xlu0 %1284
        %1286 = vrot.lane.b32.xlu0 %v1264, 52
        %v1287 = vpop.permute.xlu0 %1286
        %1288 = vrot.lane.b32.xlu0 %v1265, 52
        %v1289 = vpop.permute.xlu0 %1288
        %vm1298 = vcmask 458144
        %1299 = vst.msk [vmem:[#allocation4 + $0x8] sm:$0xff] %vm1298, %v1275
        %1300 = vst.msk [vmem:[#allocation4 + $0x20] sm:$0xff] %vm1298, %v1277
        %1301 = vst.msk [vmem:[#allocation4 + $0x38] sm:$0xff] %vm1298, %v1279
        %1302 = vst.msk [vmem:[#allocation4 + $0x50] sm:$0xff] %vm1298, %v1281
        %1303 = vst.msk [vmem:[#allocation4 + $0x68] sm:$0xff] %vm1298, %v1283
        %1304 = vst.msk [vmem:[#allocation4 + $0x80] sm:$0xff] %vm1298, %v1285
        %1305 = vst.msk [vmem:[#allocation4 + $0x98] sm:$0xff] %vm1298, %v1287
        %1306 = vst.msk [vmem:[#allocation4 + $0xb0] sm:$0xff] %vm1298, %v1289
        %v1307 = vld [vmem:[%s1037 + $0x2] sm:$0xff]
        %v1308 = vld [vmem:[%s1037 + $0xa] sm:$0xff]
        %v1309 = vld [vmem:[%s1037 + $0x1a] sm:$0xff]
        %v1310 = vld [vmem:[%s1037 + $0x22] sm:$0xff]
        %v1311 = vld [vmem:[%s1037 + $0x32] sm:$0xff]
        %v1312 = vld [vmem:[%s1037 + $0x3a] sm:$0xff]
        %v1313 = vld [vmem:[%s1037 + $0x4a] sm:$0xff]
        %v1314 = vld [vmem:[%s1037 + $0x52] sm:$0xff]
        %v1315 = vld [vmem:[%s1037 + $0x62] sm:$0xff]
        %v1316 = vld [vmem:[%s1037 + $0x6a] sm:$0xff]
        %v1317 = vld [vmem:[%s1037 + $0x7a] sm:$0xff]
        %v1318 = vld [vmem:[%s1037 + $0x82] sm:$0xff]
        %v1319 = vld [vmem:[%s1037 + $0x92] sm:$0xff]
        %v1320 = vld [vmem:[%s1037 + $0x9a] sm:$0xff]
        %v1321 = vld [vmem:[%s1037 + $0xaa] sm:$0xff]
        %v1322 = vld [vmem:[%s1037 + $0xb2] sm:$0xff]
        %v1323 = vpack.c.bf16 %v1308, %v1307
        %v1324 = vpack.c.bf16 %v1310, %v1309
        %v1325 = vpack.c.bf16 %v1312, %v1311
        %v1326 = vpack.c.bf16 %v1314, %v1313
        %v1327 = vpack.c.bf16 %v1316, %v1315
        %v1328 = vpack.c.bf16 %v1318, %v1317
        %v1329 = vpack.c.bf16 %v1320, %v1319
        %v1330 = vpack.c.bf16 %v1322, %v1321
        %1339 = vrot.lane.b32.xlu0 %v1323, 56
        %v1340 = vpop.permute.xlu0 %1339
        %1341 = vrot.lane.b32.xlu0 %v1324, 56
        %v1342 = vpop.permute.xlu0 %1341
        %1343 = vrot.lane.b32.xlu0 %v1325, 56
        %v1344 = vpop.permute.xlu0 %1343
        %1345 = vrot.lane.b32.xlu0 %v1326, 56
        %v1346 = vpop.permute.xlu0 %1345
        %1347 = vrot.lane.b32.xlu0 %v1327, 56
        %v1348 = vpop.permute.xlu0 %1347
        %1349 = vrot.lane.b32.xlu0 %v1328, 56
        %v1350 = vpop.permute.xlu0 %1349
        %1351 = vrot.lane.b32.xlu0 %v1329, 56
        %v1352 = vpop.permute.xlu0 %1351
        %1353 = vrot.lane.b32.xlu0 %v1330, 56
        %v1354 = vpop.permute.xlu0 %1353
        %vm1363 = vcmask 720320
        %1364 = vst.msk [vmem:[#allocation4 + $0x8] sm:$0xff] %vm1363, %v1340
        %1365 = vst.msk [vmem:[#allocation4 + $0x20] sm:$0xff] %vm1363, %v1342
        %1366 = vst.msk [vmem:[#allocation4 + $0x38] sm:$0xff] %vm1363, %v1344
        %1367 = vst.msk [vmem:[#allocation4 + $0x50] sm:$0xff] %vm1363, %v1346
        %1368 = vst.msk [vmem:[#allocation4 + $0x68] sm:$0xff] %vm1363, %v1348
        %1369 = vst.msk [vmem:[#allocation4 + $0x80] sm:$0xff] %vm1363, %v1350
        %1370 = vst.msk [vmem:[#allocation4 + $0x98] sm:$0xff] %vm1363, %v1352
        %1371 = vst.msk [vmem:[#allocation4 + $0xb0] sm:$0xff] %vm1363, %v1354
        %s1372 = sadd.s32 %s607, 2
        %s1373 = smul.u32 %s1372, 24
        %s1374 = scalar_lea.vmem [#allocation2], %s1373
        %v1375 = vld [vmem:[%s1374] sm:$0xff]
        %v1376 = vld [vmem:[%s1374 + $0x8] sm:$0xff]
        %v1377 = vld [vmem:[%s1374 + $0x18] sm:$0xff]
        %v1378 = vld [vmem:[%s1374 + $0x20] sm:$0xff]
        %v1379 = vld [vmem:[%s1374 + $0x30] sm:$0xff]
        %v1380 = vld [vmem:[%s1374 + $0x38] sm:$0xff]
        %v1381 = vld [vmem:[%s1374 + $0x48] sm:$0xff]
        %v1382 = vld [vmem:[%s1374 + $0x50] sm:$0xff]
        %v1383 = vld [vmem:[%s1374 + $0x60] sm:$0xff]
        %v1384 = vld [vmem:[%s1374 + $0x68] sm:$0xff]
        %v1385 = vld [vmem:[%s1374 + $0x78] sm:$0xff]
        %v1386 = vld [vmem:[%s1374 + $0x80] sm:$0xff]
        %v1387 = vld [vmem:[%s1374 + $0x90] sm:$0xff]
        %v1388 = vld [vmem:[%s1374 + $0x98] sm:$0xff]
        %v1389 = vld [vmem:[%s1374 + $0xa8] sm:$0xff]
        %v1390 = vld [vmem:[%s1374 + $0xb0] sm:$0xff]
        %v1391 = vpack.c.bf16 %v1376, %v1375
        %v1392 = vpack.c.bf16 %v1378, %v1377
        %v1393 = vpack.c.bf16 %v1380, %v1379
        %v1394 = vpack.c.bf16 %v1382, %v1381
        %v1395 = vpack.c.bf16 %v1384, %v1383
        %v1396 = vpack.c.bf16 %v1386, %v1385
        %v1397 = vpack.c.bf16 %v1388, %v1387
        %v1398 = vpack.c.bf16 %v1390, %v1389
        %1407 = vrot.lane.b32.xlu0 %v1391, 88
        %v1408 = vpop.permute.xlu0 %1407
        %1409 = vrot.lane.b32.xlu0 %v1392, 88
        %v1410 = vpop.permute.xlu0 %1409
        %1411 = vrot.lane.b32.xlu0 %v1393, 88
        %v1412 = vpop.permute.xlu0 %1411
        %1413 = vrot.lane.b32.xlu0 %v1394, 88
        %v1414 = vpop.permute.xlu0 %1413
        %1415 = vrot.lane.b32.xlu0 %v1395, 88
        %v1416 = vpop.permute.xlu0 %1415
        %1417 = vrot.lane.b32.xlu0 %v1396, 88
        %v1418 = vpop.permute.xlu0 %1417
        %1419 = vrot.lane.b32.xlu0 %v1397, 88
        %v1420 = vpop.permute.xlu0 %1419
        %1421 = vrot.lane.b32.xlu0 %v1398, 88
        %v1422 = vpop.permute.xlu0 %1421
        %vm1431 = vcmask 753344
        %1432 = vst.msk [vmem:[#allocation4 + $0x8] sm:$0xff] %vm1431, %v1408
        %1433 = vst.msk [vmem:[#allocation4 + $0x20] sm:$0xff] %vm1431, %v1410
        %1434 = vst.msk [vmem:[#allocation4 + $0x38] sm:$0xff] %vm1431, %v1412
        %1435 = vst.msk [vmem:[#allocation4 + $0x50] sm:$0xff] %vm1431, %v1414
        %1436 = vst.msk [vmem:[#allocation4 + $0x68] sm:$0xff] %vm1431, %v1416
        %1437 = vst.msk [vmem:[#allocation4 + $0x80] sm:$0xff] %vm1431, %v1418
        %1438 = vst.msk [vmem:[#allocation4 + $0x98] sm:$0xff] %vm1431, %v1420
        %1439 = vst.msk [vmem:[#allocation4 + $0xb0] sm:$0xff] %vm1431, %v1422
        %s1440 = scalar_lea.vmem [#allocation3], %s1373
        %v1441 = vld [vmem:[%s1440] sm:$0xff]
        %v1442 = vld [vmem:[%s1440 + $0x8] sm:$0xff]
        %v1443 = vld [vmem:[%s1440 + $0x18] sm:$0xff]
        %v1444 = vld [vmem:[%s1440 + $0x20] sm:$0xff]
        %v1445 = vld [vmem:[%s1440 + $0x30] sm:$0xff]
        %v1446 = vld [vmem:[%s1440 + $0x38] sm:$0xff]
        %v1447 = vld [vmem:[%s1440 + $0x48] sm:$0xff]
        %v1448 = vld [vmem:[%s1440 + $0x50] sm:$0xff]
        %v1449 = vld [vmem:[%s1440 + $0x60] sm:$0xff]
        %v1450 = vld [vmem:[%s1440 + $0x68] sm:$0xff]
        %v1451 = vld [vmem:[%s1440 + $0x78] sm:$0xff]
        %v1452 = vld [vmem:[%s1440 + $0x80] sm:$0xff]
        %v1453 = vld [vmem:[%s1440 + $0x90] sm:$0xff]
        %v1454 = vld [vmem:[%s1440 + $0x98] sm:$0xff]
        %v1455 = vld [vmem:[%s1440 + $0xa8] sm:$0xff]
        %v1456 = vld [vmem:[%s1440 + $0xb0] sm:$0xff]
        %v1457 = vpack.c.bf16 %v1442, %v1441
        %v1458 = vpack.c.bf16 %v1444, %v1443
        %v1459 = vpack.c.bf16 %v1446, %v1445
        %v1460 = vpack.c.bf16 %v1448, %v1447
        %v1461 = vpack.c.bf16 %v1450, %v1449
        %v1462 = vpack.c.bf16 %v1452, %v1451
        %v1463 = vpack.c.bf16 %v1454, %v1453
        %v1464 = vpack.c.bf16 %v1456, %v1455
        %1473 = vrot.lane.b32.xlu0 %v1457, 92
        %v1474 = vpop.permute.xlu0 %1473
        %1475 = vrot.lane.b32.xlu0 %v1458, 92
        %v1476 = vpop.permute.xlu0 %1475
        %1477 = vrot.lane.b32.xlu0 %v1459, 92
        %v1478 = vpop.permute.xlu0 %1477
        %1479 = vrot.lane.b32.xlu0 %v1460, 92
        %v1480 = vpop.permute.xlu0 %1479
        %1481 = vrot.lane.b32.xlu0 %v1461, 92
        %v1482 = vpop.permute.xlu0 %1481
        %1483 = vrot.lane.b32.xlu0 %v1462, 92
        %v1484 = vpop.permute.xlu0 %1483
        %1485 = vrot.lane.b32.xlu0 %v1463, 92
        %v1486 = vpop.permute.xlu0 %1485
        %1487 = vrot.lane.b32.xlu0 %v1464, 92
        %v1488 = vpop.permute.xlu0 %1487
        %vm1497 = vcmask 1015520
        %1498 = vst.msk [vmem:[#allocation4 + $0x8] sm:$0xff] %vm1497, %v1474
        %1499 = vst.msk [vmem:[#allocation4 + $0x20] sm:$0xff] %vm1497, %v1476
        %1500 = vst.msk [vmem:[#allocation4 + $0x38] sm:$0xff] %vm1497, %v1478
        %1501 = vst.msk [vmem:[#allocation4 + $0x50] sm:$0xff] %vm1497, %v1480
        %1502 = vst.msk [vmem:[#allocation4 + $0x68] sm:$0xff] %vm1497, %v1482
        %1503 = vst.msk [vmem:[#allocation4 + $0x80] sm:$0xff] %vm1497, %v1484
        %1504 = vst.msk [vmem:[#allocation4 + $0x98] sm:$0xff] %vm1497, %v1486
        %1505 = vst.msk [vmem:[#allocation4 + $0xb0] sm:$0xff] %vm1497, %v1488
        %v1506 = vld [vmem:[%s1374 + $0x1] sm:$0xff]
        %v1507 = vld [vmem:[%s1374 + $0x9] sm:$0xff]
        %v1508 = vld [vmem:[%s1374 + $0x19] sm:$0xff]
        %v1509 = vld [vmem:[%s1374 + $0x21] sm:$0xff]
        %v1510 = vld [vmem:[%s1374 + $0x31] sm:$0xff]
        %v1511 = vld [vmem:[%s1374 + $0x39] sm:$0xff]
        %v1512 = vld [vmem:[%s1374 + $0x49] sm:$0xff]
        %v1513 = vld [vmem:[%s1374 + $0x51] sm:$0xff]
        %v1514 = vld [vmem:[%s1374 + $0x61] sm:$0xff]
        %v1515 = vld [vmem:[%s1374 + $0x69] sm:$0xff]
        %v1516 = vld [vmem:[%s1374 + $0x79] sm:$0xff]
        %v1517 = vld [vmem:[%s1374 + $0x81] sm:$0xff]
        %v1518 = vld [vmem:[%s1374 + $0x91] sm:$0xff]
        %v1519 = vld [vmem:[%s1374 + $0x99] sm:$0xff]
        %v1520 = vld [vmem:[%s1374 + $0xa9] sm:$0xff]
        %v1521 = vld [vmem:[%s1374 + $0xb1] sm:$0xff]
        %v1522 = vpack.c.bf16 %v1507, %v1506
        %v1523 = vpack.c.bf16 %v1509, %v1508
        %v1524 = vpack.c.bf16 %v1511, %v1510
        %v1525 = vpack.c.bf16 %v1513, %v1512
        %v1526 = vpack.c.bf16 %v1515, %v1514
        %v1527 = vpack.c.bf16 %v1517, %v1516
        %v1528 = vpack.c.bf16 %v1519, %v1518
        %v1529 = vpack.c.bf16 %v1521, %v1520
        %1538 = vrot.lane.b32.xlu0 %v1522, 124
        %v1539 = vpop.permute.xlu0 %1538
        %1540 = vrot.lane.b32.xlu0 %v1523, 124
        %v1541 = vpop.permute.xlu0 %1540
        %1542 = vrot.lane.b32.xlu0 %v1524, 124
        %v1543 = vpop.permute.xlu0 %1542
        %1544 = vrot.lane.b32.xlu0 %v1525, 124
        %v1545 = vpop.permute.xlu0 %1544
        %1546 = vrot.lane.b32.xlu0 %v1526, 124
        %v1547 = vpop.permute.xlu0 %1546
        %1548 = vrot.lane.b32.xlu0 %v1527, 124
        %v1549 = vpop.permute.xlu0 %1548
        %1550 = vrot.lane.b32.xlu0 %v1528, 124
        %v1551 = vpop.permute.xlu0 %1550
        %1552 = vrot.lane.b32.xlu0 %v1529, 124
        %v1553 = vpop.permute.xlu0 %1552
        %vm1562 = vcmask 1048544
        %1563 = vst.msk [vmem:[#allocation4 + $0x8] sm:$0xff] %vm1562, %v1539
        %1564 = vst.msk [vmem:[#allocation4 + $0x20] sm:$0xff] %vm1562, %v1541
        %1565 = vst.msk [vmem:[#allocation4 + $0x38] sm:$0xff] %vm1562, %v1543
        %1566 = vst.msk [vmem:[#allocation4 + $0x50] sm:$0xff] %vm1562, %v1545
        %1567 = vst.msk [vmem:[#allocation4 + $0x68] sm:$0xff] %vm1562, %v1547
        %1568 = vst.msk [vmem:[#allocation4 + $0x80] sm:$0xff] %vm1562, %v1549
        %1569 = vst.msk [vmem:[#allocation4 + $0x98] sm:$0xff] %vm1562, %v1551
        %1570 = vst.msk [vmem:[#allocation4 + $0xb0] sm:$0xff] %vm1562, %v1553
        %v1571 = vld [vmem:[%s1440 + $0x1] sm:$0xff]
        %v1572 = vld [vmem:[%s1440 + $0x9] sm:$0xff]
        %v1573 = vld [vmem:[%s1440 + $0x19] sm:$0xff]
        %v1574 = vld [vmem:[%s1440 + $0x21] sm:$0xff]
        %v1575 = vld [vmem:[%s1440 + $0x31] sm:$0xff]
        %v1576 = vld [vmem:[%s1440 + $0x39] sm:$0xff]
        %v1577 = vld [vmem:[%s1440 + $0x49] sm:$0xff]
        %v1578 = vld [vmem:[%s1440 + $0x51] sm:$0xff]
        %v1579 = vld [vmem:[%s1440 + $0x61] sm:$0xff]
        %v1580 = vld [vmem:[%s1440 + $0x69] sm:$0xff]
        %v1581 = vld [vmem:[%s1440 + $0x79] sm:$0xff]
        %v1582 = vld [vmem:[%s1440 + $0x81] sm:$0xff]
        %v1583 = vld [vmem:[%s1440 + $0x91] sm:$0xff]
        %v1584 = vld [vmem:[%s1440 + $0x99] sm:$0xff]
        %v1585 = vld [vmem:[%s1440 + $0xa9] sm:$0xff]
        %v1586 = vld [vmem:[%s1440 + $0xb1] sm:$0xff]
        %v1587 = vpack.c.bf16 %v1572, %v1571
        %v1588 = vpack.c.bf16 %v1574, %v1573
        %v1589 = vpack.c.bf16 %v1576, %v1575
        %v1590 = vpack.c.bf16 %v1578, %v1577
        %v1591 = vpack.c.bf16 %v1580, %v1579
        %v1592 = vpack.c.bf16 %v1582, %v1581
        %v1593 = vpack.c.bf16 %v1584, %v1583
        %v1594 = vpack.c.bf16 %v1586, %v1585
        %vm1595 = vcmask 261120
        %1596 = vst.msk [vmem:[#allocation4 + $0x10] sm:$0xff] %vm1595, %v1587
        %1597 = vst.msk [vmem:[#allocation4 + $0x28] sm:$0xff] %vm1595, %v1588
        %1598 = vst.msk [vmem:[#allocation4 + $0x40] sm:$0xff] %vm1595, %v1589
        %1599 = vst.msk [vmem:[#allocation4 + $0x58] sm:$0xff] %vm1595, %v1590
        %1600 = vst.msk [vmem:[#allocation4 + $0x70] sm:$0xff] %vm1595, %v1591
        %1601 = vst.msk [vmem:[#allocation4 + $0x88] sm:$0xff] %vm1595, %v1592
        %1602 = vst.msk [vmem:[#allocation4 + $0xa0] sm:$0xff] %vm1595, %v1593
        %1603 = vst.msk [vmem:[#allocation4 + $0xb8] sm:$0xff] %vm1595, %v1594
        %v1604 = vld [vmem:[%s1374 + $0x2] sm:$0xff]
        %v1605 = vld [vmem:[%s1374 + $0xa] sm:$0xff]
        %v1606 = vld [vmem:[%s1374 + $0x1a] sm:$0xff]
        %v1607 = vld [vmem:[%s1374 + $0x22] sm:$0xff]
        %v1608 = vld [vmem:[%s1374 + $0x32] sm:$0xff]
        %v1609 = vld [vmem:[%s1374 + $0x3a] sm:$0xff]
        %v1610 = vld [vmem:[%s1374 + $0x4a] sm:$0xff]
        %v1611 = vld [vmem:[%s1374 + $0x52] sm:$0xff]
        %v1612 = vld [vmem:[%s1374 + $0x62] sm:$0xff]
        %v1613 = vld [vmem:[%s1374 + $0x6a] sm:$0xff]
        %v1614 = vld [vmem:[%s1374 + $0x7a] sm:$0xff]
        %v1615 = vld [vmem:[%s1374 + $0x82] sm:$0xff]
        %v1616 = vld [vmem:[%s1374 + $0x92] sm:$0xff]
        %v1617 = vld [vmem:[%s1374 + $0x9a] sm:$0xff]
        %v1618 = vld [vmem:[%s1374 + $0xaa] sm:$0xff]
        %v1619 = vld [vmem:[%s1374 + $0xb2] sm:$0xff]
        %v1620 = vpack.c.bf16 %v1605, %v1604
        %v1621 = vpack.c.bf16 %v1607, %v1606
        %v1622 = vpack.c.bf16 %v1609, %v1608
        %v1623 = vpack.c.bf16 %v1611, %v1610
        %v1624 = vpack.c.bf16 %v1613, %v1612
        %v1625 = vpack.c.bf16 %v1615, %v1614
        %v1626 = vpack.c.bf16 %v1617, %v1616
        %v1627 = vpack.c.bf16 %v1619, %v1618
        %1636 = vrot.lane.b32.xlu0 %v1620, 32
        %v1637 = vpop.permute.xlu0 %1636
        %1638 = vrot.lane.b32.xlu0 %v1621, 32
        %v1639 = vpop.permute.xlu0 %1638
        %1640 = vrot.lane.b32.xlu0 %v1622, 32
        %v1641 = vpop.permute.xlu0 %1640
        %1642 = vrot.lane.b32.xlu0 %v1623, 32
        %v1643 = vpop.permute.xlu0 %1642
        %1644 = vrot.lane.b32.xlu0 %v1624, 32
        %v1645 = vpop.permute.xlu0 %1644
        %1646 = vrot.lane.b32.xlu0 %v1625, 32
        %v1647 = vpop.permute.xlu0 %1646
        %1648 = vrot.lane.b32.xlu0 %v1626, 32
        %v1649 = vpop.permute.xlu0 %1648
        %1650 = vrot.lane.b32.xlu0 %v1627, 32
        %v1651 = vpop.permute.xlu0 %1650
        %vm1660 = vcmask 294144
        %1661 = vst.msk [vmem:[#allocation4 + $0x10] sm:$0xff] %vm1660, %v1637
        %1662 = vst.msk [vmem:[#allocation4 + $0x28] sm:$0xff] %vm1660, %v1639
        %1663 = vst.msk [vmem:[#allocation4 + $0x40] sm:$0xff] %vm1660, %v1641
        %1664 = vst.msk [vmem:[#allocation4 + $0x58] sm:$0xff] %vm1660, %v1643
        %1665 = vst.msk [vmem:[#allocation4 + $0x70] sm:$0xff] %vm1660, %v1645
        %1666 = vst.msk [vmem:[#allocation4 + $0x88] sm:$0xff] %vm1660, %v1647
        %1667 = vst.msk [vmem:[#allocation4 + $0xa0] sm:$0xff] %vm1660, %v1649
        %1668 = vst.msk [vmem:[#allocation4 + $0xb8] sm:$0xff] %vm1660, %v1651
        %v1669 = vld [vmem:[%s1440 + $0x2] sm:$0xff]
        %v1670 = vld [vmem:[%s1440 + $0xa] sm:$0xff]
        %v1671 = vld [vmem:[%s1440 + $0x1a] sm:$0xff]
        %v1672 = vld [vmem:[%s1440 + $0x22] sm:$0xff]
        %v1673 = vld [vmem:[%s1440 + $0x32] sm:$0xff]
        %v1674 = vld [vmem:[%s1440 + $0x3a] sm:$0xff]
        %v1675 = vld [vmem:[%s1440 + $0x4a] sm:$0xff]
        %v1676 = vld [vmem:[%s1440 + $0x52] sm:$0xff]
        %v1677 = vld [vmem:[%s1440 + $0x62] sm:$0xff]
        %v1678 = vld [vmem:[%s1440 + $0x6a] sm:$0xff]
        %v1679 = vld [vmem:[%s1440 + $0x7a] sm:$0xff]
        %v1680 = vld [vmem:[%s1440 + $0x82] sm:$0xff]
        %v1681 = vld [vmem:[%s1440 + $0x92] sm:$0xff]
        %v1682 = vld [vmem:[%s1440 + $0x9a] sm:$0xff]
        %v1683 = vld [vmem:[%s1440 + $0xaa] sm:$0xff]
        %v1684 = vld [vmem:[%s1440 + $0xb2] sm:$0xff]
        %v1685 = vpack.c.bf16 %v1670, %v1669
        %v1686 = vpack.c.bf16 %v1672, %v1671
        %v1687 = vpack.c.bf16 %v1674, %v1673
        %v1688 = vpack.c.bf16 %v1676, %v1675
        %v1689 = vpack.c.bf16 %v1678, %v1677
        %v1690 = vpack.c.bf16 %v1680, %v1679
        %v1691 = vpack.c.bf16 %v1682, %v1681
        %v1692 = vpack.c.bf16 %v1684, %v1683
        %1701 = vrot.lane.b32.xlu0 %v1685, 36
        %v1702 = vpop.permute.xlu0 %1701
        %1703 = vrot.lane.b32.xlu0 %v1686, 36
        %v1704 = vpop.permute.xlu0 %1703
        %1705 = vrot.lane.b32.xlu0 %v1687, 36
        %v1706 = vpop.permute.xlu0 %1705
        %1707 = vrot.lane.b32.xlu0 %v1688, 36
        %v1708 = vpop.permute.xlu0 %1707
        %1709 = vrot.lane.b32.xlu0 %v1689, 36
        %v1710 = vpop.permute.xlu0 %1709
        %1711 = vrot.lane.b32.xlu0 %v1690, 36
        %v1712 = vpop.permute.xlu0 %1711
        %1713 = vrot.lane.b32.xlu0 %v1691, 36
        %v1714 = vpop.permute.xlu0 %1713
        %1715 = vrot.lane.b32.xlu0 %v1692, 36
        %v1716 = vpop.permute.xlu0 %1715
        %vm1725 = vcmask 556320
        %1726 = vst.msk [vmem:[#allocation4 + $0x10] sm:$0xff] %vm1725, %v1702
        %1727 = vst.msk [vmem:[#allocation4 + $0x28] sm:$0xff] %vm1725, %v1704
        %1728 = vst.msk [vmem:[#allocation4 + $0x40] sm:$0xff] %vm1725, %v1706
        %1729 = vst.msk [vmem:[#allocation4 + $0x58] sm:$0xff] %vm1725, %v1708
        %1730 = vst.msk [vmem:[#allocation4 + $0x70] sm:$0xff] %vm1725, %v1710
        %1731 = vst.msk [vmem:[#allocation4 + $0x88] sm:$0xff] %vm1725, %v1712
        %1732 = vst.msk [vmem:[#allocation4 + $0xa0] sm:$0xff] %vm1725, %v1714
        %1733 = vst.msk [vmem:[#allocation4 + $0xb8] sm:$0xff] %vm1725, %v1716
        %v1734 = vld [vmem:[#allocation4] sm:$0xff]
        %v1735 = vld [vmem:[#allocation4 + $0x8] sm:$0xff]
        %v1736 = vld [vmem:[#allocation4 + $0x10] sm:$0xff]
        %v1737 = vld [vmem:[#allocation4 + $0x18] sm:$0xff]
        %v1738 = vld [vmem:[#allocation4 + $0x20] sm:$0xff]
        %v1739 = vld [vmem:[#allocation4 + $0x28] sm:$0xff]
        %v1740 = vld [vmem:[#allocation4 + $0x30] sm:$0xff]
        %v1741 = vld [vmem:[#allocation4 + $0x38] sm:$0xff]
        %v1742 = vld [vmem:[#allocation4 + $0x40] sm:$0xff]
        %v1743 = vld [vmem:[#allocation4 + $0x48] sm:$0xff]
        %v1744 = vld [vmem:[#allocation4 + $0x50] sm:$0xff]
        %v1745 = vld [vmem:[#allocation4 + $0x58] sm:$0xff]
        %v1746 = vld [vmem:[#allocation4 + $0x60] sm:$0xff]
        %v1747 = vld [vmem:[#allocation4 + $0x68] sm:$0xff]
        %v1748 = vld [vmem:[#allocation4 + $0x70] sm:$0xff]
        %v1749 = vld [vmem:[#allocation4 + $0x78] sm:$0xff]
        %v1750 = vld [vmem:[#allocation4 + $0x80] sm:$0xff]
        %v1751 = vld [vmem:[#allocation4 + $0x88] sm:$0xff]
        %v1752 = vld [vmem:[#allocation4 + $0x90] sm:$0xff]
        %v1753 = vld [vmem:[#allocation4 + $0x98] sm:$0xff]
        %v1754 = vld [vmem:[#allocation4 + $0xa0] sm:$0xff]
        %v1755 = vld [vmem:[#allocation4 + $0xa8] sm:$0xff]
        %v1756 = vld [vmem:[#allocation4 + $0xb0] sm:$0xff]
        %v1757 = vld [vmem:[#allocation4 + $0xb8] sm:$0xff]
        %v1758 = vld [vmem:[#allocation8] sm:$0xf]
        %v1759 = vld [vmem:[#allocation8 + $0x4] sm:$0xf]
        %v1760 = vld [vmem:[#allocation8 + $0x8] sm:$0xf]
        %v1761 = vld [vmem:[#allocation8 + $0xc] sm:$0xf]
        %v1762 = vld [vmem:[#allocation8 + $0x10] sm:$0xf]
        %v1763 = vld [vmem:[#allocation8 + $0x14] sm:$0xf]
        %v1764 = vld [vmem:[#allocation8 + $0x18] sm:$0xf]
        %v1765 = vld [vmem:[#allocation8 + $0x1c] sm:$0xf]
        %v1766 = vld [vmem:[#allocation8 + $0x20] sm:$0xf]
        %v1767 = vld [vmem:[#allocation8 + $0x24] sm:$0xf]
        %v1768 = vld [vmem:[#allocation8 + $0x28] sm:$0xf]
        %v1769 = vld [vmem:[#allocation8 + $0x2c] sm:$0xf]
        %v1770 = vld [vmem:[#allocation8 + $0x30] sm:$0xf]
        %v1771 = vld [vmem:[#allocation8 + $0x34] sm:$0xf]
        %v1772 = vld [vmem:[#allocation8 + $0x38] sm:$0xf]
        %v1773 = vld [vmem:[#allocation8 + $0x3c] sm:$0xf]
        %v1774 = vld [vmem:[#allocation8 + $0x40] sm:$0xf]
        %v1775 = vld [vmem:[#allocation8 + $0x44] sm:$0xf]
        %v1776 = vld [vmem:[#allocation8 + $0x48] sm:$0xf]
        %v1777 = vld [vmem:[#allocation8 + $0x4c] sm:$0xf]
        %v1778 = vld [vmem:[#allocation8 + $0x50] sm:$0xf]
        %v1779 = vld [vmem:[#allocation8 + $0x54] sm:$0xf]
        %v1780 = vld [vmem:[#allocation8 + $0x58] sm:$0xf]
        %v1781 = vld [vmem:[#allocation8 + $0x5c] sm:$0xf]
        %v1782 = vld [vmem:[#allocation8 + $0x60] sm:$0xf]
        %v1783 = vld [vmem:[#allocation8 + $0x64] sm:$0xf]
        %v1784 = vld [vmem:[#allocation8 + $0x68] sm:$0xf]
        %v1785 = vld [vmem:[#allocation8 + $0x6c] sm:$0xf]
        %v1786 = vld [vmem:[#allocation8 + $0x70] sm:$0xf]
        %v1787 = vld [vmem:[#allocation8 + $0x74] sm:$0xf]
        %v1788 = vld [vmem:[#allocation8 + $0x78] sm:$0xf]
        %v1789 = vld [vmem:[#allocation8 + $0x7c] sm:$0xf]
        %v1790 = vld [vmem:[#allocation8 + $0x80] sm:$0xf]
        %v1791 = vld [vmem:[#allocation8 + $0x84] sm:$0xf]
        %v1792 = vld [vmem:[#allocation8 + $0x88] sm:$0xf]
        %v1793 = vld [vmem:[#allocation8 + $0x8c] sm:$0xf]
        %v1794 = vld [vmem:[#allocation8 + $0x90] sm:$0xf]
        %v1795 = vld [vmem:[#allocation8 + $0x94] sm:$0xf]
        %v1796 = vld [vmem:[#allocation8 + $0x98] sm:$0xf]
        %v1797 = vld [vmem:[#allocation8 + $0x9c] sm:$0xf]
        %v1798 = vld [vmem:[#allocation8 + $0xa0] sm:$0x3]
        %v1799 = vld [vmem:[%s4] sm:$0x1]
        %v1801 = vlaneseq
        %v1802 = vshrl.u32 %v1801, 7
        %v1803 = vsub.s32 0, %v1802
        %v1804 = vrot.slane %v1799, %v1803
        %v1847 = vunpack.c.l.b16 %v1758
        %v1848 = vunpack.c.l.b16 %v1759
        %v1849 = vunpack.c.l.b16 %v1760
        %v1850 = vunpack.c.l.b16 %v1761
        %v1851 = vunpack.c.l.b16 %v1762
        %v1852 = vunpack.c.l.b16 %v1763
        %v1853 = vunpack.c.l.b16 %v1764
        %v1854 = vunpack.c.l.b16 %v1765
        %v1855 = vunpack.c.l.b16 %v1766
        %v1856 = vunpack.c.l.b16 %v1767
        %v1857 = vunpack.c.l.b16 %v1768
        %v1858 = vunpack.c.l.b16 %v1769
        %v1859 = vunpack.c.l.b16 %v1770
        %v1860 = vunpack.c.l.b16 %v1771
        %v1861 = vunpack.c.l.b16 %v1772
        %v1862 = vunpack.c.l.b16 %v1773
        %v1863 = vunpack.c.l.b16 %v1774
        %v1864 = vunpack.c.l.b16 %v1775
        %v1865 = vunpack.c.l.b16 %v1776
        %v1866 = vunpack.c.l.b16 %v1777
        %v1867 = vunpack.c.l.b16 %v1778
        %v1868 = vunpack.c.l.b16 %v1779
        %v1869 = vunpack.c.l.b16 %v1780
        %v1870 = vunpack.c.l.b16 %v1781
        %v1871 = vunpack.c.l.b16 %v1782
        %v1872 = vunpack.c.l.b16 %v1783
        %v1873 = vunpack.c.l.b16 %v1784
        %v1874 = vunpack.c.l.b16 %v1785
        %v1875 = vunpack.c.l.b16 %v1786
        %v1876 = vunpack.c.l.b16 %v1787
        %v1877 = vunpack.c.l.b16 %v1788
        %v1878 = vunpack.c.l.b16 %v1789
        %v1879 = vunpack.c.l.b16 %v1790
        %v1880 = vunpack.c.l.b16 %v1791
        %v1881 = vunpack.c.l.b16 %v1792
        %v1882 = vunpack.c.l.b16 %v1793
        %v1883 = vunpack.c.l.b16 %v1794
        %v1884 = vunpack.c.l.b16 %v1795
        %v1885 = vunpack.c.l.b16 %v1796
        %v1886 = vunpack.c.l.b16 %v1797
        %v1887 = vunpack.c.l.b16 %v1798
        %v1888 = vpack.c.b16 %v1848, %v1847
        %v1889 = vpack.c.b16 %v1850, %v1849
        %v1890 = vpack.c.b16 %v1852, %v1851
        %v1891 = vpack.c.b16 %v1854, %v1853
        %v1892 = vpack.c.b16 %v1856, %v1855
        %v1893 = vpack.c.b16 %v1858, %v1857
        %v1894 = vpack.c.b16 %v1860, %v1859
        %v1895 = vpack.c.b16 %v1862, %v1861
        %v1896 = vpack.c.b16 %v1864, %v1863
        %v1897 = vpack.c.b16 %v1866, %v1865
        %v1898 = vpack.c.b16 %v1868, %v1867
        %v1899 = vpack.c.b16 %v1870, %v1869
        %v1900 = vpack.c.b16 %v1872, %v1871
        %v1901 = vpack.c.b16 %v1874, %v1873
        %v1902 = vpack.c.b16 %v1876, %v1875
        %v1903 = vpack.c.b16 %v1878, %v1877
        %v1904 = vpack.c.b16 %v1880, %v1879
        %v1905 = vpack.c.b16 %v1882, %v1881
        %v1906 = vpack.c.b16 %v1884, %v1883
        %v1907 = vpack.c.b16 %v1886, %v1885
        %v1908 = vpack.c.b16 %v1887, %v1887
        %vm1929 = vcmask 556032
        %v1931 = vsel %vm1929, %v1736, 0
        %v1934 = vsel %vm1929, %v1739, 0
        %v1937 = vsel %vm1929, %v1742, 0
        %v1940 = vsel %vm1929, %v1745, 0
        %v1943 = vsel %vm1929, %v1748, 0
        %v1946 = vsel %vm1929, %v1751, 0
        %v1949 = vsel %vm1929, %v1754, 0
        %v1952 = vsel %vm1929, %v1757, 0
        %vm1954 = vcmask 1041408
        %v1956 = vsel %vm1954, %v1908, 0
        %1958 = vmatprep.subr.bf16.mxu0 0
        %1959 = vmatpush1.bf16.msra.mxu0 %v1888
        %1960 = vmatprep.subr.bf16.mxu0 0
        %1961 = vmatpush1.bf16.msra.mxu0 %v1889
        %1962 = vmatprep.subr.bf16.mxu0 0
        %1963 = vmatpush1.bf16.msra.mxu0 %v1890
        %1964 = vmatprep.subr.bf16.mxu0 0
        %1965 = vmatpush1.bf16.msra.mxu0 %v1891
        %1966 = vmatprep.subr.bf16.mxu0 0
        %1967 = vmatpush1.bf16.msra.mxu0 %v1892
        %1968 = vmatprep.subr.bf16.mxu0 0
        %1969 = vmatpush1.bf16.msra.mxu0 %v1893
        %1970 = vmatprep.subr.bf16.mxu0 0
        %1971 = vmatpush1.bf16.msra.mxu0 %v1894
        %1972 = vmatprep.subr.bf16.mxu0 0
        %1973 = vmatpush1.bf16.msra.mxu0 %v1895
        %1974 = vmatprep.subr.bf16.mxu0 0
        %1975 = vmatpush1.bf16.msra.mxu0 %v1896
        %1976 = vmatprep.subr.bf16.mxu0 0
        %1977 = vmatpush1.bf16.msra.mxu0 %v1897
        %1978 = vmatprep.subr.bf16.mxu0 0
        %1979 = vmatpush1.bf16.msra.mxu0 %v1898
        %1980 = vmatprep.subr.bf16.mxu0 0
        %1981 = vmatpush1.bf16.msra.mxu0 %v1899
        %1982 = vmatprep.subr.bf16.mxu0 0
        %1983 = vmatpush1.bf16.msra.mxu0 %v1900
        %1984 = vmatprep.subr.bf16.mxu0 0
        %1985 = vmatpush1.bf16.msra.mxu0 %v1901
        %1986 = vmatprep.subr.bf16.mxu0 0
        %1987 = vmatpush1.bf16.msra.mxu0 %v1902
        %1988 = vmatprep.subr.bf16.mxu0 0
        %1989 = vmatpush1.bf16.msra.mxu0 %v1903
        %1990 = vmatprep.mubr.bf16.mxu0 %v1735
        %1991 = vmatmul.mubr.bf16.gmra.mrb[0].mxu0 %v1734
        %v1992 = vpop.f32.mrb[0].mxu0
        %v1993 = vadd.f32 %v1804, %v1992
        %v1994 = vpop.f32.mrb[0].mxu0
        %v1995 = vpop.f32.mrb[0].mxu0
        %v1996 = vadd.f32 %v1804, %v1995
        %v1997 = vpop.f32.mrb[0].mxu0
        %1998 = vmatprep.mubr.bf16.mxu0 %v1738
        %1999 = vmatmul.mubr.bf16.gmra.mrb[0].mxu0 %v1737
        %v2000 = vpop.f32.mrb[0].mxu0
        %v2001 = vadd.f32 %v1804, %v2000
        %v2002 = vpop.f32.mrb[0].mxu0
        %v2003 = vpop.f32.mrb[0].mxu0
        %v2004 = vadd.f32 %v1804, %v2003
        %v2005 = vpop.f32.mrb[0].mxu0
        %2006 = vmatprep.mubr.bf16.mxu0 %v1741
        %2007 = vmatmul.mubr.bf16.gmra.mrb[0].mxu0 %v1740
        %v2008 = vpop.f32.mrb[0].mxu0
        %v2009 = vadd.f32 %v1804, %v2008
        %v2010 = vpop.f32.mrb[0].mxu0
        %v2011 = vpop.f32.mrb[0].mxu0
        %v2012 = vadd.f32 %v1804, %v2011
        %v2013 = vpop.f32.mrb[0].mxu0
        %2014 = vmatprep.mubr.bf16.mxu0 %v1744
        %2015 = vmatmul.mubr.bf16.gmra.mrb[0].mxu0 %v1743
        %v2016 = vpop.f32.mrb[0].mxu0
        %v2017 = vadd.f32 %v1804, %v2016
        %v2018 = vpop.f32.mrb[0].mxu0
        %v2019 = vpop.f32.mrb[0].mxu0
        %v2020 = vadd.f32 %v1804, %v2019
        %v2021 = vpop.f32.mrb[0].mxu0
        %2022 = vmatprep.mubr.bf16.mxu0 %v1747
        %2023 = vmatmul.mubr.bf16.gmra.mrb[0].mxu0 %v1746
        %v2024 = vpop.f32.mrb[0].mxu0
        %v2025 = vadd.f32 %v1804, %v2024
        %v2026 = vpop.f32.mrb[0].mxu0
        %v2027 = vpop.f32.mrb[0].mxu0
        %v2028 = vadd.f32 %v1804, %v2027
        %v2029 = vpop.f32.mrb[0].mxu0
        %2030 = vmatprep.mubr.bf16.mxu0 %v1750
        %2031 = vmatmul.mubr.bf16.gmra.mrb[0].mxu0 %v1749
        %v2032 = vpop.f32.mrb[0].mxu0
        %v2033 = vadd.f32 %v1804, %v2032
        %v2034 = vpop.f32.mrb[0].mxu0
        %v2035 = vpop.f32.mrb[0].mxu0
        %v2036 = vadd.f32 %v1804, %v2035
        %v2037 = vpop.f32.mrb[0].mxu0
        %2038 = vmatprep.mubr.bf16.mxu0 %v1753
        %2039 = vmatmul.mubr.bf16.gmra.mrb[0].mxu0 %v1752
        %v2040 = vpop.f32.mrb[0].mxu0
        %v2041 = vadd.f32 %v1804, %v2040
        %v2042 = vpop.f32.mrb[0].mxu0
        %v2043 = vpop.f32.mrb[0].mxu0
        %v2044 = vadd.f32 %v1804, %v2043
        %v2045 = vpop.f32.mrb[0].mxu0
        %2046 = vmatprep.mubr.bf16.mxu0 %v1756
        %2047 = vmatmul.mubr.bf16.gmra.mrb[0].mxu0 %v1755
        %v2048 = vpop.f32.mrb[0].mxu0
        %v2049 = vadd.f32 %v1804, %v2048
        %v2050 = vpop.f32.mrb[0].mxu0
        %v2051 = vpop.f32.mrb[0].mxu0
        %v2052 = vadd.f32 %v1804, %v2051
        %v2053 = vpop.f32.mrb[0].mxu0
        %2054 = vdwg.mxu0
        %2055 = vmatprep.subr.bf16.mxu0 0
        %2056 = vmatpush1.bf16.msra.mxu0 %v1904
        %2057 = vmatprep.subr.bf16.mxu0 0
        %2058 = vmatpush1.bf16.msra.mxu0 %v1905
        %2059 = vmatprep.subr.bf16.mxu0 0
        %2060 = vmatpush1.bf16.msra.mxu0 %v1906
        %2061 = vmatprep.subr.bf16.mxu0 0
        %2062 = vmatpush1.bf16.msra.mxu0 %v1907
        %2063 = vmatprep.subr.bf16.mxu0 0
        %2064 = vmatpush1.bf16.msra.mxu0 %v1956
        %2065 = vmatprep.subr.bf16.mxu0 0
        %2066 = vmatpush1.bf16.msra.mxu0 0
        %2067 = vmatprep.subr.bf16.mxu0 0
        %2068 = vmatpush1.bf16.msra.mxu0 0
        %2069 = vmatprep.subr.bf16.mxu0 0
        %2070 = vmatpush1.bf16.msra.mxu0 0
        %2071 = vmatprep.subr.bf16.mxu0 0
        %2072 = vmatpush1.bf16.msra.mxu0 0
        %2073 = vmatprep.subr.bf16.mxu0 0
        %2074 = vmatpush1.bf16.msra.mxu0 0
        %2075 = vmatprep.subr.bf16.mxu0 0
        %2076 = vmatpush1.bf16.msra.mxu0 0
        %2077 = vmatprep.subr.bf16.mxu0 0
        %2078 = vmatpush1.bf16.msra.mxu0 0
        %2079 = vmatprep.subr.bf16.mxu0 0
        %2080 = vmatpush1.bf16.msra.mxu0 0
        %2081 = vmatprep.subr.bf16.mxu0 0
        %2082 = vmatpush1.bf16.msra.mxu0 0
        %2083 = vmatprep.subr.bf16.mxu0 0
        %2084 = vmatpush1.bf16.msra.mxu0 0
        %2085 = vmatprep.subr.bf16.mxu0 0
        %2086 = vmatpush1.bf16.msra.mxu0 0
        %2087 = vmatprep.mubr.bf16.mxu0 0
        %2088 = vmatmul.mubr.bf16.gmra.mrb[0].mxu0 %v1931
        %v2089 = vpop.f32.mrb[0].mxu0
        %v2090 = vadd.f32 %v1993, %v2089
        %v2091 = vpop.f32.mrb[0].mxu0
        %v2092 = vpop.f32.mrb[0].mxu0
        %v2093 = vadd.f32 %v1996, %v2092
        %v2094 = vpop.f32.mrb[0].mxu0
        %2095 = vmatprep.mubr.bf16.mxu0 0
        %2096 = vmatmul.mubr.bf16.gmra.mrb[0].mxu0 %v1934
        %v2097 = vpop.f32.mrb[0].mxu0
        %v2098 = vadd.f32 %v2001, %v2097
        %v2099 = vpop.f32.mrb[0].mxu0
        %v2100 = vpop.f32.mrb[0].mxu0
        %v2101 = vadd.f32 %v2004, %v2100
        %v2102 = vpop.f32.mrb[0].mxu0
        %2103 = vmatprep.mubr.bf16.mxu0 0
        %2104 = vmatmul.mubr.bf16.gmra.mrb[0].mxu0 %v1937
        %v2105 = vpop.f32.mrb[0].mxu0
        %v2106 = vadd.f32 %v2009, %v2105
        %v2107 = vpop.f32.mrb[0].mxu0
        %v2108 = vpop.f32.mrb[0].mxu0
        %v2109 = vadd.f32 %v2012, %v2108
        %v2110 = vpop.f32.mrb[0].mxu0
        %2111 = vmatprep.mubr.bf16.mxu0 0
        %2112 = vmatmul.mubr.bf16.gmra.mrb[0].mxu0 %v1940
        %v2113 = vpop.f32.mrb[0].mxu0
        %v2114 = vadd.f32 %v2017, %v2113
        %v2115 = vpop.f32.mrb[0].mxu0
        %v2116 = vpop.f32.mrb[0].mxu0
        %v2117 = vadd.f32 %v2020, %v2116
        %v2118 = vpop.f32.mrb[0].mxu0
        %2119 = vmatprep.mubr.bf16.mxu0 0
        %2120 = vmatmul.mubr.bf16.gmra.mrb[0].mxu0 %v1943
        %v2121 = vpop.f32.mrb[0].mxu0
        %v2122 = vadd.f32 %v2025, %v2121
        %v2123 = vpop.f32.mrb[0].mxu0
        %v2124 = vpop.f32.mrb[0].mxu0
        %v2125 = vadd.f32 %v2028, %v2124
        %v2126 = vpop.f32.mrb[0].mxu0
        %2127 = vmatprep.mubr.bf16.mxu0 0
        %2128 = vmatmul.mubr.bf16.gmra.mrb[0].mxu0 %v1946
        %v2129 = vpop.f32.mrb[0].mxu0
        %v2130 = vadd.f32 %v2033, %v2129
        %v2131 = vpop.f32.mrb[0].mxu0
        %v2132 = vpop.f32.mrb[0].mxu0
        %v2133 = vadd.f32 %v2036, %v2132
        %v2134 = vpop.f32.mrb[0].mxu0
        %2135 = vmatprep.mubr.bf16.mxu0 0
        %2136 = vmatmul.mubr.bf16.gmra.mrb[0].mxu0 %v1949
        %v2137 = vpop.f32.mrb[0].mxu0
        %v2138 = vadd.f32 %v2041, %v2137
        %v2139 = vpop.f32.mrb[0].mxu0
        %v2140 = vpop.f32.mrb[0].mxu0
        %v2141 = vadd.f32 %v2044, %v2140
        %v2142 = vpop.f32.mrb[0].mxu0
        %2143 = vmatprep.mubr.bf16.mxu0 0
        %2144 = vmatmul.mubr.bf16.gmra.mrb[0].mxu0 %v1952
        %v2145 = vpop.f32.mrb[0].mxu0
        %v2146 = vadd.f32 %v2049, %v2145
        %v2147 = vpop.f32.mrb[0].mxu0
        %v2148 = vpop.f32.mrb[0].mxu0
        %v2149 = vadd.f32 %v2052, %v2148
        %v2150 = vpop.f32.mrb[0].mxu0
        %2151 = vdwg.mxu0
        %v2152 = vtanh.pop %v2090
        %v2153 = vtanh.pop %v2093
        %v2154 = vtanh.pop %v2098
        %v2155 = vtanh.pop %v2101
        %v2156 = vtanh.pop %v2106
        %v2157 = vtanh.pop %v2109
        %v2158 = vtanh.pop %v2114
        %v2159 = vtanh.pop %v2117
        %v2160 = vtanh.pop %v2122
        %v2161 = vtanh.pop %v2125
        %v2162 = vtanh.pop %v2130
        %v2163 = vtanh.pop %v2133
        %v2164 = vtanh.pop %v2138
        %v2165 = vtanh.pop %v2141
        %v2166 = vtanh.pop %v2146
        %v2167 = vtanh.pop %v2149
        %v2168 = vxor.u32 %v2090, 2147483648
        %v2169 = vxor.u32 %v2093, 2147483648
        %v2170 = vxor.u32 %v2098, 2147483648
        %v2171 = vxor.u32 %v2101, 2147483648
        %v2172 = vxor.u32 %v2106, 2147483648
        %v2173 = vxor.u32 %v2109, 2147483648
        %v2174 = vxor.u32 %v2114, 2147483648
        %v2175 = vxor.u32 %v2117, 2147483648
        %v2176 = vxor.u32 %v2122, 2147483648
        %v2177 = vxor.u32 %v2125, 2147483648
        %v2178 = vxor.u32 %v2130, 2147483648
        %v2179 = vxor.u32 %v2133, 2147483648
        %v2180 = vxor.u32 %v2138, 2147483648
        %v2181 = vxor.u32 %v2141, 2147483648
        %v2182 = vxor.u32 %v2146, 2147483648
        %v2183 = vxor.u32 %v2149, 2147483648
        %v2184 = vmul.f32 %v2168, 1.442695
        %v2185 = vpow.pop %v2184
        %v2186 = vmul.f32 %v2169, 1.442695
        %v2187 = vpow.pop %v2186
        %v2188 = vmul.f32 %v2170, 1.442695
        %v2189 = vpow.pop %v2188
        %v2190 = vmul.f32 %v2171, 1.442695
        %v2191 = vpow.pop %v2190
        %v2192 = vmul.f32 %v2172, 1.442695
        %v2193 = vpow.pop %v2192
        %v2194 = vmul.f32 %v2173, 1.442695
        %v2195 = vpow.pop %v2194
        %v2196 = vmul.f32 %v2174, 1.442695
        %v2197 = vpow.pop %v2196
        %v2198 = vmul.f32 %v2175, 1.442695
        %v2199 = vpow.pop %v2198
        %v2200 = vmul.f32 %v2176, 1.442695
        %v2201 = vpow.pop %v2200
        %v2202 = vmul.f32 %v2177, 1.442695
        %v2203 = vpow.pop %v2202
        %v2204 = vmul.f32 %v2178, 1.442695
        %v2205 = vpow.pop %v2204
        %v2206 = vmul.f32 %v2179, 1.442695
        %v2207 = vpow.pop %v2206
        %v2208 = vmul.f32 %v2180, 1.442695
        %v2209 = vpow.pop %v2208
        %v2210 = vmul.f32 %v2181, 1.442695
        %v2211 = vpow.pop %v2210
        %v2212 = vmul.f32 %v2182, 1.442695
        %v2213 = vpow.pop %v2212
        %v2214 = vmul.f32 %v2183, 1.442695
        %v2215 = vpow.pop %v2214
        %v2216 = vadd.f32 %v2185, 1.0
        %v2217 = vadd.f32 %v2187, 1.0
        %v2218 = vadd.f32 %v2189, 1.0
        %v2219 = vadd.f32 %v2191, 1.0
        %v2220 = vadd.f32 %v2193, 1.0
        %v2221 = vadd.f32 %v2195, 1.0
        %v2222 = vadd.f32 %v2197, 1.0
        %v2223 = vadd.f32 %v2199, 1.0
        %v2224 = vadd.f32 %v2201, 1.0
        %v2225 = vadd.f32 %v2203, 1.0
        %v2226 = vadd.f32 %v2205, 1.0
        %v2227 = vadd.f32 %v2207, 1.0
        %v2228 = vadd.f32 %v2209, 1.0
        %v2229 = vadd.f32 %v2211, 1.0
        %v2230 = vadd.f32 %v2213, 1.0
        %v2231 = vadd.f32 %v2215, 1.0
        %v2232 = vrcp.pop %v2216
        %v2233 = vmul.f32 1.0, %v2232
        %v2234 = vrcp.pop %v2217
        %v2235 = vmul.f32 1.0, %v2234
        %v2236 = vrcp.pop %v2218
        %v2237 = vmul.f32 1.0, %v2236
        %v2238 = vrcp.pop %v2219
        %v2239 = vmul.f32 1.0, %v2238
        %v2240 = vrcp.pop %v2220
        %v2241 = vmul.f32 1.0, %v2240
        %v2242 = vrcp.pop %v2221
        %v2243 = vmul.f32 1.0, %v2242
        %v2244 = vrcp.pop %v2222
        %v2245 = vmul.f32 1.0, %v2244
        %v2246 = vrcp.pop %v2223
        %v2247 = vmul.f32 1.0, %v2246
        %v2248 = vrcp.pop %v2224
        %v2249 = vmul.f32 1.0, %v2248
        %v2250 = vrcp.pop %v2225
        %v2251 = vmul.f32 1.0, %v2250
        %v2252 = vrcp.pop %v2226
        %v2253 = vmul.f32 1.0, %v2252
        %v2254 = vrcp.pop %v2227
        %v2255 = vmul.f32 1.0, %v2254
        %v2256 = vrcp.pop %v2228
        %v2257 = vmul.f32 1.0, %v2256
        %v2258 = vrcp.pop %v2229
        %v2259 = vmul.f32 1.0, %v2258
        %v2260 = vrcp.pop %v2230
        %v2261 = vmul.f32 1.0, %v2260
        %v2262 = vrcp.pop %v2231
        %v2263 = vmul.f32 1.0, %v2262
        %v2264 = vld [vmem:[%s299] sm:$0xff]
        %v2265 = vld [vmem:[%s299 + $0x8] sm:$0xff]
        %v2266 = vld [vmem:[%s299 + $0x10] sm:$0xff]
        %v2267 = vld [vmem:[%s299 + $0x18] sm:$0xff]
        %v2268 = vld [vmem:[%s299 + $0x20] sm:$0xff]
        %v2269 = vld [vmem:[%s299 + $0x28] sm:$0xff]
        %v2270 = vld [vmem:[%s299 + $0x30] sm:$0xff]
        %v2271 = vld [vmem:[%s299 + $0x38] sm:$0xff]
        %v2272 = vld [vmem:[%s299 + $0x40] sm:$0xff]
        %v2273 = vld [vmem:[%s299 + $0x48] sm:$0xff]
        %v2274 = vld [vmem:[%s299 + $0x50] sm:$0xff]
        %v2275 = vld [vmem:[%s299 + $0x58] sm:$0xff]
        %v2276 = vld [vmem:[%s299 + $0x60] sm:$0xff]
        %v2277 = vld [vmem:[%s299 + $0x68] sm:$0xff]
        %v2278 = vld [vmem:[%s299 + $0x70] sm:$0xff]
        %v2279 = vld [vmem:[%s299 + $0x78] sm:$0xff]
        %2296 = vrot.lane.b32.xlu0 %v2264, 32
        %v2297 = vpop.permute.xlu0 %2296
        %2298 = vrot.lane.b32.xlu0 %v2265, 32
        %v2299 = vpop.permute.xlu0 %2298
        %2300 = vrot.lane.b32.xlu0 %v2266, 32
        %v2301 = vpop.permute.xlu0 %2300
        %2302 = vrot.lane.b32.xlu0 %v2267, 32
        %v2303 = vpop.permute.xlu0 %2302
        %2304 = vrot.lane.b32.xlu0 %v2268, 32
        %v2305 = vpop.permute.xlu0 %2304
        %2306 = vrot.lane.b32.xlu0 %v2269, 32
        %v2307 = vpop.permute.xlu0 %2306
        %2308 = vrot.lane.b32.xlu0 %v2270, 32
        %v2309 = vpop.permute.xlu0 %2308
        %2310 = vrot.lane.b32.xlu0 %v2271, 32
        %v2311 = vpop.permute.xlu0 %2310
        %2312 = vrot.lane.b32.xlu0 %v2272, 32
        %v2313 = vpop.permute.xlu0 %2312
        %2314 = vrot.lane.b32.xlu0 %v2273, 32
        %v2315 = vpop.permute.xlu0 %2314
        %2316 = vrot.lane.b32.xlu0 %v2274, 32
        %v2317 = vpop.permute.xlu0 %2316
        %2318 = vrot.lane.b32.xlu0 %v2275, 32
        %v2319 = vpop.permute.xlu0 %2318
        %2320 = vrot.lane.b32.xlu0 %v2276, 32
        %v2321 = vpop.permute.xlu0 %2320
        %2322 = vrot.lane.b32.xlu0 %v2277, 32
        %v2323 = vpop.permute.xlu0 %2322
        %2324 = vrot.lane.b32.xlu0 %v2278, 32
        %v2325 = vpop.permute.xlu0 %2324
        %2326 = vrot.lane.b32.xlu0 %v2279, 32
        %v2327 = vpop.permute.xlu0 %2326
        %v2344 = vmul.f32 %v2233, %v2297
        %v2345 = vmul.f32 %v2235, %v2299
        %v2346 = vmul.f32 %v2237, %v2301
        %v2347 = vmul.f32 %v2239, %v2303
        %v2348 = vmul.f32 %v2241, %v2305
        %v2349 = vmul.f32 %v2243, %v2307
        %v2350 = vmul.f32 %v2245, %v2309
        %v2351 = vmul.f32 %v2247, %v2311
        %v2352 = vmul.f32 %v2249, %v2313
        %v2353 = vmul.f32 %v2251, %v2315
        %v2354 = vmul.f32 %v2253, %v2317
        %v2355 = vmul.f32 %v2255, %v2319
        %v2356 = vmul.f32 %v2257, %v2321
        %v2357 = vmul.f32 %v2259, %v2323
        %v2358 = vmul.f32 %v2261, %v2325
        %v2359 = vmul.f32 %v2263, %v2327
        %2376 = vrot.lane.b32.xlu0 %v2152, 32
        %v2377 = vpop.permute.xlu0 %2376
        %2378 = vrot.lane.b32.xlu0 %v2153, 32
        %v2379 = vpop.permute.xlu0 %2378
        %2380 = vrot.lane.b32.xlu0 %v2154, 32
        %v2381 = vpop.permute.xlu0 %2380
        %2382 = vrot.lane.b32.xlu0 %v2155, 32
        %v2383 = vpop.permute.xlu0 %2382
        %2384 = vrot.lane.b32.xlu0 %v2156, 32
        %v2385 = vpop.permute.xlu0 %2384
        %2386 = vrot.lane.b32.xlu0 %v2157, 32
        %v2387 = vpop.permute.xlu0 %2386
        %2388 = vrot.lane.b32.xlu0 %v2158, 32
        %v2389 = vpop.permute.xlu0 %2388
        %2390 = vrot.lane.b32.xlu0 %v2159, 32
        %v2391 = vpop.permute.xlu0 %2390
        %2392 = vrot.lane.b32.xlu0 %v2160, 32
        %v2393 = vpop.permute.xlu0 %2392
        %2394 = vrot.lane.b32.xlu0 %v2161, 32
        %v2395 = vpop.permute.xlu0 %2394
        %2396 = vrot.lane.b32.xlu0 %v2162, 32
        %v2397 = vpop.permute.xlu0 %2396
        %2398 = vrot.lane.b32.xlu0 %v2163, 32
        %v2399 = vpop.permute.xlu0 %2398
        %2400 = vrot.lane.b32.xlu0 %v2164, 32
        %v2401 = vpop.permute.xlu0 %2400
        %2402 = vrot.lane.b32.xlu0 %v2165, 32
        %v2403 = vpop.permute.xlu0 %2402
        %2404 = vrot.lane.b32.xlu0 %v2166, 32
        %v2405 = vpop.permute.xlu0 %2404
        %2406 = vrot.lane.b32.xlu0 %v2167, 32
        %v2407 = vpop.permute.xlu0 %2406
        %v2424 = vmul.f32 %v2233, %v2377
        %v2425 = vmul.f32 %v2235, %v2379
        %v2426 = vmul.f32 %v2237, %v2381
        %v2427 = vmul.f32 %v2239, %v2383
        %v2428 = vmul.f32 %v2241, %v2385
        %v2429 = vmul.f32 %v2243, %v2387
        %v2430 = vmul.f32 %v2245, %v2389
        %v2431 = vmul.f32 %v2247, %v2391
        %v2432 = vmul.f32 %v2249, %v2393
        %v2433 = vmul.f32 %v2251, %v2395
        %v2434 = vmul.f32 %v2253, %v2397
        %v2435 = vmul.f32 %v2255, %v2399
        %v2436 = vmul.f32 %v2257, %v2401
        %v2437 = vmul.f32 %v2259, %v2403
        %v2438 = vmul.f32 %v2261, %v2405
        %v2439 = vmul.f32 %v2263, %v2407
        %2456 = vrot.lane.b32.xlu0 %v2424, 32
        %v2457 = vpop.permute.xlu0 %2456
        %2458 = vrot.lane.b32.xlu0 %v2425, 32
        %v2459 = vpop.permute.xlu0 %2458
        %2460 = vrot.lane.b32.xlu0 %v2426, 32
        %v2461 = vpop.permute.xlu0 %2460
        %2462 = vrot.lane.b32.xlu0 %v2427, 32
        %v2463 = vpop.permute.xlu0 %2462
        %2464 = vrot.lane.b32.xlu0 %v2428, 32
        %v2465 = vpop.permute.xlu0 %2464
        %2466 = vrot.lane.b32.xlu0 %v2429, 32
        %v2467 = vpop.permute.xlu0 %2466
        %2468 = vrot.lane.b32.xlu0 %v2430, 32
        %v2469 = vpop.permute.xlu0 %2468
        %2470 = vrot.lane.b32.xlu0 %v2431, 32
        %v2471 = vpop.permute.xlu0 %2470
        %2472 = vrot.lane.b32.xlu0 %v2432, 32
        %v2473 = vpop.permute.xlu0 %2472
        %2474 = vrot.lane.b32.xlu0 %v2433, 32
        %v2475 = vpop.permute.xlu0 %2474
        %2476 = vrot.lane.b32.xlu0 %v2434, 32
        %v2477 = vpop.permute.xlu0 %2476
        %2478 = vrot.lane.b32.xlu0 %v2435, 32
        %v2479 = vpop.permute.xlu0 %2478
        %2480 = vrot.lane.b32.xlu0 %v2436, 32
        %v2481 = vpop.permute.xlu0 %2480
        %2482 = vrot.lane.b32.xlu0 %v2437, 32
        %v2483 = vpop.permute.xlu0 %2482
        %2484 = vrot.lane.b32.xlu0 %v2438, 32
        %v2485 = vpop.permute.xlu0 %2484
        %2486 = vrot.lane.b32.xlu0 %v2439, 32
        %v2487 = vpop.permute.xlu0 %2486
        %v2504 = vadd.f32 %v2344, %v2457
        %v2505 = vadd.f32 %v2345, %v2459
        %v2506 = vadd.f32 %v2346, %v2461
        %v2507 = vadd.f32 %v2347, %v2463
        %v2508 = vadd.f32 %v2348, %v2465
        %v2509 = vadd.f32 %v2349, %v2467
        %v2510 = vadd.f32 %v2350, %v2469
        %v2511 = vadd.f32 %v2351, %v2471
        %v2512 = vadd.f32 %v2352, %v2473
        %v2513 = vadd.f32 %v2353, %v2475
        %v2514 = vadd.f32 %v2354, %v2477
        %v2515 = vadd.f32 %v2355, %v2479
        %v2516 = vadd.f32 %v2356, %v2481
        %v2517 = vadd.f32 %v2357, %v2483
        %v2518 = vadd.f32 %v2358, %v2485
        %v2519 = vadd.f32 %v2359, %v2487
        %v2520 = vtanh.pop %v2504
        %v2521 = vtanh.pop %v2505
        %v2522 = vtanh.pop %v2506
        %v2523 = vtanh.pop %v2507
        %v2524 = vtanh.pop %v2508
        %v2525 = vtanh.pop %v2509
        %v2526 = vtanh.pop %v2510
        %v2527 = vtanh.pop %v2511
        %v2528 = vtanh.pop %v2512
        %v2529 = vtanh.pop %v2513
        %v2530 = vtanh.pop %v2514
        %v2531 = vtanh.pop %v2515
        %v2532 = vtanh.pop %v2516
        %v2533 = vtanh.pop %v2517
        %v2534 = vtanh.pop %v2518
        %v2535 = vtanh.pop %v2519
        %2552 = vrot.lane.b32.xlu0 %v2520, 32
        %v2553 = vpop.permute.xlu0 %2552
        %2554 = vrot.lane.b32.xlu0 %v2521, 32
        %v2555 = vpop.permute.xlu0 %2554
        %2556 = vrot.lane.b32.xlu0 %v2522, 32
        %v2557 = vpop.permute.xlu0 %2556
        %2558 = vrot.lane.b32.xlu0 %v2523, 32
        %v2559 = vpop.permute.xlu0 %2558
        %2560 = vrot.lane.b32.xlu0 %v2524, 32
        %v2561 = vpop.permute.xlu0 %2560
        %2562 = vrot.lane.b32.xlu0 %v2525, 32
        %v2563 = vpop.permute.xlu0 %2562
        %2564 = vrot.lane.b32.xlu0 %v2526, 32
        %v2565 = vpop.permute.xlu0 %2564
        %2566 = vrot.lane.b32.xlu0 %v2527, 32
        %v2567 = vpop.permute.xlu0 %2566
        %2568 = vrot.lane.b32.xlu0 %v2528, 32
        %v2569 = vpop.permute.xlu0 %2568
        %2570 = vrot.lane.b32.xlu0 %v2529, 32
        %v2571 = vpop.permute.xlu0 %2570
        %2572 = vrot.lane.b32.xlu0 %v2530, 32
        %v2573 = vpop.permute.xlu0 %2572
        %2574 = vrot.lane.b32.xlu0 %v2531, 32
        %v2575 = vpop.permute.xlu0 %2574
        %2576 = vrot.lane.b32.xlu0 %v2532, 32
        %v2577 = vpop.permute.xlu0 %2576
        %2578 = vrot.lane.b32.xlu0 %v2533, 32
        %v2579 = vpop.permute.xlu0 %2578
        %2580 = vrot.lane.b32.xlu0 %v2534, 32
        %v2581 = vpop.permute.xlu0 %2580
        %2582 = vrot.lane.b32.xlu0 %v2535, 32
        %v2583 = vpop.permute.xlu0 %2582
        %v2600 = vmul.f32 %v2233, %v2553
        %v2601 = vmul.f32 %v2235, %v2555
        %v2602 = vmul.f32 %v2237, %v2557
        %v2603 = vmul.f32 %v2239, %v2559
        %v2604 = vmul.f32 %v2241, %v2561
        %v2605 = vmul.f32 %v2243, %v2563
        %v2606 = vmul.f32 %v2245, %v2565
        %v2607 = vmul.f32 %v2247, %v2567
        %v2608 = vmul.f32 %v2249, %v2569
        %v2609 = vmul.f32 %v2251, %v2571
        %v2610 = vmul.f32 %v2253, %v2573
        %v2611 = vmul.f32 %v2255, %v2575
        %v2612 = vmul.f32 %v2257, %v2577
        %v2613 = vmul.f32 %v2259, %v2579
        %v2614 = vmul.f32 %v2261, %v2581
        %v2615 = vmul.f32 %v2263, %v2583
        %2632 = vrot.lane.b32.xlu0 %v2504, 96
        %v2633 = vpop.permute.xlu0 %2632
        %2634 = vrot.lane.b32.xlu0 %v2505, 96
        %v2635 = vpop.permute.xlu0 %2634
        %2636 = vrot.lane.b32.xlu0 %v2506, 96
        %v2637 = vpop.permute.xlu0 %2636
        %2638 = vrot.lane.b32.xlu0 %v2507, 96
        %v2639 = vpop.permute.xlu0 %2638
        %2640 = vrot.lane.b32.xlu0 %v2508, 96
        %v2641 = vpop.permute.xlu0 %2640
        %2642 = vrot.lane.b32.xlu0 %v2509, 96
        %v2643 = vpop.permute.xlu0 %2642
        %2644 = vrot.lane.b32.xlu0 %v2510, 96
        %v2645 = vpop.permute.xlu0 %2644
        %2646 = vrot.lane.b32.xlu0 %v2511, 96
        %v2647 = vpop.permute.xlu0 %2646
        %2648 = vrot.lane.b32.xlu0 %v2512, 96
        %v2649 = vpop.permute.xlu0 %2648
        %2650 = vrot.lane.b32.xlu0 %v2513, 96
        %v2651 = vpop.permute.xlu0 %2650
        %2652 = vrot.lane.b32.xlu0 %v2514, 96
        %v2653 = vpop.permute.xlu0 %2652
        %2654 = vrot.lane.b32.xlu0 %v2515, 96
        %v2655 = vpop.permute.xlu0 %2654
        %2656 = vrot.lane.b32.xlu0 %v2516, 96
        %v2657 = vpop.permute.xlu0 %2656
        %2658 = vrot.lane.b32.xlu0 %v2517, 96
        %v2659 = vpop.permute.xlu0 %2658
        %2660 = vrot.lane.b32.xlu0 %v2518, 96
        %v2661 = vpop.permute.xlu0 %2660
        %2662 = vrot.lane.b32.xlu0 %v2519, 96
        %v2663 = vpop.permute.xlu0 %2662
        %2680 = vst.msk [vmem:[%s339] sm:$0xff] %vm1595, %v2633
        %2681 = vst.msk [vmem:[%s339 + $0x8] sm:$0xff] %vm1595, %v2635
        %2682 = vst.msk [vmem:[%s339 + $0x10] sm:$0xff] %vm1595, %v2637
        %2683 = vst.msk [vmem:[%s339 + $0x18] sm:$0xff] %vm1595, %v2639
        %2684 = vst.msk [vmem:[%s339 + $0x20] sm:$0xff] %vm1595, %v2641
        %2685 = vst.msk [vmem:[%s339 + $0x28] sm:$0xff] %vm1595, %v2643
        %2686 = vst.msk [vmem:[%s339 + $0x30] sm:$0xff] %vm1595, %v2645
        %2687 = vst.msk [vmem:[%s339 + $0x38] sm:$0xff] %vm1595, %v2647
        %2688 = vst.msk [vmem:[%s339 + $0x40] sm:$0xff] %vm1595, %v2649
        %2689 = vst.msk [vmem:[%s339 + $0x48] sm:$0xff] %vm1595, %v2651
        %2690 = vst.msk [vmem:[%s339 + $0x50] sm:$0xff] %vm1595, %v2653
        %2691 = vst.msk [vmem:[%s339 + $0x58] sm:$0xff] %vm1595, %v2655
        %2692 = vst.msk [vmem:[%s339 + $0x60] sm:$0xff] %vm1595, %v2657
        %2693 = vst.msk [vmem:[%s339 + $0x68] sm:$0xff] %vm1595, %v2659
        %2694 = vst.msk [vmem:[%s339 + $0x70] sm:$0xff] %vm1595, %v2661
        %2695 = vst.msk [vmem:[%s339 + $0x78] sm:$0xff] %vm1595, %v2663
        %2712 = vrot.lane.b32.xlu0 %v2600, 64
        %v2713 = vpop.permute.xlu0 %2712
        %2714 = vrot.lane.b32.xlu0 %v2601, 64
        %v2715 = vpop.permute.xlu0 %2714
        %2716 = vrot.lane.b32.xlu0 %v2602, 64
        %v2717 = vpop.permute.xlu0 %2716
        %2718 = vrot.lane.b32.xlu0 %v2603, 64
        %v2719 = vpop.permute.xlu0 %2718
        %2720 = vrot.lane.b32.xlu0 %v2604, 64
        %v2721 = vpop.permute.xlu0 %2720
        %2722 = vrot.lane.b32.xlu0 %v2605, 64
        %v2723 = vpop.permute.xlu0 %2722
        %2724 = vrot.lane.b32.xlu0 %v2606, 64
        %v2725 = vpop.permute.xlu0 %2724
        %2726 = vrot.lane.b32.xlu0 %v2607, 64
        %v2727 = vpop.permute.xlu0 %2726
        %2728 = vrot.lane.b32.xlu0 %v2608, 64
        %v2729 = vpop.permute.xlu0 %2728
        %2730 = vrot.lane.b32.xlu0 %v2609, 64
        %v2731 = vpop.permute.xlu0 %2730
        %2732 = vrot.lane.b32.xlu0 %v2610, 64
        %v2733 = vpop.permute.xlu0 %2732
        %2734 = vrot.lane.b32.xlu0 %v2611, 64
        %v2735 = vpop.permute.xlu0 %2734
        %2736 = vrot.lane.b32.xlu0 %v2612, 64
        %v2737 = vpop.permute.xlu0 %2736
        %2738 = vrot.lane.b32.xlu0 %v2613, 64
        %v2739 = vpop.permute.xlu0 %2738
        %2740 = vrot.lane.b32.xlu0 %v2614, 64
        %v2741 = vpop.permute.xlu0 %2740
        %2742 = vrot.lane.b32.xlu0 %v2615, 64
        %v2743 = vpop.permute.xlu0 %2742
        %2760 = vst.msk [vmem:[%s346] sm:$0xff] %vm1595, %v2713
        %2761 = vst.msk [vmem:[%s346 + $0x8] sm:$0xff] %vm1595, %v2715
        %2762 = vst.msk [vmem:[%s346 + $0x10] sm:$0xff] %vm1595, %v2717
        %2763 = vst.msk [vmem:[%s346 + $0x18] sm:$0xff] %vm1595, %v2719
        %2764 = vst.msk [vmem:[%s346 + $0x20] sm:$0xff] %vm1595, %v2721
        %2765 = vst.msk [vmem:[%s346 + $0x28] sm:$0xff] %vm1595, %v2723
        %2766 = vst.msk [vmem:[%s346 + $0x30] sm:$0xff] %vm1595, %v2725
        %2767 = vst.msk [vmem:[%s346 + $0x38] sm:$0xff] %vm1595, %v2727
        %2768 = vst.msk [vmem:[%s346 + $0x40] sm:$0xff] %vm1595, %v2729
        %2769 = vst.msk [vmem:[%s346 + $0x48] sm:$0xff] %vm1595, %v2731
        %2770 = vst.msk [vmem:[%s346 + $0x50] sm:$0xff] %vm1595, %v2733
        %2771 = vst.msk [vmem:[%s346 + $0x58] sm:$0xff] %vm1595, %v2735
        %2772 = vst.msk [vmem:[%s346 + $0x60] sm:$0xff] %vm1595, %v2737
        %2773 = vst.msk [vmem:[%s346 + $0x68] sm:$0xff] %vm1595, %v2739
        %2774 = vst.msk [vmem:[%s346 + $0x70] sm:$0xff] %vm1595, %v2741
        %2775 = vst.msk [vmem:[%s346 + $0x78] sm:$0xff] %vm1595, %v2743
        %s2776 = sand.u32 %s172, 1
        %s2777 = scalar_lea.sflag [#allocation7], %s2776
        %s2778 = sand.u32 %s172, 1
        %s2779 = smul.addr %s2778, 128
        %s2780 = scalar_lea.vmem [#allocation10], %s2779
        %s2781 = sand.u32 %s200, 1
        %s2782 = scalar_lea.sflag [#allocation12], %s2781
        %s2783 = sand.u32 %s200, 1
        %s2784 = smul.addr %s2783, 128
        %s2785 = scalar_lea.vmem [#allocation11], %s2784
        // Predicated region
        $region53: #{convlstm_cell_forward.1} parent=39 // pred_check
          %p2786 = pneg %p182
        $region54: #{convlstm_cell_forward.1} parent=39 // pred_check_branch
          %2788 = sbr.rel (%p2786) target = $region56
        $region55: #{convlstm_cell_forward.1} parent=39 // pred_region
          %s2789 = smul.u32 8, %s33
          %s2791 = ssub.s32 2048, 2048
          %2792 = vsyncadd %s2777, %s2791
          %s2793 = smul.addr %s2789, 2
          %s2794 = smul.addr %s32, 32
          %s2795 = sadd.s32 %s2793, %s2794
          %s2796 = smul.addr %s2795, 128
          %s2797 = scalar_lea.hbm %s5, %s2796
          %s2798 = sshll.u32 %s2780, 4
          %s2799 = int_to_ptr.vmem [resolvable:$true] %s2798
          %2804 = dma.vmem_to_hbm [thread:$0]  %s2799, 2048, %s2797, %s2777, 128, 128, 8
        $region56: #{convlstm_cell_forward.1} parent=39 // pred_fallthru
          _
        // Predicated region
        $region57: #{convlstm_cell_forward.1} parent=39 // pred_check
          %p2805 = pneg %p210
        $region58: #{convlstm_cell_forward.1} parent=39 // pred_check_branch
          %2807 = sbr.rel (%p2805) target = $region60
        $region59: #{convlstm_cell_forward.1} parent=39 // pred_region
          %s2808 = smul.u32 8, %s33
          %s2810 = ssub.s32 2048, 2048
          %2811 = vsyncadd %s2782, %s2810
          %s2812 = smul.addr %s2808, 2
          %s2813 = smul.addr %s32, 32
          %s2814 = sadd.s32 %s2812, %s2813
          %s2815 = smul.addr %s2814, 128
          %s2816 = scalar_lea.hbm %s6, %s2815
          %s2817 = sshll.u32 %s2785, 4
          %s2818 = int_to_ptr.vmem [resolvable:$true] %s2817
          %2823 = dma.vmem_to_hbm [thread:$0]  %s2818, 2048, %s2816, %s2782, 128, 128, 8
        $region60: #{convlstm_cell_forward.1} parent=39 // pred_fallthru
          _
      $region40: #{convlstm_cell_forward.1} parent=5 // pred_fallthru
        _
      %p2824 = scmp.le.s32.totalorder 2, %s23
      // Predicated region
      $region61: #{convlstm_cell_forward.1} parent=5 // pred_check
        %p2825 = pneg %p2824
      $region62: #{convlstm_cell_forward.1} parent=5 // pred_check_branch
        %2827 = sbr.rel (%p2825) target = $region64
      $region63: #{convlstm_cell_forward.1} parent=5 // pred_region
        %s2828 = ssub.s32 %s23, 2
        // Predicated region
        $region65: #{convlstm_cell_forward.1} parent=63 // pred_check
          %p2829 = pneg %p188
        $region66: #{convlstm_cell_forward.1} parent=63 // pred_check_branch
          %2831 = sbr.rel (%p2829) target = $region68
        $region67: #{convlstm_cell_forward.1} parent=63 // pred_region
          %s2832 = sand.u32 %s173, 1
          %s2833 = scalar_lea.sflag [#allocation7], %s2832
          %s2834 = sand.u32 %s173, 1
          %s2835 = smul.addr %s2834, 128
          %s2836 = scalar_lea.vmem [#allocation10], %s2835
          %2837 = dma.done %s2833, 2048
        $region68: #{convlstm_cell_forward.1} parent=63 // pred_fallthru
          _
        // Predicated region
        $region69: #{convlstm_cell_forward.1} parent=63 // pred_check
          %p2838 = pneg %p216
        $region70: #{convlstm_cell_forward.1} parent=63 // pred_check_branch
          %2840 = sbr.rel (%p2838) target = $region72
        $region71: #{convlstm_cell_forward.1} parent=63 // pred_region
          %s2841 = sand.u32 %s201, 1
          %s2842 = scalar_lea.sflag [#allocation12], %s2841
          %s2843 = sand.u32 %s201, 1
          %s2844 = smul.addr %s2843, 128
          %s2845 = scalar_lea.vmem [#allocation11], %s2844
          %2846 = dma.done %s2842, 2048
        $region72: #{convlstm_cell_forward.1} parent=63 // pred_fallthru
          _
      $region64: #{convlstm_cell_forward.1} parent=5 // pred_fallthru
        _
    $region6: #{convlstm_cell_forward.1} parent=1 // loop_footer
      %s27 = sadd.s32 1, %s23
    $region7: #{convlstm_cell_forward.1} parent=1 // loop_footer_branch
      %22 = sbr.rel target = $region3
    $region8: #{convlstm_cell_forward.1} parent=1 // loop_exit
      _
    %2847 = vsyncpa [#allocation6], 1
    %s2848 = scalar_lea.sflag [#allocation6], 1
    %2849 = vsyncpa %s2848, 1
    %2850 = vsyncpa [#allocation9], 1
    %2851 = vsyncpa [#allocation7], 1
    %s2852 = scalar_lea.sflag [#allocation7], 1
    %2853 = vsyncpa %s2852, 1
    %2854 = vsyncpa [#allocation12], 1
    %s2855 = scalar_lea.sflag [#allocation12], 1
    %2856 = vsyncpa %s2855, 1

</llo_original>
